<compile_context>
chip_gen: v7x
topology: tpu7x:2x2x1
jax: 0.10.0
libtpu: 0.0.40
codegen_flags: <defaults>
</compile_context>

<pallas_src>
import jax
import jax.numpy as jnp
from jax.experimental import pallas as pl
from jax.experimental.pallas import tpu as pltpu

D = 512  # feature width, fixed by the module


def _round_up(x, m):
    return (x + m - 1) // m * m


def nlblock_kernel(ct_ref, lt_ref,
                   w1_ref, b1_ref,
                   w23_ref, b23_ref,
                   w4_ref, b4_ref,
                   gamma_ref, beta_ref,
                   out_ref):
    bb, t, d = lt_ref.shape

    ct = ct_ref[...]                                   # (Bb, D) f32 (residual)
    lt2d = lt_ref[...].reshape(bb * t, d)              # (Bb*T, D) bf16

    # linear1 (1/sqrt(512) score scale pre-folded into w1/b1)   -> (Bb, D) f32
    c1 = jnp.dot(ct.astype(jnp.bfloat16), w1_ref[...],
                 preferred_element_type=jnp.float32) + b1_ref[...]

    # fused linear2 | linear3 over the whole memory bank        -> (Bb*T, 2D)
    l12 = jnp.dot(lt2d, w23_ref[...],
                  preferred_element_type=jnp.float32) + b23_ref[...]
    l12 = l12.reshape(bb, t, 2 * d)
    l1 = l12[:, :, :d]                                 # linear2(Lt)  (Bb, T, D)
    l2 = l12[:, :, d:]                                 # linear3(Lt)  (Bb, T, D)

    # attention scores over the memory axis: VPU multiply + lane reduce
    scores = jnp.sum(c1[:, None, :] * l1, axis=-1)     # (Bb, T) f32
    scores = scores - jnp.max(scores, axis=-1, keepdims=True)
    p = jnp.exp(scores)
    p = p * pl.reciprocal(jnp.sum(p, axis=-1, keepdims=True), approx=True)

    # weighted sum of linear3(Lt) over T: VPU multiply + sublane reduce
    s = jnp.sum(p[:, :, None] * l2, axis=1)            # (Bb, D) f32

    # LayerNorm([1, 512]) == normalize over the 512 features
    mu = jnp.mean(s, axis=-1, keepdims=True)
    var = jnp.mean((s - mu) * (s - mu), axis=-1, keepdims=True)
    s = (s - mu) * jax.lax.rsqrt(var + 1e-5)
    s = s * gamma_ref[...] + beta_ref[...]

    # ReLU + linear4
    s = jnp.maximum(s, 0.0)
    o = jnp.dot(s.astype(jnp.bfloat16), w4_ref[...],
                preferred_element_type=jnp.float32) + b4_ref[...]
    # Dropout(0.2) in eval mode == identity (inference).

    # residual:  nlb = ct + SLL.view(-1, 512)
    out_ref[...] = ct + o


def nlblock(ct, Lt, params, block_b=128):
    """ct: (B, 512) f32, Lt: (B, T, 512) f32 -> (B, 512) f32."""
    B, d = ct.shape
    _, T, _ = Lt.shape
    assert d == D and Lt.shape == (B, T, D)

    (w1t, b1, w2t, b2, w3t, b3, w4t, b4, gamma, beta) = params

    # ---- host-side parameter prep -----------------------------------------
    scale = (1.0 / D) ** 0.5
    w1 = (w1t * scale).astype(jnp.bfloat16)            # fold score scale in
    b1s = (b1 * scale).astype(jnp.float32)
    w23 = jnp.concatenate([w2t, w3t], axis=1).astype(jnp.bfloat16)   # (D, 2D)
    b23 = jnp.concatenate([b2, b3], axis=1).astype(jnp.float32)      # (1, 2D)
    w4 = w4t.astype(jnp.bfloat16)
    b4f = b4.astype(jnp.float32)
    gamma_f = gamma.astype(jnp.float32)
    beta_f = beta.astype(jnp.float32)

    # ---- batch tiling: Bb rows per grid step (multiple of 8) ---------------
    # block_b=128 fills a v5e MXU tile; bump to 256 on v6e/v7x for large B.
    Bb = _round_up(min(block_b, max(B, 1)), 8)
    Bp = _round_up(B, Bb)

    ct_in = ct.astype(jnp.float32)
    lt_in = Lt.astype(jnp.bfloat16)
    if Bp != B:
        ct_in = jnp.pad(ct_in, ((0, Bp - B), (0, 0)))
        lt_in = jnp.pad(lt_in, ((0, Bp - B), (0, 0), (0, 0)))

    const_map = lambda b: (0, 0)

    def weight_spec(shp):
        return pl.BlockSpec(shp, const_map)

    cost = pl.CostEstimate(
        flops=int(2 * D * D * Bp * (2 + 2 * T) + 4 * Bp * T * D),
        transcendentals=int(Bp * T),
        bytes_accessed=int(4 * Bp * D * 2 + 2 * Bp * T * D
                           + 2 * (D * D + D * 2 * D + D * D) + 4 * 6 * D),
    )

    out = pl.pallas_call(
        nlblock_kernel,
        out_shape=jax.ShapeDtypeStruct((Bp, D), jnp.float32),
        grid=(Bp // Bb,),
        in_specs=[
            pl.BlockSpec((Bb, D), lambda b: (b, 0)),          # ct (f32)
            pl.BlockSpec((Bb, T, D), lambda b: (b, 0, 0)),    # Lt (bf16)
            weight_spec((D, D)),        # w1 (bf16, scale folded)
            weight_spec((1, D)),        # b1
            weight_spec((D, 2 * D)),    # w2|w3 fused (bf16)
            weight_spec((1, 2 * D)),    # b2|b3 fused
            weight_spec((D, D)),        # w4 (bf16)
            weight_spec((1, D)),        # b4
            weight_spec((1, D)),        # layer_norm gamma
            weight_spec((1, D)),        # layer_norm beta
        ],
        out_specs=pl.BlockSpec((Bb, D), lambda b: (b, 0)),
        compiler_params=pltpu.CompilerParams(
            dimension_semantics=("parallel",),
            vmem_limit_bytes=48 * 1024 * 1024),
        cost_estimate=cost,
    )(ct_in, lt_in, w1, b1s, w23, b23, w4, b4f, gamma_f, beta_f)

    return out[:B]


def init_params(key):
    """Deterministic parameter init mirroring the module's __init__."""
    keys = jax.random.split(key, 8)
    xavier_bound = (6.0 / (D + D)) ** 0.5          # square (512, 512) weight
    bias_bound = 1.0 / (D ** 0.5)                  # nn.Linear default bias

    def make_linear(kw, kb):
        w = jax.random.uniform(kw, (D, D), jnp.float32, -xavier_bound, xavier_bound)
        b = jax.random.uniform(kb, (1, D), jnp.float32, -bias_bound, bias_bound)
        return w.T, b                              # pass W^T (in, out)

    w1t, b1 = make_linear(keys[0], keys[1])
    w2t, b2 = make_linear(keys[2], keys[3])
    w3t, b3 = make_linear(keys[4], keys[5])
    w4t, b4 = make_linear(keys[6], keys[7])
    gamma = jnp.ones((1, D), jnp.float32)          # LayerNorm weight
    beta = jnp.zeros((1, D), jnp.float32)          # LayerNorm bias
    return (w1t, b1, w2t, b2, w3t, b3, w4t, b4, gamma, beta)


def nlblock_reference(ct, Lt, params):
    """Pure-JAX (f32) reference of the PyTorch forward (dropout in eval mode)."""
    (w1t, b1, w2t, b2, w3t, b3, w4t, b4, gamma, beta) = params
    ct_1 = ct[:, None, :] @ w1t + b1                      # (B,1,512)
    Lt_1 = Lt @ w2t + b2                                  # (B,T,512)
    SL = ct_1 @ jnp.swapaxes(Lt_1, 1, 2)                  # (B,1,T)
    SL = SL * (1.0 / D) ** 0.5
    SL = jax.nn.softmax(SL, axis=2)
    Lt_2 = Lt @ w3t + b3                                  # (B,T,512)
    SLL = SL @ Lt_2                                       # (B,1,512)
    mu = jnp.mean(SLL, axis=-1, keepdims=True)
    var = jnp.mean((SLL - mu) ** 2, axis=-1, keepdims=True)
    SLL = (SLL - mu) / jnp.sqrt(var + 1e-5) * gamma + beta
    SLL = jax.nn.relu(SLL)
    SLL = SLL @ w4t + b4
    return ct + SLL[:, 0, :]


if __name__ == "__main__":
    B, T = 2, 8
    key = jax.random.PRNGKey(0)
    k_ct, k_lt, k_params = jax.random.split(key, 3)

    ct = jax.random.normal(k_ct, (B, D), jnp.float32)
    Lt = jax.random.normal(k_lt, (B, T, D), jnp.float32)
    params = init_params(k_params)

    out = nlblock(ct, Lt, params)
    out = jax.block_until_ready(out)

    ref = nlblock_reference(ct, Lt, params)
    assert out.shape == (B, D)
    # bf16 matmul operands (f32 accumulation) -> loose tolerance vs f32 ref.
    max_err = float(jnp.max(jnp.abs(out - ref)))
    assert max_err < 1e-1, f"mismatch vs reference (max abs err {max_err})"

    print("KERNEL_OK")
</pallas_src>

<mosaic_0001>
module attributes {stable_mosaic.version = 11 : i64} {
  func.func @nlblock_kernel(%arg0: i32, %arg1: memref<8x512xf32, #tpu.memory_space<vmem>>, %arg2: memref<8x8x512xbf16, #tpu.memory_space<vmem>>, %arg3: memref<512x512xbf16, #tpu.memory_space<vmem>>, %arg4: memref<1x512xf32, #tpu.memory_space<vmem>>, %arg5: memref<512x1024xbf16, #tpu.memory_space<vmem>>, %arg6: memref<1x1024xf32, #tpu.memory_space<vmem>>, %arg7: memref<512x512xbf16, #tpu.memory_space<vmem>>, %arg8: memref<1x512xf32, #tpu.memory_space<vmem>>, %arg9: memref<1x512xf32, #tpu.memory_space<vmem>>, %arg10: memref<1x512xf32, #tpu.memory_space<vmem>>, %arg11: memref<8x512xf32, #tpu.memory_space<vmem>>) attributes {dimension_semantics = [#tpu.dimension_semantics<parallel>], iteration_bounds = array<i64: 1>, scalar_prefetch = 0 : i64, scratch_operands = 0 : i64, tpu.core_type = #tpu.core_type<tc>, window_params = [{transform_indices = @transform_0, window_bounds = array<i64: 8, 512>}, {transform_indices = @transform_1, window_bounds = array<i64: 8, 8, 512>}, {pipeline_mode = #tpu.pipeline_mode<synchronous>, transform_indices = @transform_2, window_bounds = array<i64: 512, 512>}, {pipeline_mode = #tpu.pipeline_mode<synchronous>, transform_indices = @transform_3, window_bounds = array<i64: 1, 512>}, {pipeline_mode = #tpu.pipeline_mode<synchronous>, transform_indices = @transform_4, window_bounds = array<i64: 512, 1024>}, {pipeline_mode = #tpu.pipeline_mode<synchronous>, transform_indices = @transform_5, window_bounds = array<i64: 1, 1024>}, {pipeline_mode = #tpu.pipeline_mode<synchronous>, transform_indices = @transform_6, window_bounds = array<i64: 512, 512>}, {pipeline_mode = #tpu.pipeline_mode<synchronous>, transform_indices = @transform_7, window_bounds = array<i64: 1, 512>}, {pipeline_mode = #tpu.pipeline_mode<synchronous>, transform_indices = @transform_8, window_bounds = array<i64: 1, 512>}, {pipeline_mode = #tpu.pipeline_mode<synchronous>, transform_indices = @transform_9, window_bounds = array<i64: 1, 512>}, {transform_indices = @transform_10, window_bounds = array<i64: 8, 512>}]} {
    %c0 = arith.constant 0 : index
    %c0_0 = arith.constant 0 : index
    %0 = vector.load %arg1[%c0, %c0_0] : memref<8x512xf32, #tpu.memory_space<vmem>>, vector<8x512xf32>
    %c0_1 = arith.constant 0 : index
    %c0_2 = arith.constant 0 : index
    %c0_3 = arith.constant 0 : index
    %1 = vector.load %arg2[%c0_1, %c0_2, %c0_3] : memref<8x8x512xbf16, #tpu.memory_space<vmem>>, vector<8x8x512xbf16>
    %2 = vector.shape_cast %1 : vector<8x8x512xbf16> to vector<64x512xbf16>
    %3 = arith.truncf %0 : vector<8x512xf32> to vector<8x512xbf16>
    %c0_4 = arith.constant 0 : index
    %c0_5 = arith.constant 0 : index
    %4 = vector.load %arg3[%c0_4, %c0_5] : memref<512x512xbf16, #tpu.memory_space<vmem>>, vector<512x512xbf16>
    %cst = arith.constant dense<0.000000e+00> : vector<8x512xf32>
    %5 = tpu.matmul %3, %4, %cst {dimension_numbers = #tpu.dot_dimension_numbers<[1], [0], [0], [1], [0, 0, 1, 1], [], []>} : vector<8x512xbf16>, vector<512x512xbf16>, vector<8x512xf32> -> vector<8x512xf32>
    %c0_6 = arith.constant 0 : index
    %c0_7 = arith.constant 0 : index
    %6 = vector.load %arg4[%c0_6, %c0_7] : memref<1x512xf32, #tpu.memory_space<vmem>>, vector<1x512xf32>
    %7 = vector.broadcast %6 : vector<1x512xf32> to vector<8x512xf32>
    %8 = arith.addf %5, %7 : vector<8x512xf32>
    %c0_8 = arith.constant 0 : index
    %c0_9 = arith.constant 0 : index
    %9 = vector.load %arg5[%c0_8, %c0_9] : memref<512x1024xbf16, #tpu.memory_space<vmem>>, vector<512x1024xbf16>
    %cst_10 = arith.constant dense<0.000000e+00> : vector<64x1024xf32>
    %10 = tpu.matmul %2, %9, %cst_10 {dimension_numbers = #tpu.dot_dimension_numbers<[1], [0], [0], [1], [0, 0, 1, 1], [], []>} : vector<64x512xbf16>, vector<512x1024xbf16>, vector<64x1024xf32> -> vector<64x1024xf32>
    %c0_11 = arith.constant 0 : index
    %c0_12 = arith.constant 0 : index
    %11 = vector.load %arg6[%c0_11, %c0_12] : memref<1x1024xf32, #tpu.memory_space<vmem>>, vector<1x1024xf32>
    %12 = vector.broadcast %11 : vector<1x1024xf32> to vector<64x1024xf32>
    %13 = arith.addf %10, %12 : vector<64x1024xf32>
    %14 = vector.shape_cast %13 : vector<64x1024xf32> to vector<8x8x1024xf32>
    %15 = vector.extract_strided_slice %14 {offsets = [0, 0, 0], sizes = [8, 8, 512], strides = [1, 1, 1]} : vector<8x8x1024xf32> to vector<8x8x512xf32>
    %16 = vector.extract_strided_slice %14 {offsets = [0, 0, 512], sizes = [8, 8, 512], strides = [1, 1, 1]} : vector<8x8x1024xf32> to vector<8x8x512xf32>
    %17 = vector.shape_cast %8 : vector<8x512xf32> to vector<8x1x512xf32>
    %18 = vector.broadcast %17 : vector<8x1x512xf32> to vector<8x8x512xf32>
    %19 = arith.mulf %18, %15 : vector<8x8x512xf32>
    %cst_13 = arith.constant dense<0.000000e+00> : vector<8x8xf32>
    %20 = vector.multi_reduction <add>, %19, %cst_13 [2] : vector<8x8x512xf32> to vector<8x8xf32>
    %cst_14 = arith.constant dense<0xFF800000> : vector<8xf32>
    %21 = vector.multi_reduction <maximumf>, %20, %cst_14 [1] : vector<8x8xf32> to vector<8xf32>
    %22 = vector.shape_cast %21 : vector<8xf32> to vector<8x1xf32>
    %23 = vector.broadcast %22 : vector<8x1xf32> to vector<8x8xf32>
    %24 = arith.subf %20, %23 : vector<8x8xf32>
    %25 = math.exp %24 : vector<8x8xf32>
    %cst_15 = arith.constant dense<0.000000e+00> : vector<8xf32>
    %26 = vector.multi_reduction <add>, %25, %cst_15 [1] : vector<8x8xf32> to vector<8xf32>
    %27 = vector.shape_cast %26 : vector<8xf32> to vector<8x1xf32>
    %28 = tpu.reciprocal %27 {approx = true} : vector<8x1xf32> -> vector<8x1xf32>
    %29 = vector.broadcast %28 : vector<8x1xf32> to vector<8x8xf32>
    %30 = arith.mulf %25, %29 : vector<8x8xf32>
    %31 = vector.shape_cast %30 : vector<8x8xf32> to vector<8x8x1xf32>
    %32 = vector.broadcast %31 : vector<8x8x1xf32> to vector<8x8x512xf32>
    %33 = arith.mulf %32, %16 : vector<8x8x512xf32>
    %cst_16 = arith.constant dense<0.000000e+00> : vector<8x512xf32>
    %34 = vector.multi_reduction <add>, %33, %cst_16 [1] : vector<8x8x512xf32> to vector<8x512xf32>
    %cst_17 = arith.constant dense<0.000000e+00> : vector<8xf32>
    %35 = vector.multi_reduction <add>, %34, %cst_17 [1] : vector<8x512xf32> to vector<8xf32>
    %36 = vector.shape_cast %35 : vector<8xf32> to vector<8x1xf32>
    %cst_18 = arith.constant 5.120000e+02 : f32
    %37 = vector.broadcast %cst_18 : f32 to vector<8x1xf32>
    %38 = arith.divf %36, %37 : vector<8x1xf32>
    %39 = vector.broadcast %38 : vector<8x1xf32> to vector<8x512xf32>
    %40 = arith.subf %34, %39 : vector<8x512xf32>
    %41 = vector.broadcast %38 : vector<8x1xf32> to vector<8x512xf32>
    %42 = arith.subf %34, %41 : vector<8x512xf32>
    %43 = arith.mulf %40, %42 : vector<8x512xf32>
    %cst_19 = arith.constant dense<0.000000e+00> : vector<8xf32>
    %44 = vector.multi_reduction <add>, %43, %cst_19 [1] : vector<8x512xf32> to vector<8xf32>
    %45 = vector.shape_cast %44 : vector<8xf32> to vector<8x1xf32>
    %cst_20 = arith.constant 5.120000e+02 : f32
    %46 = vector.broadcast %cst_20 : f32 to vector<8x1xf32>
    %47 = arith.divf %45, %46 : vector<8x1xf32>
    %48 = vector.broadcast %38 : vector<8x1xf32> to vector<8x512xf32>
    %49 = arith.subf %34, %48 : vector<8x512xf32>
    %cst_21 = arith.constant 9.99999974E-6 : f32
    %50 = vector.broadcast %cst_21 : f32 to vector<8x1xf32>
    %51 = arith.addf %47, %50 : vector<8x1xf32>
    %52 = math.rsqrt %51 : vector<8x1xf32>
    %53 = vector.broadcast %52 : vector<8x1xf32> to vector<8x512xf32>
    %54 = arith.mulf %49, %53 : vector<8x512xf32>
    %c0_22 = arith.constant 0 : index
    %c0_23 = arith.constant 0 : index
    %55 = vector.load %arg9[%c0_22, %c0_23] : memref<1x512xf32, #tpu.memory_space<vmem>>, vector<1x512xf32>
    %56 = vector.broadcast %55 : vector<1x512xf32> to vector<8x512xf32>
    %57 = arith.mulf %54, %56 : vector<8x512xf32>
    %c0_24 = arith.constant 0 : index
    %c0_25 = arith.constant 0 : index
    %58 = vector.load %arg10[%c0_24, %c0_25] : memref<1x512xf32, #tpu.memory_space<vmem>>, vector<1x512xf32>
    %59 = vector.broadcast %58 : vector<1x512xf32> to vector<8x512xf32>
    %60 = arith.addf %57, %59 : vector<8x512xf32>
    %cst_26 = arith.constant 0.000000e+00 : f32
    %61 = vector.broadcast %cst_26 : f32 to vector<8x512xf32>
    %62 = arith.maximumf %60, %61 : vector<8x512xf32>
    %63 = arith.truncf %62 : vector<8x512xf32> to vector<8x512xbf16>
    %c0_27 = arith.constant 0 : index
    %c0_28 = arith.constant 0 : index
    %64 = vector.load %arg7[%c0_27, %c0_28] : memref<512x512xbf16, #tpu.memory_space<vmem>>, vector<512x512xbf16>
    %cst_29 = arith.constant dense<0.000000e+00> : vector<8x512xf32>
    %65 = tpu.matmul %63, %64, %cst_29 {dimension_numbers = #tpu.dot_dimension_numbers<[1], [0], [0], [1], [0, 0, 1, 1], [], []>} : vector<8x512xbf16>, vector<512x512xbf16>, vector<8x512xf32> -> vector<8x512xf32>
    %c0_30 = arith.constant 0 : index
    %c0_31 = arith.constant 0 : index
    %66 = vector.load %arg8[%c0_30, %c0_31] : memref<1x512xf32, #tpu.memory_space<vmem>>, vector<1x512xf32>
    %67 = vector.broadcast %66 : vector<1x512xf32> to vector<8x512xf32>
    %68 = arith.addf %65, %67 : vector<8x512xf32>
    %69 = arith.addf %0, %68 : vector<8x512xf32>
    %c0_32 = arith.constant 0 : index
    %c0_33 = arith.constant 0 : index
    %70 = vector.load %arg11[%c0_32, %c0_33] : memref<8x512xf32, #tpu.memory_space<vmem>>, vector<8x512xf32>
    tpu.vector_store %arg11[%c0_32, %c0_33], %69 {strides = array<i32>} : memref<8x512xf32, #tpu.memory_space<vmem>>, vector<8x512xf32>,
    return
  }
  func.func @transform_0(%arg0: i32) -> (i32, i32) {
    %c0_i32 = arith.constant 0 : i32
    %c0_i32_0 = arith.constant 0 : i32
    return %arg0, %c0_i32 : i32, i32
  }
  func.func @transform_1(%arg0: i32) -> (i32, i32, i32) {
    %c0_i32 = arith.constant 0 : i32
    %c0_i32_0 = arith.constant 0 : i32
    %c0_i32_1 = arith.constant 0 : i32
    return %arg0, %c0_i32, %c0_i32_0 : i32, i32, i32
  }
  func.func @transform_2(%arg0: i32) -> (i32, i32) {
    %c0_i32 = arith.constant 0 : i32
    %c0_i32_0 = arith.constant 0 : i32
    %c0_i32_1 = arith.constant 0 : i32
    return %c0_i32, %c0_i32_0 : i32, i32
  }
  func.func @transform_3(%arg0: i32) -> (i32, i32) {
    %c0_i32 = arith.constant 0 : i32
    %c0_i32_0 = arith.constant 0 : i32
    %c0_i32_1 = arith.constant 0 : i32
    return %c0_i32, %c0_i32_0 : i32, i32
  }
  func.func @transform_4(%arg0: i32) -> (i32, i32) {
    %c0_i32 = arith.constant 0 : i32
    %c0_i32_0 = arith.constant 0 : i32
    %c0_i32_1 = arith.constant 0 : i32
    return %c0_i32, %c0_i32_0 : i32, i32
  }
  func.func @transform_5(%arg0: i32) -> (i32, i32) {
    %c0_i32 = arith.constant 0 : i32
    %c0_i32_0 = arith.constant 0 : i32
    %c0_i32_1 = arith.constant 0 : i32
    return %c0_i32, %c0_i32_0 : i32, i32
  }
  func.func @transform_6(%arg0: i32) -> (i32, i32) {
    %c0_i32 = arith.constant 0 : i32
    %c0_i32_0 = arith.constant 0 : i32
    %c0_i32_1 = arith.constant 0 : i32
    return %c0_i32, %c0_i32_0 : i32, i32
  }
  func.func @transform_7(%arg0: i32) -> (i32, i32) {
    %c0_i32 = arith.constant 0 : i32
    %c0_i32_0 = arith.constant 0 : i32
    %c0_i32_1 = arith.constant 0 : i32
    return %c0_i32, %c0_i32_0 : i32, i32
  }
  func.func @transform_8(%arg0: i32) -> (i32, i32) {
    %c0_i32 = arith.constant 0 : i32
    %c0_i32_0 = arith.constant 0 : i32
    %c0_i32_1 = arith.constant 0 : i32
    return %c0_i32, %c0_i32_0 : i32, i32
  }
  func.func @transform_9(%arg0: i32) -> (i32, i32) {
    %c0_i32 = arith.constant 0 : i32
    %c0_i32_0 = arith.constant 0 : i32
    %c0_i32_1 = arith.constant 0 : i32
    return %c0_i32, %c0_i32_0 : i32, i32
  }
  func.func @transform_10(%arg0: i32) -> (i32, i32) {
    %c0_i32 = arith.constant 0 : i32
    %c0_i32_0 = arith.constant 0 : i32
    return %arg0, %c0_i32 : i32, i32
  }
}

</mosaic_0001>

<llo_original>
// kernel: tpu_custom_call.1
$region0: #{tpu_custom_call.1}
  #allocation0 [shape = 'u32[]', space=smem, size = 0x4, offset = 0x4, fixed_abs, tag = 'smem constant byte address 0x4 - core index']
  #allocation1 [shape = 'u32[144,128]{1,0:T(1,128)}', space=vmem, size = 0x12000, scoped, tag = 'internal scratch']
  %s0 = inlined_call_operand.hbm [shape: f32[8,512], index: 0, kind: input, shape index: {}]
  %s1 = inlined_call_operand.hbm [shape: bf16[8,8,512], index: 1, kind: input, shape index: {}]
  %s2 = inlined_call_operand.hbm [shape: bf16[512,512], index: 2, kind: input, shape index: {}]
  %s3 = inlined_call_operand.vmem [shape: f32[1,512], index: 3, kind: input, shape index: {}]
  %s4 = inlined_call_operand.hbm [shape: bf16[512,1024], index: 4, kind: input, shape index: {}]
  %s5 = inlined_call_operand.vmem [shape: f32[1,1024], index: 5, kind: input, shape index: {}]
  %s6 = inlined_call_operand.hbm [shape: bf16[512,512], index: 6, kind: input, shape index: {}]
  %s7 = inlined_call_operand.vmem [shape: f32[1,512], index: 7, kind: input, shape index: {}]
  %s8 = inlined_call_operand.vmem [shape: f32[1,512], index: 8, kind: input, shape index: {}]
  %s9 = inlined_call_operand.vmem [shape: f32[1,512], index: 9, kind: input, shape index: {}]
  %s10 = inlined_call_operand.hbm [shape: f32[8,512], index: 10, kind: output, shape index: {}]
  %s11 = sld [smem:[#allocation0]]
  $region70: #{tpu_custom_call.1} parent=0
    _
  %s13 = ssub.s32 1, %s11
  %s14 = scalar_select 0, %s13, %s11
  $region1: #{tpu_custom_call.1} parent=0
    #allocation2 [shape = 'u8[16384]{0}', space=vmem, size = 0x4000, scoped, tag = 'input window, operand 0, single buffered']
    #allocation3 [shape = 's32[1]{0}', space=sflag, size = 0x4, scoped, tag = 'scoped memory for tpu_custom_call.1']
    #allocation4 [shape = 's32[1]{0}', space=sflag, size = 0x4, scoped, tag = 'scoped memory for tpu_custom_call.1']
    #allocation5 [shape = 'u8[65536]{0}', space=vmem, size = 0x10000, scoped, tag = 'input window, operand 1, single buffered']
    #allocation6 [shape = 's32[1]{0}', space=sflag, size = 0x4, scoped, tag = 'scoped memory for tpu_custom_call.1']
    #allocation7 [shape = 'u8[524288]{0}', space=vmem, size = 0x80000, scoped, tag = 'input window, operand 2, single buffered']
    #allocation8 [shape = 'u8[1048576]{0}', space=vmem, size = 0x100000, scoped, tag = 'input window, operand 4, single buffered']
    #allocation9 [shape = 's32[1]{0}', space=sflag, size = 0x4, scoped, tag = 'scoped memory for tpu_custom_call.1']
    #allocation10 [shape = 'u8[524288]{0}', space=vmem, size = 0x80000, scoped, tag = 'input window, operand 6, single buffered']
    #allocation11 [shape = 'u8[16384]{0}', space=vmem, size = 0x4000, scoped, tag = 'output window, operand 0, single buffered']
    %15 = vsyncpa [#allocation3], 0
    %16 = vsyncpa [#allocation6], 0
    %17 = vsyncpa [#allocation9], 0
    %18 = vsyncpa [#allocation4], 0
    // Predicated region
    $region2: #{tpu_custom_call.1} parent=1 // pred_check
      _
    $region3: #{tpu_custom_call.1} parent=1 // pred_check_branch
      %20 = sbr.rel (0) target = $region5
    $region4: #{tpu_custom_call.1} parent=1 // pred_region
      %s22 = ssub.s32 512, 512
      %23 = vsyncadd [#allocation3], %s22
      %s25 = sshll.u32 [#allocation2], 4
      %s26 = int_to_ptr.vmem [resolvable:$true] %s25
      %28 = dma.hbm_to_vmem [thread:$0]  %s0, 512, %s26, [#allocation3]
    $region5: #{tpu_custom_call.1} parent=1 // pred_fallthru
      _
    // Predicated region
    $region6: #{tpu_custom_call.1} parent=1 // pred_check
      _
    $region7: #{tpu_custom_call.1} parent=1 // pred_check_branch
      %30 = sbr.rel (0) target = $region9
    $region8: #{tpu_custom_call.1} parent=1 // pred_region
      %s32 = ssub.s32 2048, 2048
      %33 = vsyncadd [#allocation6], %s32
      %s34 = sshll.u32 [#allocation5], 4
      %s35 = int_to_ptr.vmem [resolvable:$true] %s34
      %40 = dma.hbm_to_vmem [thread:$0]  %s1, 2048, %s35, [#allocation6], 256, 256, 16
    $region9: #{tpu_custom_call.1} parent=1 // pred_fallthru
      _
    // Predicated region
    $region10: #{tpu_custom_call.1} parent=1 // pred_check
      _
    $region11: #{tpu_custom_call.1} parent=1 // pred_check_branch
      %42 = sbr.rel (0) target = $region13
    $region12: #{tpu_custom_call.1} parent=1 // pred_region
      %s44 = ssub.s32 16384, 16384
      %45 = vsyncadd [#allocation6], %s44
      %s46 = sshll.u32 [#allocation7], 4
      %s47 = int_to_ptr.vmem [resolvable:$true] %s46
      %52 = dma.hbm_to_vmem [thread:$0]  %s2, 16384, %s47, [#allocation6], 256, 256, 16
    $region13: #{tpu_custom_call.1} parent=1 // pred_fallthru
      _
    // Predicated region
    $region14: #{tpu_custom_call.1} parent=1 // pred_check
      _
    $region15: #{tpu_custom_call.1} parent=1 // pred_check_branch
      %54 = sbr.rel (0) target = $region17
    $region16: #{tpu_custom_call.1} parent=1 // pred_region
      _
    $region17: #{tpu_custom_call.1} parent=1 // pred_fallthru
      _
    // Predicated region
    $region18: #{tpu_custom_call.1} parent=1 // pred_check
      _
    $region19: #{tpu_custom_call.1} parent=1 // pred_check_branch
      %56 = sbr.rel (0) target = $region21
    $region20: #{tpu_custom_call.1} parent=1 // pred_region
      %s58 = ssub.s32 32768, 32768
      %59 = vsyncadd [#allocation9], %s58
      %s60 = sshll.u32 [#allocation8], 4
      %s61 = int_to_ptr.vmem [resolvable:$true] %s60
      %66 = dma.hbm_to_vmem [thread:$0]  %s4, 32768, %s61, [#allocation9], 512, 512, 32
    $region21: #{tpu_custom_call.1} parent=1 // pred_fallthru
      _
    // Predicated region
    $region22: #{tpu_custom_call.1} parent=1 // pred_check
      _
    $region23: #{tpu_custom_call.1} parent=1 // pred_check_branch
      %68 = sbr.rel (0) target = $region25
    $region24: #{tpu_custom_call.1} parent=1 // pred_region
      _
    $region25: #{tpu_custom_call.1} parent=1 // pred_fallthru
      _
    // Predicated region
    $region26: #{tpu_custom_call.1} parent=1 // pred_check
      _
    $region27: #{tpu_custom_call.1} parent=1 // pred_check_branch
      %70 = sbr.rel (0) target = $region29
    $region28: #{tpu_custom_call.1} parent=1 // pred_region
      %s72 = ssub.s32 16384, 16384
      %73 = vsyncadd [#allocation9], %s72
      %s74 = sshll.u32 [#allocation10], 4
      %s75 = int_to_ptr.vmem [resolvable:$true] %s74
      %80 = dma.hbm_to_vmem [thread:$0]  %s6, 16384, %s75, [#allocation9], 256, 256, 16
    $region29: #{tpu_custom_call.1} parent=1 // pred_fallthru
      _
    // Predicated region
    $region30: #{tpu_custom_call.1} parent=1 // pred_check
      _
    $region31: #{tpu_custom_call.1} parent=1 // pred_check_branch
      %82 = sbr.rel (0) target = $region33
    $region32: #{tpu_custom_call.1} parent=1 // pred_region
      _
    $region33: #{tpu_custom_call.1} parent=1 // pred_fallthru
      _
    // Predicated region
    $region34: #{tpu_custom_call.1} parent=1 // pred_check
      _
    $region35: #{tpu_custom_call.1} parent=1 // pred_check_branch
      %84 = sbr.rel (0) target = $region37
    $region36: #{tpu_custom_call.1} parent=1 // pred_region
      _
    $region37: #{tpu_custom_call.1} parent=1 // pred_fallthru
      _
    // Predicated region
    $region38: #{tpu_custom_call.1} parent=1 // pred_check
      _
    $region39: #{tpu_custom_call.1} parent=1 // pred_check_branch
      %86 = sbr.rel (0) target = $region41
    $region40: #{tpu_custom_call.1} parent=1 // pred_region
      _
    $region41: #{tpu_custom_call.1} parent=1 // pred_fallthru
      _
    // Predicated region
    $region42: #{tpu_custom_call.1} parent=1 // pred_check
      _
    $region43: #{tpu_custom_call.1} parent=1 // pred_check_branch
      %88 = sbr.rel (0) target = $region45
    $region44: #{tpu_custom_call.1} parent=1 // pred_region
      %89 = dma.done [#allocation3], 512
    $region45: #{tpu_custom_call.1} parent=1 // pred_fallthru
      _
    // Predicated region
    $region46: #{tpu_custom_call.1} parent=1 // pred_check
      _
    $region47: #{tpu_custom_call.1} parent=1 // pred_check_branch
      %91 = sbr.rel (0) target = $region49
    $region48: #{tpu_custom_call.1} parent=1 // pred_region
      %92 = dma.done [#allocation6], 2048
    $region49: #{tpu_custom_call.1} parent=1 // pred_fallthru
      _
    // Predicated region
    $region50: #{tpu_custom_call.1} parent=1 // pred_check
      _
    $region51: #{tpu_custom_call.1} parent=1 // pred_check_branch
      %94 = sbr.rel (0) target = $region53
    $region52: #{tpu_custom_call.1} parent=1 // pred_region
      %95 = dma.done [#allocation6], 16384
    $region53: #{tpu_custom_call.1} parent=1 // pred_fallthru
      _
    // Predicated region
    $region54: #{tpu_custom_call.1} parent=1 // pred_check
      _
    $region55: #{tpu_custom_call.1} parent=1 // pred_check_branch
      %97 = sbr.rel (0) target = $region57
    $region56: #{tpu_custom_call.1} parent=1 // pred_region
      %98 = dma.done [#allocation9], 32768
    $region57: #{tpu_custom_call.1} parent=1 // pred_fallthru
      _
    // Predicated region
    $region58: #{tpu_custom_call.1} parent=1 // pred_check
      _
    $region59: #{tpu_custom_call.1} parent=1 // pred_check_branch
      %100 = sbr.rel (0) target = $region61
    $region60: #{tpu_custom_call.1} parent=1 // pred_region
      %101 = dma.done [#allocation9], 16384
    $region61: #{tpu_custom_call.1} parent=1 // pred_fallthru
      _
    %v102 = vld [vmem:[#allocation2] sm:$0xff]
    %v103 = vld [vmem:[#allocation2 + $0x8] sm:$0xff]
    %v104 = vld [vmem:[#allocation2 + $0x10] sm:$0xff]
    %v105 = vld [vmem:[#allocation2 + $0x18] sm:$0xff]
    %v106 = vld [vmem:[#allocation5] sm:$0xff]
    %v107 = vld [vmem:[#allocation5 + $0x8] sm:$0xff]
    %v108 = vld [vmem:[#allocation5 + $0x10] sm:$0xff]
    %v109 = vld [vmem:[#allocation5 + $0x18] sm:$0xff]
    %v110 = vld [vmem:[#allocation5 + $0x20] sm:$0xff]
    %v111 = vld [vmem:[#allocation5 + $0x28] sm:$0xff]
    %v112 = vld [vmem:[#allocation5 + $0x30] sm:$0xff]
    %v113 = vld [vmem:[#allocation5 + $0x38] sm:$0xff]
    %v114 = vld [vmem:[#allocation5 + $0x40] sm:$0xff]
    %v115 = vld [vmem:[#allocation5 + $0x48] sm:$0xff]
    %v116 = vld [vmem:[#allocation5 + $0x50] sm:$0xff]
    %v117 = vld [vmem:[#allocation5 + $0x58] sm:$0xff]
    %v118 = vld [vmem:[#allocation5 + $0x60] sm:$0xff]
    %v119 = vld [vmem:[#allocation5 + $0x68] sm:$0xff]
    %v120 = vld [vmem:[#allocation5 + $0x70] sm:$0xff]
    %v121 = vld [vmem:[#allocation5 + $0x78] sm:$0xff]
    %v122 = vpack.c.bf16 %v102, %v102
    %v123 = vpack.c.bf16 %v103, %v103
    %v124 = vpack.c.bf16 %v104, %v104
    %v125 = vpack.c.bf16 %v105, %v105
    %v126 = vld [vmem:[#allocation7] sm:$0xff]
    %v127 = vld [vmem:[#allocation7 + $0x8] sm:$0xff]
    %v128 = vld [vmem:[#allocation7 + $0x10] sm:$0xff]
    %v129 = vld [vmem:[#allocation7 + $0x18] sm:$0xff]
    %v130 = vld [vmem:[#allocation7 + $0x20] sm:$0xff]
    %v131 = vld [vmem:[#allocation7 + $0x28] sm:$0xff]
    %v132 = vld [vmem:[#allocation7 + $0x30] sm:$0xff]
    %v133 = vld [vmem:[#allocation7 + $0x38] sm:$0xff]
    %v134 = vld [vmem:[#allocation7 + $0x40] sm:$0xff]
    %v135 = vld [vmem:[#allocation7 + $0x48] sm:$0xff]
    %v136 = vld [vmem:[#allocation7 + $0x50] sm:$0xff]
    %v137 = vld [vmem:[#allocation7 + $0x58] sm:$0xff]
    %v138 = vld [vmem:[#allocation7 + $0x60] sm:$0xff]
    %v139 = vld [vmem:[#allocation7 + $0x68] sm:$0xff]
    %v140 = vld [vmem:[#allocation7 + $0x70] sm:$0xff]
    %v141 = vld [vmem:[#allocation7 + $0x78] sm:$0xff]
    %v142 = vld [vmem:[#allocation7 + $0x80] sm:$0xff]
    %v143 = vld [vmem:[#allocation7 + $0x88] sm:$0xff]
    %v144 = vld [vmem:[#allocation7 + $0x90] sm:$0xff]
    %v145 = vld [vmem:[#allocation7 + $0x98] sm:$0xff]
    %v146 = vld [vmem:[#allocation7 + $0xa0] sm:$0xff]
    %v147 = vld [vmem:[#allocation7 + $0xa8] sm:$0xff]
    %v148 = vld [vmem:[#allocation7 + $0xb0] sm:$0xff]
    %v149 = vld [vmem:[#allocation7 + $0xb8] sm:$0xff]
    %v150 = vld [vmem:[#allocation7 + $0xc0] sm:$0xff]
    %v151 = vld [vmem:[#allocation7 + $0xc8] sm:$0xff]
    %v152 = vld [vmem:[#allocation7 + $0xd0] sm:$0xff]
    %v153 = vld [vmem:[#allocation7 + $0xd8] sm:$0xff]
    %v154 = vld [vmem:[#allocation7 + $0xe0] sm:$0xff]
    %v155 = vld [vmem:[#allocation7 + $0xe8] sm:$0xff]
    %v156 = vld [vmem:[#allocation7 + $0xf0] sm:$0xff]
    %v157 = vld [vmem:[#allocation7 + $0xf8] sm:$0xff]
    %v158 = vld [vmem:[#allocation7 + $0x100] sm:$0xff]
    %v159 = vld [vmem:[#allocation7 + $0x108] sm:$0xff]
    %v160 = vld [vmem:[#allocation7 + $0x110] sm:$0xff]
    %v161 = vld [vmem:[#allocation7 + $0x118] sm:$0xff]
    %v162 = vld [vmem:[#allocation7 + $0x120] sm:$0xff]
    %v163 = vld [vmem:[#allocation7 + $0x128] sm:$0xff]
    %v164 = vld [vmem:[#allocation7 + $0x130] sm:$0xff]
    %v165 = vld [vmem:[#allocation7 + $0x138] sm:$0xff]
    %v166 = vld [vmem:[#allocation7 + $0x140] sm:$0xff]
    %v167 = vld [vmem:[#allocation7 + $0x148] sm:$0xff]
    %v168 = vld [vmem:[#allocation7 + $0x150] sm:$0xff]
    %v169 = vld [vmem:[#allocation7 + $0x158] sm:$0xff]
    %v170 = vld [vmem:[#allocation7 + $0x160] sm:$0xff]
    %v171 = vld [vmem:[#allocation7 + $0x168] sm:$0xff]
    %v172 = vld [vmem:[#allocation7 + $0x170] sm:$0xff]
    %v173 = vld [vmem:[#allocation7 + $0x178] sm:$0xff]
    %v174 = vld [vmem:[#allocation7 + $0x180] sm:$0xff]
    %v175 = vld [vmem:[#allocation7 + $0x188] sm:$0xff]
    %v176 = vld [vmem:[#allocation7 + $0x190] sm:$0xff]
    %v177 = vld [vmem:[#allocation7 + $0x198] sm:$0xff]
    %v178 = vld [vmem:[#allocation7 + $0x1a0] sm:$0xff]
    %v179 = vld [vmem:[#allocation7 + $0x1a8] sm:$0xff]
    %v180 = vld [vmem:[#allocation7 + $0x1b0] sm:$0xff]
    %v181 = vld [vmem:[#allocation7 + $0x1b8] sm:$0xff]
    %v182 = vld [vmem:[#allocation7 + $0x1c0] sm:$0xff]
    %v183 = vld [vmem:[#allocation7 + $0x1c8] sm:$0xff]
    %v184 = vld [vmem:[#allocation7 + $0x1d0] sm:$0xff]
    %v185 = vld [vmem:[#allocation7 + $0x1d8] sm:$0xff]
    %v186 = vld [vmem:[#allocation7 + $0x1e0] sm:$0xff]
    %v187 = vld [vmem:[#allocation7 + $0x1e8] sm:$0xff]
    %v188 = vld [vmem:[#allocation7 + $0x1f0] sm:$0xff]
    %v189 = vld [vmem:[#allocation7 + $0x1f8] sm:$0xff]
    %v190 = vld [vmem:[#allocation7 + $0x200] sm:$0xff]
    %v191 = vld [vmem:[#allocation7 + $0x208] sm:$0xff]
    %v192 = vld [vmem:[#allocation7 + $0x210] sm:$0xff]
    %v193 = vld [vmem:[#allocation7 + $0x218] sm:$0xff]
    %v194 = vld [vmem:[#allocation7 + $0x220] sm:$0xff]
    %v195 = vld [vmem:[#allocation7 + $0x228] sm:$0xff]
    %v196 = vld [vmem:[#allocation7 + $0x230] sm:$0xff]
    %v197 = vld [vmem:[#allocation7 + $0x238] sm:$0xff]
    %v198 = vld [vmem:[#allocation7 + $0x240] sm:$0xff]
    %v199 = vld [vmem:[#allocation7 + $0x248] sm:$0xff]
    %v200 = vld [vmem:[#allocation7 + $0x250] sm:$0xff]
    %v201 = vld [vmem:[#allocation7 + $0x258] sm:$0xff]
    %v202 = vld [vmem:[#allocation7 + $0x260] sm:$0xff]
    %v203 = vld [vmem:[#allocation7 + $0x268] sm:$0xff]
    %v204 = vld [vmem:[#allocation7 + $0x270] sm:$0xff]
    %v205 = vld [vmem:[#allocation7 + $0x278] sm:$0xff]
    %v206 = vld [vmem:[#allocation7 + $0x280] sm:$0xff]
    %v207 = vld [vmem:[#allocation7 + $0x288] sm:$0xff]
    %v208 = vld [vmem:[#allocation7 + $0x290] sm:$0xff]
    %v209 = vld [vmem:[#allocation7 + $0x298] sm:$0xff]
    %v210 = vld [vmem:[#allocation7 + $0x2a0] sm:$0xff]
    %v211 = vld [vmem:[#allocation7 + $0x2a8] sm:$0xff]
    %v212 = vld [vmem:[#allocation7 + $0x2b0] sm:$0xff]
    %v213 = vld [vmem:[#allocation7 + $0x2b8] sm:$0xff]
    %v214 = vld [vmem:[#allocation7 + $0x2c0] sm:$0xff]
    %v215 = vld [vmem:[#allocation7 + $0x2c8] sm:$0xff]
    %v216 = vld [vmem:[#allocation7 + $0x2d0] sm:$0xff]
    %v217 = vld [vmem:[#allocation7 + $0x2d8] sm:$0xff]
    %v218 = vld [vmem:[#allocation7 + $0x2e0] sm:$0xff]
    %v219 = vld [vmem:[#allocation7 + $0x2e8] sm:$0xff]
    %v220 = vld [vmem:[#allocation7 + $0x2f0] sm:$0xff]
    %v221 = vld [vmem:[#allocation7 + $0x2f8] sm:$0xff]
    %v222 = vld [vmem:[#allocation7 + $0x300] sm:$0xff]
    %v223 = vld [vmem:[#allocation7 + $0x308] sm:$0xff]
    %v224 = vld [vmem:[#allocation7 + $0x310] sm:$0xff]
    %v225 = vld [vmem:[#allocation7 + $0x318] sm:$0xff]
    %v226 = vld [vmem:[#allocation7 + $0x320] sm:$0xff]
    %v227 = vld [vmem:[#allocation7 + $0x328] sm:$0xff]
    %v228 = vld [vmem:[#allocation7 + $0x330] sm:$0xff]
    %v229 = vld [vmem:[#allocation7 + $0x338] sm:$0xff]
    %v230 = vld [vmem:[#allocation7 + $0x340] sm:$0xff]
    %v231 = vld [vmem:[#allocation7 + $0x348] sm:$0xff]
    %v232 = vld [vmem:[#allocation7 + $0x350] sm:$0xff]
    %v233 = vld [vmem:[#allocation7 + $0x358] sm:$0xff]
    %v234 = vld [vmem:[#allocation7 + $0x360] sm:$0xff]
    %v235 = vld [vmem:[#allocation7 + $0x368] sm:$0xff]
    %v236 = vld [vmem:[#allocation7 + $0x370] sm:$0xff]
    %v237 = vld [vmem:[#allocation7 + $0x378] sm:$0xff]
    %v238 = vld [vmem:[#allocation7 + $0x380] sm:$0xff]
    %v239 = vld [vmem:[#allocation7 + $0x388] sm:$0xff]
    %v240 = vld [vmem:[#allocation7 + $0x390] sm:$0xff]
    %v241 = vld [vmem:[#allocation7 + $0x398] sm:$0xff]
    %v242 = vld [vmem:[#allocation7 + $0x3a0] sm:$0xff]
    %v243 = vld [vmem:[#allocation7 + $0x3a8] sm:$0xff]
    %v244 = vld [vmem:[#allocation7 + $0x3b0] sm:$0xff]
    %v245 = vld [vmem:[#allocation7 + $0x3b8] sm:$0xff]
    %v246 = vld [vmem:[#allocation7 + $0x3c0] sm:$0xff]
    %v247 = vld [vmem:[#allocation7 + $0x3c8] sm:$0xff]
    %v248 = vld [vmem:[#allocation7 + $0x3d0] sm:$0xff]
    %v249 = vld [vmem:[#allocation7 + $0x3d8] sm:$0xff]
    %v250 = vld [vmem:[#allocation7 + $0x3e0] sm:$0xff]
    %v251 = vld [vmem:[#allocation7 + $0x3e8] sm:$0xff]
    %v252 = vld [vmem:[#allocation7 + $0x3f0] sm:$0xff]
    %v253 = vld [vmem:[#allocation7 + $0x3f8] sm:$0xff]
    %v254 = vld [vmem:[%s3] sm:$0xf]
    %v256 = vlaneseq
    %v257 = vshrl.u32 %v256, 7
    %v258 = vsub.s32 0, %v257
    %v259 = vrot.slane %v254, %v258
    %v260 = vlaneseq
    %v261 = vshrl.u32 %v260, 7
    %v262 = vsub.s32 1, %v261
    %v263 = vrot.slane %v254, %v262
    %v264 = vlaneseq
    %v265 = vshrl.u32 %v264, 7
    %v266 = vsub.s32 2, %v265
    %v267 = vrot.slane %v254, %v266
    %v268 = vlaneseq
    %v269 = vshrl.u32 %v268, 7
    %v270 = vsub.s32 3, %v269
    %v271 = vrot.slane %v254, %v270
    %v404 = vunpack.c.l.b16 %v126
    %v405 = vunpack.c.h.b16 %v126
    %v406 = vunpack.c.l.b16 %v127
    %v407 = vunpack.c.h.b16 %v127
    %v408 = vunpack.c.l.b16 %v128
    %v409 = vunpack.c.h.b16 %v128
    %v410 = vunpack.c.l.b16 %v129
    %v411 = vunpack.c.h.b16 %v129
    %v412 = vunpack.c.l.b16 %v130
    %v413 = vunpack.c.h.b16 %v130
    %v414 = vunpack.c.l.b16 %v131
    %v415 = vunpack.c.h.b16 %v131
    %v416 = vunpack.c.l.b16 %v132
    %v417 = vunpack.c.h.b16 %v132
    %v418 = vunpack.c.l.b16 %v133
    %v419 = vunpack.c.h.b16 %v133
    %v420 = vunpack.c.l.b16 %v134
    %v421 = vunpack.c.h.b16 %v134
    %v422 = vunpack.c.l.b16 %v135
    %v423 = vunpack.c.h.b16 %v135
    %v424 = vunpack.c.l.b16 %v136
    %v425 = vunpack.c.h.b16 %v136
    %v426 = vunpack.c.l.b16 %v137
    %v427 = vunpack.c.h.b16 %v137
    %v428 = vunpack.c.l.b16 %v138
    %v429 = vunpack.c.h.b16 %v138
    %v430 = vunpack.c.l.b16 %v139
    %v431 = vunpack.c.h.b16 %v139
    %v432 = vunpack.c.l.b16 %v140
    %v433 = vunpack.c.h.b16 %v140
    %v434 = vunpack.c.l.b16 %v141
    %v435 = vunpack.c.h.b16 %v141
    %v436 = vunpack.c.l.b16 %v142
    %v437 = vunpack.c.h.b16 %v142
    %v438 = vunpack.c.l.b16 %v143
    %v439 = vunpack.c.h.b16 %v143
    %v440 = vunpack.c.l.b16 %v144
    %v441 = vunpack.c.h.b16 %v144
    %v442 = vunpack.c.l.b16 %v145
    %v443 = vunpack.c.h.b16 %v145
    %v444 = vunpack.c.l.b16 %v146
    %v445 = vunpack.c.h.b16 %v146
    %v446 = vunpack.c.l.b16 %v147
    %v447 = vunpack.c.h.b16 %v147
    %v448 = vunpack.c.l.b16 %v148
    %v449 = vunpack.c.h.b16 %v148
    %v450 = vunpack.c.l.b16 %v149
    %v451 = vunpack.c.h.b16 %v149
    %v452 = vunpack.c.l.b16 %v150
    %v453 = vunpack.c.h.b16 %v150
    %v454 = vunpack.c.l.b16 %v151
    %v455 = vunpack.c.h.b16 %v151
    %v456 = vunpack.c.l.b16 %v152
    %v457 = vunpack.c.h.b16 %v152
    %v458 = vunpack.c.l.b16 %v153
    %v459 = vunpack.c.h.b16 %v153
    %v460 = vunpack.c.l.b16 %v154
    %v461 = vunpack.c.h.b16 %v154
    %v462 = vunpack.c.l.b16 %v155
    %v463 = vunpack.c.h.b16 %v155
    %v464 = vunpack.c.l.b16 %v156
    %v465 = vunpack.c.h.b16 %v156
    %v466 = vunpack.c.l.b16 %v157
    %v467 = vunpack.c.h.b16 %v157
    %v468 = vunpack.c.l.b16 %v158
    %v469 = vunpack.c.h.b16 %v158
    %v470 = vunpack.c.l.b16 %v159
    %v471 = vunpack.c.h.b16 %v159
    %v472 = vunpack.c.l.b16 %v160
    %v473 = vunpack.c.h.b16 %v160
    %v474 = vunpack.c.l.b16 %v161
    %v475 = vunpack.c.h.b16 %v161
    %v476 = vunpack.c.l.b16 %v162
    %v477 = vunpack.c.h.b16 %v162
    %v478 = vunpack.c.l.b16 %v163
    %v479 = vunpack.c.h.b16 %v163
    %v480 = vunpack.c.l.b16 %v164
    %v481 = vunpack.c.h.b16 %v164
    %v482 = vunpack.c.l.b16 %v165
    %v483 = vunpack.c.h.b16 %v165
    %v484 = vunpack.c.l.b16 %v166
    %v485 = vunpack.c.h.b16 %v166
    %v486 = vunpack.c.l.b16 %v167
    %v487 = vunpack.c.h.b16 %v167
    %v488 = vunpack.c.l.b16 %v168
    %v489 = vunpack.c.h.b16 %v168
    %v490 = vunpack.c.l.b16 %v169
    %v491 = vunpack.c.h.b16 %v169
    %v492 = vunpack.c.l.b16 %v170
    %v493 = vunpack.c.h.b16 %v170
    %v494 = vunpack.c.l.b16 %v171
    %v495 = vunpack.c.h.b16 %v171
    %v496 = vunpack.c.l.b16 %v172
    %v497 = vunpack.c.h.b16 %v172
    %v498 = vunpack.c.l.b16 %v173
    %v499 = vunpack.c.h.b16 %v173
    %v500 = vunpack.c.l.b16 %v174
    %v501 = vunpack.c.h.b16 %v174
    %v502 = vunpack.c.l.b16 %v175
    %v503 = vunpack.c.h.b16 %v175
    %v504 = vunpack.c.l.b16 %v176
    %v505 = vunpack.c.h.b16 %v176
    %v506 = vunpack.c.l.b16 %v177
    %v507 = vunpack.c.h.b16 %v177
    %v508 = vunpack.c.l.b16 %v178
    %v509 = vunpack.c.h.b16 %v178
    %v510 = vunpack.c.l.b16 %v179
    %v511 = vunpack.c.h.b16 %v179
    %v512 = vunpack.c.l.b16 %v180
    %v513 = vunpack.c.h.b16 %v180
    %v514 = vunpack.c.l.b16 %v181
    %v515 = vunpack.c.h.b16 %v181
    %v516 = vunpack.c.l.b16 %v182
    %v517 = vunpack.c.h.b16 %v182
    %v518 = vunpack.c.l.b16 %v183
    %v519 = vunpack.c.h.b16 %v183
    %v520 = vunpack.c.l.b16 %v184
    %v521 = vunpack.c.h.b16 %v184
    %v522 = vunpack.c.l.b16 %v185
    %v523 = vunpack.c.h.b16 %v185
    %v524 = vunpack.c.l.b16 %v186
    %v525 = vunpack.c.h.b16 %v186
    %v526 = vunpack.c.l.b16 %v187
    %v527 = vunpack.c.h.b16 %v187
    %v528 = vunpack.c.l.b16 %v188
    %v529 = vunpack.c.h.b16 %v188
    %v530 = vunpack.c.l.b16 %v189
    %v531 = vunpack.c.h.b16 %v189
    %v532 = vunpack.c.l.b16 %v190
    %v533 = vunpack.c.h.b16 %v190
    %v534 = vunpack.c.l.b16 %v191
    %v535 = vunpack.c.h.b16 %v191
    %v536 = vunpack.c.l.b16 %v192
    %v537 = vunpack.c.h.b16 %v192
    %v538 = vunpack.c.l.b16 %v193
    %v539 = vunpack.c.h.b16 %v193
    %v540 = vunpack.c.l.b16 %v194
    %v541 = vunpack.c.h.b16 %v194
    %v542 = vunpack.c.l.b16 %v195
    %v543 = vunpack.c.h.b16 %v195
    %v544 = vunpack.c.l.b16 %v196
    %v545 = vunpack.c.h.b16 %v196
    %v546 = vunpack.c.l.b16 %v197
    %v547 = vunpack.c.h.b16 %v197
    %v548 = vunpack.c.l.b16 %v198
    %v549 = vunpack.c.h.b16 %v198
    %v550 = vunpack.c.l.b16 %v199
    %v551 = vunpack.c.h.b16 %v199
    %v552 = vunpack.c.l.b16 %v200
    %v553 = vunpack.c.h.b16 %v200
    %v554 = vunpack.c.l.b16 %v201
    %v555 = vunpack.c.h.b16 %v201
    %v556 = vunpack.c.l.b16 %v202
    %v557 = vunpack.c.h.b16 %v202
    %v558 = vunpack.c.l.b16 %v203
    %v559 = vunpack.c.h.b16 %v203
    %v560 = vunpack.c.l.b16 %v204
    %v561 = vunpack.c.h.b16 %v204
    %v562 = vunpack.c.l.b16 %v205
    %v563 = vunpack.c.h.b16 %v205
    %v564 = vunpack.c.l.b16 %v206
    %v565 = vunpack.c.h.b16 %v206
    %v566 = vunpack.c.l.b16 %v207
    %v567 = vunpack.c.h.b16 %v207
    %v568 = vunpack.c.l.b16 %v208
    %v569 = vunpack.c.h.b16 %v208
    %v570 = vunpack.c.l.b16 %v209
    %v571 = vunpack.c.h.b16 %v209
    %v572 = vunpack.c.l.b16 %v210
    %v573 = vunpack.c.h.b16 %v210
    %v574 = vunpack.c.l.b16 %v211
    %v575 = vunpack.c.h.b16 %v211
    %v576 = vunpack.c.l.b16 %v212
    %v577 = vunpack.c.h.b16 %v212
    %v578 = vunpack.c.l.b16 %v213
    %v579 = vunpack.c.h.b16 %v213
    %v580 = vunpack.c.l.b16 %v214
    %v581 = vunpack.c.h.b16 %v214
    %v582 = vunpack.c.l.b16 %v215
    %v583 = vunpack.c.h.b16 %v215
    %v584 = vunpack.c.l.b16 %v216
    %v585 = vunpack.c.h.b16 %v216
    %v586 = vunpack.c.l.b16 %v217
    %v587 = vunpack.c.h.b16 %v217
    %v588 = vunpack.c.l.b16 %v218
    %v589 = vunpack.c.h.b16 %v218
    %v590 = vunpack.c.l.b16 %v219
    %v591 = vunpack.c.h.b16 %v219
    %v592 = vunpack.c.l.b16 %v220
    %v593 = vunpack.c.h.b16 %v220
    %v594 = vunpack.c.l.b16 %v221
    %v595 = vunpack.c.h.b16 %v221
    %v596 = vunpack.c.l.b16 %v222
    %v597 = vunpack.c.h.b16 %v222
    %v598 = vunpack.c.l.b16 %v223
    %v599 = vunpack.c.h.b16 %v223
    %v600 = vunpack.c.l.b16 %v224
    %v601 = vunpack.c.h.b16 %v224
    %v602 = vunpack.c.l.b16 %v225
    %v603 = vunpack.c.h.b16 %v225
    %v604 = vunpack.c.l.b16 %v226
    %v605 = vunpack.c.h.b16 %v226
    %v606 = vunpack.c.l.b16 %v227
    %v607 = vunpack.c.h.b16 %v227
    %v608 = vunpack.c.l.b16 %v228
    %v609 = vunpack.c.h.b16 %v228
    %v610 = vunpack.c.l.b16 %v229
    %v611 = vunpack.c.h.b16 %v229
    %v612 = vunpack.c.l.b16 %v230
    %v613 = vunpack.c.h.b16 %v230
    %v614 = vunpack.c.l.b16 %v231
    %v615 = vunpack.c.h.b16 %v231
    %v616 = vunpack.c.l.b16 %v232
    %v617 = vunpack.c.h.b16 %v232
    %v618 = vunpack.c.l.b16 %v233
    %v619 = vunpack.c.h.b16 %v233
    %v620 = vunpack.c.l.b16 %v234
    %v621 = vunpack.c.h.b16 %v234
    %v622 = vunpack.c.l.b16 %v235
    %v623 = vunpack.c.h.b16 %v235
    %v624 = vunpack.c.l.b16 %v236
    %v625 = vunpack.c.h.b16 %v236
    %v626 = vunpack.c.l.b16 %v237
    %v627 = vunpack.c.h.b16 %v237
    %v628 = vunpack.c.l.b16 %v238
    %v629 = vunpack.c.h.b16 %v238
    %v630 = vunpack.c.l.b16 %v239
    %v631 = vunpack.c.h.b16 %v239
    %v632 = vunpack.c.l.b16 %v240
    %v633 = vunpack.c.h.b16 %v240
    %v634 = vunpack.c.l.b16 %v241
    %v635 = vunpack.c.h.b16 %v241
    %v636 = vunpack.c.l.b16 %v242
    %v637 = vunpack.c.h.b16 %v242
    %v638 = vunpack.c.l.b16 %v243
    %v639 = vunpack.c.h.b16 %v243
    %v640 = vunpack.c.l.b16 %v244
    %v641 = vunpack.c.h.b16 %v244
    %v642 = vunpack.c.l.b16 %v245
    %v643 = vunpack.c.h.b16 %v245
    %v644 = vunpack.c.l.b16 %v246
    %v645 = vunpack.c.h.b16 %v246
    %v646 = vunpack.c.l.b16 %v247
    %v647 = vunpack.c.h.b16 %v247
    %v648 = vunpack.c.l.b16 %v248
    %v649 = vunpack.c.h.b16 %v248
    %v650 = vunpack.c.l.b16 %v249
    %v651 = vunpack.c.h.b16 %v249
    %v652 = vunpack.c.l.b16 %v250
    %v653 = vunpack.c.h.b16 %v250
    %v654 = vunpack.c.l.b16 %v251
    %v655 = vunpack.c.h.b16 %v251
    %v656 = vunpack.c.l.b16 %v252
    %v657 = vunpack.c.h.b16 %v252
    %v658 = vunpack.c.l.b16 %v253
    %v659 = vunpack.c.h.b16 %v253
    %v660 = vpack.c.b16 %v408, %v404
    %v661 = vpack.c.b16 %v409, %v405
    %v662 = vpack.c.b16 %v410, %v406
    %v663 = vpack.c.b16 %v411, %v407
    %v664 = vpack.c.b16 %v416, %v412
    %v665 = vpack.c.b16 %v417, %v413
    %v666 = vpack.c.b16 %v418, %v414
    %v667 = vpack.c.b16 %v419, %v415
    %v668 = vpack.c.b16 %v424, %v420
    %v669 = vpack.c.b16 %v425, %v421
    %v670 = vpack.c.b16 %v426, %v422
    %v671 = vpack.c.b16 %v427, %v423
    %v672 = vpack.c.b16 %v432, %v428
    %v673 = vpack.c.b16 %v433, %v429
    %v674 = vpack.c.b16 %v434, %v430
    %v675 = vpack.c.b16 %v435, %v431
    %v676 = vpack.c.b16 %v440, %v436
    %v677 = vpack.c.b16 %v441, %v437
    %v678 = vpack.c.b16 %v442, %v438
    %v679 = vpack.c.b16 %v443, %v439
    %v680 = vpack.c.b16 %v448, %v444
    %v681 = vpack.c.b16 %v449, %v445
    %v682 = vpack.c.b16 %v450, %v446
    %v683 = vpack.c.b16 %v451, %v447
    %v684 = vpack.c.b16 %v456, %v452
    %v685 = vpack.c.b16 %v457, %v453
    %v686 = vpack.c.b16 %v458, %v454
    %v687 = vpack.c.b16 %v459, %v455
    %v688 = vpack.c.b16 %v464, %v460
    %v689 = vpack.c.b16 %v465, %v461
    %v690 = vpack.c.b16 %v466, %v462
    %v691 = vpack.c.b16 %v467, %v463
    %v692 = vpack.c.b16 %v472, %v468
    %v693 = vpack.c.b16 %v473, %v469
    %v694 = vpack.c.b16 %v474, %v470
    %v695 = vpack.c.b16 %v475, %v471
    %v696 = vpack.c.b16 %v480, %v476
    %v697 = vpack.c.b16 %v481, %v477
    %v698 = vpack.c.b16 %v482, %v478
    %v699 = vpack.c.b16 %v483, %v479
    %v700 = vpack.c.b16 %v488, %v484
    %v701 = vpack.c.b16 %v489, %v485
    %v702 = vpack.c.b16 %v490, %v486
    %v703 = vpack.c.b16 %v491, %v487
    %v704 = vpack.c.b16 %v496, %v492
    %v705 = vpack.c.b16 %v497, %v493
    %v706 = vpack.c.b16 %v498, %v494
    %v707 = vpack.c.b16 %v499, %v495
    %v708 = vpack.c.b16 %v504, %v500
    %v709 = vpack.c.b16 %v505, %v501
    %v710 = vpack.c.b16 %v506, %v502
    %v711 = vpack.c.b16 %v507, %v503
    %v712 = vpack.c.b16 %v512, %v508
    %v713 = vpack.c.b16 %v513, %v509
    %v714 = vpack.c.b16 %v514, %v510
    %v715 = vpack.c.b16 %v515, %v511
    %v716 = vpack.c.b16 %v520, %v516
    %v717 = vpack.c.b16 %v521, %v517
    %v718 = vpack.c.b16 %v522, %v518
    %v719 = vpack.c.b16 %v523, %v519
    %v720 = vpack.c.b16 %v528, %v524
    %v721 = vpack.c.b16 %v529, %v525
    %v722 = vpack.c.b16 %v530, %v526
    %v723 = vpack.c.b16 %v531, %v527
    %v724 = vpack.c.b16 %v536, %v532
    %v725 = vpack.c.b16 %v537, %v533
    %v726 = vpack.c.b16 %v538, %v534
    %v727 = vpack.c.b16 %v539, %v535
    %v728 = vpack.c.b16 %v544, %v540
    %v729 = vpack.c.b16 %v545, %v541
    %v730 = vpack.c.b16 %v546, %v542
    %v731 = vpack.c.b16 %v547, %v543
    %v732 = vpack.c.b16 %v552, %v548
    %v733 = vpack.c.b16 %v553, %v549
    %v734 = vpack.c.b16 %v554, %v550
    %v735 = vpack.c.b16 %v555, %v551
    %v736 = vpack.c.b16 %v560, %v556
    %v737 = vpack.c.b16 %v561, %v557
    %v738 = vpack.c.b16 %v562, %v558
    %v739 = vpack.c.b16 %v563, %v559
    %v740 = vpack.c.b16 %v568, %v564
    %v741 = vpack.c.b16 %v569, %v565
    %v742 = vpack.c.b16 %v570, %v566
    %v743 = vpack.c.b16 %v571, %v567
    %v744 = vpack.c.b16 %v576, %v572
    %v745 = vpack.c.b16 %v577, %v573
    %v746 = vpack.c.b16 %v578, %v574
    %v747 = vpack.c.b16 %v579, %v575
    %v748 = vpack.c.b16 %v584, %v580
    %v749 = vpack.c.b16 %v585, %v581
    %v750 = vpack.c.b16 %v586, %v582
    %v751 = vpack.c.b16 %v587, %v583
    %v752 = vpack.c.b16 %v592, %v588
    %v753 = vpack.c.b16 %v593, %v589
    %v754 = vpack.c.b16 %v594, %v590
    %v755 = vpack.c.b16 %v595, %v591
    %v756 = vpack.c.b16 %v600, %v596
    %v757 = vpack.c.b16 %v601, %v597
    %v758 = vpack.c.b16 %v602, %v598
    %v759 = vpack.c.b16 %v603, %v599
    %v760 = vpack.c.b16 %v608, %v604
    %v761 = vpack.c.b16 %v609, %v605
    %v762 = vpack.c.b16 %v610, %v606
    %v763 = vpack.c.b16 %v611, %v607
    %v764 = vpack.c.b16 %v616, %v612
    %v765 = vpack.c.b16 %v617, %v613
    %v766 = vpack.c.b16 %v618, %v614
    %v767 = vpack.c.b16 %v619, %v615
    %v768 = vpack.c.b16 %v624, %v620
    %v769 = vpack.c.b16 %v625, %v621
    %v770 = vpack.c.b16 %v626, %v622
    %v771 = vpack.c.b16 %v627, %v623
    %v772 = vpack.c.b16 %v632, %v628
    %v773 = vpack.c.b16 %v633, %v629
    %v774 = vpack.c.b16 %v634, %v630
    %v775 = vpack.c.b16 %v635, %v631
    %v776 = vpack.c.b16 %v640, %v636
    %v777 = vpack.c.b16 %v641, %v637
    %v778 = vpack.c.b16 %v642, %v638
    %v779 = vpack.c.b16 %v643, %v639
    %v780 = vpack.c.b16 %v648, %v644
    %v781 = vpack.c.b16 %v649, %v645
    %v782 = vpack.c.b16 %v650, %v646
    %v783 = vpack.c.b16 %v651, %v647
    %v784 = vpack.c.b16 %v656, %v652
    %v785 = vpack.c.b16 %v657, %v653
    %v786 = vpack.c.b16 %v658, %v654
    %v787 = vpack.c.b16 %v659, %v655
    %916 = vmatprep.subr.bf16.mxu0 %v661
    %917 = vmatpush1.bf16.msra.mxu0 %v660
    %918 = vmatprep.subr.bf16.mxu0 %v665
    %919 = vmatpush1.bf16.msra.mxu0 %v664
    %920 = vmatprep.subr.bf16.mxu0 %v669
    %921 = vmatpush1.bf16.msra.mxu0 %v668
    %922 = vmatprep.subr.bf16.mxu0 %v673
    %923 = vmatpush1.bf16.msra.mxu0 %v672
    %924 = vmatprep.subr.bf16.mxu0 %v677
    %925 = vmatpush1.bf16.msra.mxu0 %v676
    %926 = vmatprep.subr.bf16.mxu0 %v681
    %927 = vmatpush1.bf16.msra.mxu0 %v680
    %928 = vmatprep.subr.bf16.mxu0 %v685
    %929 = vmatpush1.bf16.msra.mxu0 %v684
    %930 = vmatprep.subr.bf16.mxu0 %v689
    %931 = vmatpush1.bf16.msra.mxu0 %v688
    %932 = vmatprep.subr.bf16.mxu0 %v693
    %933 = vmatpush1.bf16.msra.mxu0 %v692
    %934 = vmatprep.subr.bf16.mxu0 %v697
    %935 = vmatpush1.bf16.msra.mxu0 %v696
    %936 = vmatprep.subr.bf16.mxu0 %v701
    %937 = vmatpush1.bf16.msra.mxu0 %v700
    %938 = vmatprep.subr.bf16.mxu0 %v705
    %939 = vmatpush1.bf16.msra.mxu0 %v704
    %940 = vmatprep.subr.bf16.mxu0 %v709
    %941 = vmatpush1.bf16.msra.mxu0 %v708
    %942 = vmatprep.subr.bf16.mxu0 %v713
    %943 = vmatpush1.bf16.msra.mxu0 %v712
    %944 = vmatprep.subr.bf16.mxu0 %v717
    %945 = vmatpush1.bf16.msra.mxu0 %v716
    %946 = vmatprep.subr.bf16.mxu0 %v721
    %947 = vmatpush1.bf16.msra.mxu0 %v720
    %948 = vmatprep.mubr.bf16.mxu0 %v123
    %949 = vmatmul.mubr.bf16.gmra.mrb[0].mxu0 %v122
    %v950 = vpop.f32.mrb[0].mxu0
    %v951 = vadd.f32 %v259, %v950
    %v952 = vpop.f32.mrb[0].mxu0
    %v953 = vadd.f32 %v263, %v952
    %v954 = vpop.f32.mrb[0].mxu0
    %v955 = vpop.f32.mrb[0].mxu0
    %956 = vdwg.mxu0
    %957 = vmatprep.subr.bf16.mxu0 %v725
    %958 = vmatpush1.bf16.msra.mxu0 %v724
    %959 = vmatprep.subr.bf16.mxu0 %v729
    %960 = vmatpush1.bf16.msra.mxu0 %v728
    %961 = vmatprep.subr.bf16.mxu0 %v733
    %962 = vmatpush1.bf16.msra.mxu0 %v732
    %963 = vmatprep.subr.bf16.mxu0 %v737
    %964 = vmatpush1.bf16.msra.mxu0 %v736
    %965 = vmatprep.subr.bf16.mxu0 %v741
    %966 = vmatpush1.bf16.msra.mxu0 %v740
    %967 = vmatprep.subr.bf16.mxu0 %v745
    %968 = vmatpush1.bf16.msra.mxu0 %v744
    %969 = vmatprep.subr.bf16.mxu0 %v749
    %970 = vmatpush1.bf16.msra.mxu0 %v748
    %971 = vmatprep.subr.bf16.mxu0 %v753
    %972 = vmatpush1.bf16.msra.mxu0 %v752
    %973 = vmatprep.subr.bf16.mxu0 %v757
    %974 = vmatpush1.bf16.msra.mxu0 %v756
    %975 = vmatprep.subr.bf16.mxu0 %v761
    %976 = vmatpush1.bf16.msra.mxu0 %v760
    %977 = vmatprep.subr.bf16.mxu0 %v765
    %978 = vmatpush1.bf16.msra.mxu0 %v764
    %979 = vmatprep.subr.bf16.mxu0 %v769
    %980 = vmatpush1.bf16.msra.mxu0 %v768
    %981 = vmatprep.subr.bf16.mxu0 %v773
    %982 = vmatpush1.bf16.msra.mxu0 %v772
    %983 = vmatprep.subr.bf16.mxu0 %v777
    %984 = vmatpush1.bf16.msra.mxu0 %v776
    %985 = vmatprep.subr.bf16.mxu0 %v781
    %986 = vmatpush1.bf16.msra.mxu0 %v780
    %987 = vmatprep.subr.bf16.mxu0 %v785
    %988 = vmatpush1.bf16.msra.mxu0 %v784
    %989 = vmatprep.mubr.bf16.mxu0 %v125
    %990 = vmatmul.mubr.bf16.gmra.mrb[0].mxu0 %v124
    %v991 = vpop.f32.mrb[0].mxu0
    %v992 = vadd.f32 %v951, %v991
    %v993 = vpop.f32.mrb[0].mxu0
    %v994 = vadd.f32 %v953, %v993
    %v995 = vpop.f32.mrb[0].mxu0
    %v996 = vpop.f32.mrb[0].mxu0
    %997 = vdwg.mxu0
    %998 = vmatprep.subr.bf16.mxu0 %v663
    %999 = vmatpush1.bf16.msra.mxu0 %v662
    %1000 = vmatprep.subr.bf16.mxu0 %v667
    %1001 = vmatpush1.bf16.msra.mxu0 %v666
    %1002 = vmatprep.subr.bf16.mxu0 %v671
    %1003 = vmatpush1.bf16.msra.mxu0 %v670
    %1004 = vmatprep.subr.bf16.mxu0 %v675
    %1005 = vmatpush1.bf16.msra.mxu0 %v674
    %1006 = vmatprep.subr.bf16.mxu0 %v679
    %1007 = vmatpush1.bf16.msra.mxu0 %v678
    %1008 = vmatprep.subr.bf16.mxu0 %v683
    %1009 = vmatpush1.bf16.msra.mxu0 %v682
    %1010 = vmatprep.subr.bf16.mxu0 %v687
    %1011 = vmatpush1.bf16.msra.mxu0 %v686
    %1012 = vmatprep.subr.bf16.mxu0 %v691
    %1013 = vmatpush1.bf16.msra.mxu0 %v690
    %1014 = vmatprep.subr.bf16.mxu0 %v695
    %1015 = vmatpush1.bf16.msra.mxu0 %v694
    %1016 = vmatprep.subr.bf16.mxu0 %v699
    %1017 = vmatpush1.bf16.msra.mxu0 %v698
    %1018 = vmatprep.subr.bf16.mxu0 %v703
    %1019 = vmatpush1.bf16.msra.mxu0 %v702
    %1020 = vmatprep.subr.bf16.mxu0 %v707
    %1021 = vmatpush1.bf16.msra.mxu0 %v706
    %1022 = vmatprep.subr.bf16.mxu0 %v711
    %1023 = vmatpush1.bf16.msra.mxu0 %v710
    %1024 = vmatprep.subr.bf16.mxu0 %v715
    %1025 = vmatpush1.bf16.msra.mxu0 %v714
    %1026 = vmatprep.subr.bf16.mxu0 %v719
    %1027 = vmatpush1.bf16.msra.mxu0 %v718
    %1028 = vmatprep.subr.bf16.mxu0 %v723
    %1029 = vmatpush1.bf16.msra.mxu0 %v722
    %1030 = vmatprep.mubr.bf16.mxu0 %v123
    %1031 = vmatmul.mubr.bf16.gmra.mrb[0].mxu0 %v122
    %v1032 = vpop.f32.mrb[0].mxu0
    %v1033 = vadd.f32 %v267, %v1032
    %v1034 = vpop.f32.mrb[0].mxu0
    %v1035 = vadd.f32 %v271, %v1034
    %v1036 = vpop.f32.mrb[0].mxu0
    %v1037 = vpop.f32.mrb[0].mxu0
    %1038 = vdwg.mxu0
    %1039 = vmatprep.subr.bf16.mxu0 %v727
    %1040 = vmatpush1.bf16.msra.mxu0 %v726
    %1041 = vmatprep.subr.bf16.mxu0 %v731
    %1042 = vmatpush1.bf16.msra.mxu0 %v730
    %1043 = vmatprep.subr.bf16.mxu0 %v735
    %1044 = vmatpush1.bf16.msra.mxu0 %v734
    %1045 = vmatprep.subr.bf16.mxu0 %v739
    %1046 = vmatpush1.bf16.msra.mxu0 %v738
    %1047 = vmatprep.subr.bf16.mxu0 %v743
    %1048 = vmatpush1.bf16.msra.mxu0 %v742
    %1049 = vmatprep.subr.bf16.mxu0 %v747
    %1050 = vmatpush1.bf16.msra.mxu0 %v746
    %1051 = vmatprep.subr.bf16.mxu0 %v751
    %1052 = vmatpush1.bf16.msra.mxu0 %v750
    %1053 = vmatprep.subr.bf16.mxu0 %v755
    %1054 = vmatpush1.bf16.msra.mxu0 %v754
    %1055 = vmatprep.subr.bf16.mxu0 %v759
    %1056 = vmatpush1.bf16.msra.mxu0 %v758
    %1057 = vmatprep.subr.bf16.mxu0 %v763
    %1058 = vmatpush1.bf16.msra.mxu0 %v762
    %1059 = vmatprep.subr.bf16.mxu0 %v767
    %1060 = vmatpush1.bf16.msra.mxu0 %v766
    %1061 = vmatprep.subr.bf16.mxu0 %v771
    %1062 = vmatpush1.bf16.msra.mxu0 %v770
    %1063 = vmatprep.subr.bf16.mxu0 %v775
    %1064 = vmatpush1.bf16.msra.mxu0 %v774
    %1065 = vmatprep.subr.bf16.mxu0 %v779
    %1066 = vmatpush1.bf16.msra.mxu0 %v778
    %1067 = vmatprep.subr.bf16.mxu0 %v783
    %1068 = vmatpush1.bf16.msra.mxu0 %v782
    %1069 = vmatprep.subr.bf16.mxu0 %v787
    %1070 = vmatpush1.bf16.msra.mxu0 %v786
    %1071 = vmatprep.mubr.bf16.mxu0 %v125
    %1072 = vmatmul.mubr.bf16.gmra.mrb[0].mxu0 %v124
    %v1073 = vpop.f32.mrb[0].mxu0
    %v1074 = vadd.f32 %v1033, %v1073
    %v1075 = vpop.f32.mrb[0].mxu0
    %v1076 = vadd.f32 %v1035, %v1075
    %v1077 = vpop.f32.mrb[0].mxu0
    %v1078 = vpop.f32.mrb[0].mxu0
    %1079 = vdwg.mxu0
    %v1080 = vld [vmem:[#allocation8] sm:$0xff]
    %v1081 = vld [vmem:[#allocation8 + $0x8] sm:$0xff]
    %v1082 = vld [vmem:[#allocation8 + $0x10] sm:$0xff]
    %v1083 = vld [vmem:[#allocation8 + $0x18] sm:$0xff]
    %v1084 = vld [vmem:[#allocation8 + $0x20] sm:$0xff]
    %v1085 = vld [vmem:[#allocation8 + $0x28] sm:$0xff]
    %v1086 = vld [vmem:[#allocation8 + $0x30] sm:$0xff]
    %v1087 = vld [vmem:[#allocation8 + $0x38] sm:$0xff]
    %v1088 = vld [vmem:[#allocation8 + $0x40] sm:$0xff]
    %v1089 = vld [vmem:[#allocation8 + $0x48] sm:$0xff]
    %v1090 = vld [vmem:[#allocation8 + $0x50] sm:$0xff]
    %v1091 = vld [vmem:[#allocation8 + $0x58] sm:$0xff]
    %v1092 = vld [vmem:[#allocation8 + $0x60] sm:$0xff]
    %v1093 = vld [vmem:[#allocation8 + $0x68] sm:$0xff]
    %v1094 = vld [vmem:[#allocation8 + $0x70] sm:$0xff]
    %v1095 = vld [vmem:[#allocation8 + $0x78] sm:$0xff]
    %v1096 = vld [vmem:[#allocation8 + $0x80] sm:$0xff]
    %v1097 = vld [vmem:[#allocation8 + $0x88] sm:$0xff]
    %v1098 = vld [vmem:[#allocation8 + $0x90] sm:$0xff]
    %v1099 = vld [vmem:[#allocation8 + $0x98] sm:$0xff]
    %v1100 = vld [vmem:[#allocation8 + $0xa0] sm:$0xff]
    %v1101 = vld [vmem:[#allocation8 + $0xa8] sm:$0xff]
    %v1102 = vld [vmem:[#allocation8 + $0xb0] sm:$0xff]
    %v1103 = vld [vmem:[#allocation8 + $0xb8] sm:$0xff]
    %v1104 = vld [vmem:[#allocation8 + $0xc0] sm:$0xff]
    %v1105 = vld [vmem:[#allocation8 + $0xc8] sm:$0xff]
    %v1106 = vld [vmem:[#allocation8 + $0xd0] sm:$0xff]
    %v1107 = vld [vmem:[#allocation8 + $0xd8] sm:$0xff]
    %v1108 = vld [vmem:[#allocation8 + $0xe0] sm:$0xff]
    %v1109 = vld [vmem:[#allocation8 + $0xe8] sm:$0xff]
    %v1110 = vld [vmem:[#allocation8 + $0xf0] sm:$0xff]
    %v1111 = vld [vmem:[#allocation8 + $0xf8] sm:$0xff]
    %v1112 = vld [vmem:[#allocation8 + $0x100] sm:$0xff]
    %v1113 = vld [vmem:[#allocation8 + $0x108] sm:$0xff]
    %v1114 = vld [vmem:[#allocation8 + $0x110] sm:$0xff]
    %v1115 = vld [vmem:[#allocation8 + $0x118] sm:$0xff]
    %v1116 = vld [vmem:[#allocation8 + $0x120] sm:$0xff]
    %v1117 = vld [vmem:[#allocation8 + $0x128] sm:$0xff]
    %v1118 = vld [vmem:[#allocation8 + $0x130] sm:$0xff]
    %v1119 = vld [vmem:[#allocation8 + $0x138] sm:$0xff]
    %v1120 = vld [vmem:[#allocation8 + $0x140] sm:$0xff]
    %v1121 = vld [vmem:[#allocation8 + $0x148] sm:$0xff]
    %v1122 = vld [vmem:[#allocation8 + $0x150] sm:$0xff]
    %v1123 = vld [vmem:[#allocation8 + $0x158] sm:$0xff]
    %v1124 = vld [vmem:[#allocation8 + $0x160] sm:$0xff]
    %v1125 = vld [vmem:[#allocation8 + $0x168] sm:$0xff]
    %v1126 = vld [vmem:[#allocation8 + $0x170] sm:$0xff]
    %v1127 = vld [vmem:[#allocation8 + $0x178] sm:$0xff]
    %v1128 = vld [vmem:[#allocation8 + $0x180] sm:$0xff]
    %v1129 = vld [vmem:[#allocation8 + $0x188] sm:$0xff]
    %v1130 = vld [vmem:[#allocation8 + $0x190] sm:$0xff]
    %v1131 = vld [vmem:[#allocation8 + $0x198] sm:$0xff]
    %v1132 = vld [vmem:[#allocation8 + $0x1a0] sm:$0xff]
    %v1133 = vld [vmem:[#allocation8 + $0x1a8] sm:$0xff]
    %v1134 = vld [vmem:[#allocation8 + $0x1b0] sm:$0xff]
    %v1135 = vld [vmem:[#allocation8 + $0x1b8] sm:$0xff]
    %v1136 = vld [vmem:[#allocation8 + $0x1c0] sm:$0xff]
    %v1137 = vld [vmem:[#allocation8 + $0x1c8] sm:$0xff]
    %v1138 = vld [vmem:[#allocation8 + $0x1d0] sm:$0xff]
    %v1139 = vld [vmem:[#allocation8 + $0x1d8] sm:$0xff]
    %v1140 = vld [vmem:[#allocation8 + $0x1e0] sm:$0xff]
    %v1141 = vld [vmem:[#allocation8 + $0x1e8] sm:$0xff]
    %v1142 = vld [vmem:[#allocation8 + $0x1f0] sm:$0xff]
    %v1143 = vld [vmem:[#allocation8 + $0x1f8] sm:$0xff]
    %v1144 = vld [vmem:[#allocation8 + $0x200] sm:$0xff]
    %v1145 = vld [vmem:[#allocation8 + $0x208] sm:$0xff]
    %v1146 = vld [vmem:[#allocation8 + $0x210] sm:$0xff]
    %v1147 = vld [vmem:[#allocation8 + $0x218] sm:$0xff]
    %v1148 = vld [vmem:[#allocation8 + $0x220] sm:$0xff]
    %v1149 = vld [vmem:[#allocation8 + $0x228] sm:$0xff]
    %v1150 = vld [vmem:[#allocation8 + $0x230] sm:$0xff]
    %v1151 = vld [vmem:[#allocation8 + $0x238] sm:$0xff]
    %v1152 = vld [vmem:[#allocation8 + $0x240] sm:$0xff]
    %v1153 = vld [vmem:[#allocation8 + $0x248] sm:$0xff]
    %v1154 = vld [vmem:[#allocation8 + $0x250] sm:$0xff]
    %v1155 = vld [vmem:[#allocation8 + $0x258] sm:$0xff]
    %v1156 = vld [vmem:[#allocation8 + $0x260] sm:$0xff]
    %v1157 = vld [vmem:[#allocation8 + $0x268] sm:$0xff]
    %v1158 = vld [vmem:[#allocation8 + $0x270] sm:$0xff]
    %v1159 = vld [vmem:[#allocation8 + $0x278] sm:$0xff]
    %v1160 = vld [vmem:[#allocation8 + $0x280] sm:$0xff]
    %v1161 = vld [vmem:[#allocation8 + $0x288] sm:$0xff]
    %v1162 = vld [vmem:[#allocation8 + $0x290] sm:$0xff]
    %v1163 = vld [vmem:[#allocation8 + $0x298] sm:$0xff]
    %v1164 = vld [vmem:[#allocation8 + $0x2a0] sm:$0xff]
    %v1165 = vld [vmem:[#allocation8 + $0x2a8] sm:$0xff]
    %v1166 = vld [vmem:[#allocation8 + $0x2b0] sm:$0xff]
    %v1167 = vld [vmem:[#allocation8 + $0x2b8] sm:$0xff]
    %v1168 = vld [vmem:[#allocation8 + $0x2c0] sm:$0xff]
    %v1169 = vld [vmem:[#allocation8 + $0x2c8] sm:$0xff]
    %v1170 = vld [vmem:[#allocation8 + $0x2d0] sm:$0xff]
    %v1171 = vld [vmem:[#allocation8 + $0x2d8] sm:$0xff]
    %v1172 = vld [vmem:[#allocation8 + $0x2e0] sm:$0xff]
    %v1173 = vld [vmem:[#allocation8 + $0x2e8] sm:$0xff]
    %v1174 = vld [vmem:[#allocation8 + $0x2f0] sm:$0xff]
    %v1175 = vld [vmem:[#allocation8 + $0x2f8] sm:$0xff]
    %v1176 = vld [vmem:[#allocation8 + $0x300] sm:$0xff]
    %v1177 = vld [vmem:[#allocation8 + $0x308] sm:$0xff]
    %v1178 = vld [vmem:[#allocation8 + $0x310] sm:$0xff]
    %v1179 = vld [vmem:[#allocation8 + $0x318] sm:$0xff]
    %v1180 = vld [vmem:[#allocation8 + $0x320] sm:$0xff]
    %v1181 = vld [vmem:[#allocation8 + $0x328] sm:$0xff]
    %v1182 = vld [vmem:[#allocation8 + $0x330] sm:$0xff]
    %v1183 = vld [vmem:[#allocation8 + $0x338] sm:$0xff]
    %v1184 = vld [vmem:[#allocation8 + $0x340] sm:$0xff]
    %v1185 = vld [vmem:[#allocation8 + $0x348] sm:$0xff]
    %v1186 = vld [vmem:[#allocation8 + $0x350] sm:$0xff]
    %v1187 = vld [vmem:[#allocation8 + $0x358] sm:$0xff]
    %v1188 = vld [vmem:[#allocation8 + $0x360] sm:$0xff]
    %v1189 = vld [vmem:[#allocation8 + $0x368] sm:$0xff]
    %v1190 = vld [vmem:[#allocation8 + $0x370] sm:$0xff]
    %v1191 = vld [vmem:[#allocation8 + $0x378] sm:$0xff]
    %v1192 = vld [vmem:[#allocation8 + $0x380] sm:$0xff]
    %v1193 = vld [vmem:[#allocation8 + $0x388] sm:$0xff]
    %v1194 = vld [vmem:[#allocation8 + $0x390] sm:$0xff]
    %v1195 = vld [vmem:[#allocation8 + $0x398] sm:$0xff]
    %v1196 = vld [vmem:[#allocation8 + $0x3a0] sm:$0xff]
    %v1197 = vld [vmem:[#allocation8 + $0x3a8] sm:$0xff]
    %v1198 = vld [vmem:[#allocation8 + $0x3b0] sm:$0xff]
    %v1199 = vld [vmem:[#allocation8 + $0x3b8] sm:$0xff]
    %v1200 = vld [vmem:[#allocation8 + $0x3c0] sm:$0xff]
    %v1201 = vld [vmem:[#allocation8 + $0x3c8] sm:$0xff]
    %v1202 = vld [vmem:[#allocation8 + $0x3d0] sm:$0xff]
    %v1203 = vld [vmem:[#allocation8 + $0x3d8] sm:$0xff]
    %v1204 = vld [vmem:[#allocation8 + $0x3e0] sm:$0xff]
    %v1205 = vld [vmem:[#allocation8 + $0x3e8] sm:$0xff]
    %v1206 = vld [vmem:[#allocation8 + $0x3f0] sm:$0xff]
    %v1207 = vld [vmem:[#allocation8 + $0x3f8] sm:$0xff]
    %v1208 = vld [vmem:[#allocation8 + $0x400] sm:$0xff]
    %v1209 = vld [vmem:[#allocation8 + $0x408] sm:$0xff]
    %v1210 = vld [vmem:[#allocation8 + $0x410] sm:$0xff]
    %v1211 = vld [vmem:[#allocation8 + $0x418] sm:$0xff]
    %v1212 = vld [vmem:[#allocation8 + $0x420] sm:$0xff]
    %v1213 = vld [vmem:[#allocation8 + $0x428] sm:$0xff]
    %v1214 = vld [vmem:[#allocation8 + $0x430] sm:$0xff]
    %v1215 = vld [vmem:[#allocation8 + $0x438] sm:$0xff]
    %v1216 = vld [vmem:[#allocation8 + $0x440] sm:$0xff]
    %v1217 = vld [vmem:[#allocation8 + $0x448] sm:$0xff]
    %v1218 = vld [vmem:[#allocation8 + $0x450] sm:$0xff]
    %v1219 = vld [vmem:[#allocation8 + $0x458] sm:$0xff]
    %v1220 = vld [vmem:[#allocation8 + $0x460] sm:$0xff]
    %v1221 = vld [vmem:[#allocation8 + $0x468] sm:$0xff]
    %v1222 = vld [vmem:[#allocation8 + $0x470] sm:$0xff]
    %v1223 = vld [vmem:[#allocation8 + $0x478] sm:$0xff]
    %v1224 = vld [vmem:[#allocation8 + $0x480] sm:$0xff]
    %v1225 = vld [vmem:[#allocation8 + $0x488] sm:$0xff]
    %v1226 = vld [vmem:[#allocation8 + $0x490] sm:$0xff]
    %v1227 = vld [vmem:[#allocation8 + $0x498] sm:$0xff]
    %v1228 = vld [vmem:[#allocation8 + $0x4a0] sm:$0xff]
    %v1229 = vld [vmem:[#allocation8 + $0x4a8] sm:$0xff]
    %v1230 = vld [vmem:[#allocation8 + $0x4b0] sm:$0xff]
    %v1231 = vld [vmem:[#allocation8 + $0x4b8] sm:$0xff]
    %v1232 = vld [vmem:[#allocation8 + $0x4c0] sm:$0xff]
    %v1233 = vld [vmem:[#allocation8 + $0x4c8] sm:$0xff]
    %v1234 = vld [vmem:[#allocation8 + $0x4d0] sm:$0xff]
    %v1235 = vld [vmem:[#allocation8 + $0x4d8] sm:$0xff]
    %v1236 = vld [vmem:[#allocation8 + $0x4e0] sm:$0xff]
    %v1237 = vld [vmem:[#allocation8 + $0x4e8] sm:$0xff]
    %v1238 = vld [vmem:[#allocation8 + $0x4f0] sm:$0xff]
    %v1239 = vld [vmem:[#allocation8 + $0x4f8] sm:$0xff]
    %v1240 = vld [vmem:[#allocation8 + $0x500] sm:$0xff]
    %v1241 = vld [vmem:[#allocation8 + $0x508] sm:$0xff]
    %v1242 = vld [vmem:[#allocation8 + $0x510] sm:$0xff]
    %v1243 = vld [vmem:[#allocation8 + $0x518] sm:$0xff]
    %v1244 = vld [vmem:[#allocation8 + $0x520] sm:$0xff]
    %v1245 = vld [vmem:[#allocation8 + $0x528] sm:$0xff]
    %v1246 = vld [vmem:[#allocation8 + $0x530] sm:$0xff]
    %v1247 = vld [vmem:[#allocation8 + $0x538] sm:$0xff]
    %v1248 = vld [vmem:[#allocation8 + $0x540] sm:$0xff]
    %v1249 = vld [vmem:[#allocation8 + $0x548] sm:$0xff]
    %v1250 = vld [vmem:[#allocation8 + $0x550] sm:$0xff]
    %v1251 = vld [vmem:[#allocation8 + $0x558] sm:$0xff]
    %v1252 = vld [vmem:[#allocation8 + $0x560] sm:$0xff]
    %v1253 = vld [vmem:[#allocation8 + $0x568] sm:$0xff]
    %v1254 = vld [vmem:[#allocation8 + $0x570] sm:$0xff]
    %v1255 = vld [vmem:[#allocation8 + $0x578] sm:$0xff]
    %v1256 = vld [vmem:[#allocation8 + $0x580] sm:$0xff]
    %v1257 = vld [vmem:[#allocation8 + $0x588] sm:$0xff]
    %v1258 = vld [vmem:[#allocation8 + $0x590] sm:$0xff]
    %v1259 = vld [vmem:[#allocation8 + $0x598] sm:$0xff]
    %v1260 = vld [vmem:[#allocation8 + $0x5a0] sm:$0xff]
    %v1261 = vld [vmem:[#allocation8 + $0x5a8] sm:$0xff]
    %v1262 = vld [vmem:[#allocation8 + $0x5b0] sm:$0xff]
    %v1263 = vld [vmem:[#allocation8 + $0x5b8] sm:$0xff]
    %v1264 = vld [vmem:[#allocation8 + $0x5c0] sm:$0xff]
    %v1265 = vld [vmem:[#allocation8 + $0x5c8] sm:$0xff]
    %v1266 = vld [vmem:[#allocation8 + $0x5d0] sm:$0xff]
    %v1267 = vld [vmem:[#allocation8 + $0x5d8] sm:$0xff]
    %v1268 = vld [vmem:[#allocation8 + $0x5e0] sm:$0xff]
    %v1269 = vld [vmem:[#allocation8 + $0x5e8] sm:$0xff]
    %v1270 = vld [vmem:[#allocation8 + $0x5f0] sm:$0xff]
    %v1271 = vld [vmem:[#allocation8 + $0x5f8] sm:$0xff]
    %v1272 = vld [vmem:[#allocation8 + $0x600] sm:$0xff]
    %v1273 = vld [vmem:[#allocation8 + $0x608] sm:$0xff]
    %v1274 = vld [vmem:[#allocation8 + $0x610] sm:$0xff]
    %v1275 = vld [vmem:[#allocation8 + $0x618] sm:$0xff]
    %v1276 = vld [vmem:[#allocation8 + $0x620] sm:$0xff]
    %v1277 = vld [vmem:[#allocation8 + $0x628] sm:$0xff]
    %v1278 = vld [vmem:[#allocation8 + $0x630] sm:$0xff]
    %v1279 = vld [vmem:[#allocation8 + $0x638] sm:$0xff]
    %v1280 = vld [vmem:[#allocation8 + $0x640] sm:$0xff]
    %v1281 = vld [vmem:[#allocation8 + $0x648] sm:$0xff]
    %v1282 = vld [vmem:[#allocation8 + $0x650] sm:$0xff]
    %v1283 = vld [vmem:[#allocation8 + $0x658] sm:$0xff]
    %v1284 = vld [vmem:[#allocation8 + $0x660] sm:$0xff]
    %v1285 = vld [vmem:[#allocation8 + $0x668] sm:$0xff]
    %v1286 = vld [vmem:[#allocation8 + $0x670] sm:$0xff]
    %v1287 = vld [vmem:[#allocation8 + $0x678] sm:$0xff]
    %v1288 = vld [vmem:[#allocation8 + $0x680] sm:$0xff]
    %v1289 = vld [vmem:[#allocation8 + $0x688] sm:$0xff]
    %v1290 = vld [vmem:[#allocation8 + $0x690] sm:$0xff]
    %v1291 = vld [vmem:[#allocation8 + $0x698] sm:$0xff]
    %v1292 = vld [vmem:[#allocation8 + $0x6a0] sm:$0xff]
    %v1293 = vld [vmem:[#allocation8 + $0x6a8] sm:$0xff]
    %v1294 = vld [vmem:[#allocation8 + $0x6b0] sm:$0xff]
    %v1295 = vld [vmem:[#allocation8 + $0x6b8] sm:$0xff]
    %v1296 = vld [vmem:[#allocation8 + $0x6c0] sm:$0xff]
    %v1297 = vld [vmem:[#allocation8 + $0x6c8] sm:$0xff]
    %v1298 = vld [vmem:[#allocation8 + $0x6d0] sm:$0xff]
    %v1299 = vld [vmem:[#allocation8 + $0x6d8] sm:$0xff]
    %v1300 = vld [vmem:[#allocation8 + $0x6e0] sm:$0xff]
    %v1301 = vld [vmem:[#allocation8 + $0x6e8] sm:$0xff]
    %v1302 = vld [vmem:[#allocation8 + $0x6f0] sm:$0xff]
    %v1303 = vld [vmem:[#allocation8 + $0x6f8] sm:$0xff]
    %v1304 = vld [vmem:[#allocation8 + $0x700] sm:$0xff]
    %v1305 = vld [vmem:[#allocation8 + $0x708] sm:$0xff]
    %v1306 = vld [vmem:[#allocation8 + $0x710] sm:$0xff]
    %v1307 = vld [vmem:[#allocation8 + $0x718] sm:$0xff]
    %v1308 = vld [vmem:[#allocation8 + $0x720] sm:$0xff]
    %v1309 = vld [vmem:[#allocation8 + $0x728] sm:$0xff]
    %v1310 = vld [vmem:[#allocation8 + $0x730] sm:$0xff]
    %v1311 = vld [vmem:[#allocation8 + $0x738] sm:$0xff]
    %v1312 = vld [vmem:[#allocation8 + $0x740] sm:$0xff]
    %v1313 = vld [vmem:[#allocation8 + $0x748] sm:$0xff]
    %v1314 = vld [vmem:[#allocation8 + $0x750] sm:$0xff]
    %v1315 = vld [vmem:[#allocation8 + $0x758] sm:$0xff]
    %v1316 = vld [vmem:[#allocation8 + $0x760] sm:$0xff]
    %v1317 = vld [vmem:[#allocation8 + $0x768] sm:$0xff]
    %v1318 = vld [vmem:[#allocation8 + $0x770] sm:$0xff]
    %v1319 = vld [vmem:[#allocation8 + $0x778] sm:$0xff]
    %v1320 = vld [vmem:[#allocation8 + $0x780] sm:$0xff]
    %v1321 = vld [vmem:[#allocation8 + $0x788] sm:$0xff]
    %v1322 = vld [vmem:[#allocation8 + $0x790] sm:$0xff]
    %v1323 = vld [vmem:[#allocation8 + $0x798] sm:$0xff]
    %v1324 = vld [vmem:[#allocation8 + $0x7a0] sm:$0xff]
    %v1325 = vld [vmem:[#allocation8 + $0x7a8] sm:$0xff]
    %v1326 = vld [vmem:[#allocation8 + $0x7b0] sm:$0xff]
    %v1327 = vld [vmem:[#allocation8 + $0x7b8] sm:$0xff]
    %v1328 = vld [vmem:[#allocation8 + $0x7c0] sm:$0xff]
    %v1329 = vld [vmem:[#allocation8 + $0x7c8] sm:$0xff]
    %v1330 = vld [vmem:[#allocation8 + $0x7d0] sm:$0xff]
    %v1331 = vld [vmem:[#allocation8 + $0x7d8] sm:$0xff]
    %v1332 = vld [vmem:[#allocation8 + $0x7e0] sm:$0xff]
    %v1333 = vld [vmem:[#allocation8 + $0x7e8] sm:$0xff]
    %v1334 = vld [vmem:[#allocation8 + $0x7f0] sm:$0xff]
    %v1335 = vld [vmem:[#allocation8 + $0x7f8] sm:$0xff]
    %v1336 = vld [vmem:[%s5] sm:$0xff]
    %v1338 = vlaneseq
    %v1339 = vshrl.u32 %v1338, 7
    %v1340 = vsub.s32 0, %v1339
    %v1341 = vrot.slane %v1336, %v1340
    %v1342 = vlaneseq
    %v1343 = vshrl.u32 %v1342, 7
    %v1344 = vsub.s32 1, %v1343
    %v1345 = vrot.slane %v1336, %v1344
    %v1346 = vlaneseq
    %v1347 = vshrl.u32 %v1346, 7
    %v1348 = vsub.s32 2, %v1347
    %v1349 = vrot.slane %v1336, %v1348
    %v1350 = vlaneseq
    %v1351 = vshrl.u32 %v1350, 7
    %v1352 = vsub.s32 3, %v1351
    %v1353 = vrot.slane %v1336, %v1352
    %v1354 = vlaneseq
    %v1355 = vshrl.u32 %v1354, 7
    %v1356 = vsub.s32 4, %v1355
    %v1357 = vrot.slane %v1336, %v1356
    %v1358 = vlaneseq
    %v1359 = vshrl.u32 %v1358, 7
    %v1360 = vsub.s32 5, %v1359
    %v1361 = vrot.slane %v1336, %v1360
    %v1362 = vlaneseq
    %v1363 = vshrl.u32 %v1362, 7
    %v1364 = vsub.s32 6, %v1363
    %v1365 = vrot.slane %v1336, %v1364
    %v1366 = vlaneseq
    %v1367 = vshrl.u32 %v1366, 7
    %v1368 = vsub.s32 7, %v1367
    %v1369 = vrot.slane %v1336, %v1368
    %v1394 = vunpack.c.l.b16 %v106
    %v1395 = vunpack.c.h.b16 %v106
    %v1396 = vunpack.c.l.b16 %v107
    %v1397 = vunpack.c.h.b16 %v107
    %v1398 = vunpack.c.l.b16 %v108
    %v1399 = vunpack.c.h.b16 %v108
    %v1400 = vunpack.c.l.b16 %v109
    %v1401 = vunpack.c.h.b16 %v109
    %v1402 = vunpack.c.l.b16 %v110
    %v1403 = vunpack.c.h.b16 %v110
    %v1404 = vunpack.c.l.b16 %v111
    %v1405 = vunpack.c.h.b16 %v111
    %v1406 = vunpack.c.l.b16 %v112
    %v1407 = vunpack.c.h.b16 %v112
    %v1408 = vunpack.c.l.b16 %v113
    %v1409 = vunpack.c.h.b16 %v113
    %v1410 = vunpack.c.l.b16 %v114
    %v1411 = vunpack.c.h.b16 %v114
    %v1412 = vunpack.c.l.b16 %v115
    %v1413 = vunpack.c.h.b16 %v115
    %v1414 = vunpack.c.l.b16 %v116
    %v1415 = vunpack.c.h.b16 %v116
    %v1416 = vunpack.c.l.b16 %v117
    %v1417 = vunpack.c.h.b16 %v117
    %v1418 = vunpack.c.l.b16 %v118
    %v1419 = vunpack.c.h.b16 %v118
    %v1420 = vunpack.c.l.b16 %v119
    %v1421 = vunpack.c.h.b16 %v119
    %v1422 = vunpack.c.l.b16 %v120
    %v1423 = vunpack.c.h.b16 %v120
    %v1424 = vunpack.c.l.b16 %v121
    %v1425 = vunpack.c.h.b16 %v121
    %v1426 = vpack.c.b16 %v1398, %v1394
    %v1427 = vpack.c.b16 %v1399, %v1395
    %v1428 = vpack.c.b16 %v1400, %v1396
    %v1429 = vpack.c.b16 %v1401, %v1397
    %v1430 = vpack.c.b16 %v1406, %v1402
    %v1431 = vpack.c.b16 %v1407, %v1403
    %v1432 = vpack.c.b16 %v1408, %v1404
    %v1433 = vpack.c.b16 %v1409, %v1405
    %v1434 = vpack.c.b16 %v1414, %v1410
    %v1435 = vpack.c.b16 %v1415, %v1411
    %v1436 = vpack.c.b16 %v1416, %v1412
    %v1437 = vpack.c.b16 %v1417, %v1413
    %v1438 = vpack.c.b16 %v1422, %v1418
    %v1439 = vpack.c.b16 %v1423, %v1419
    %v1440 = vpack.c.b16 %v1424, %v1420
    %v1441 = vpack.c.b16 %v1425, %v1421
    %v1714 = vunpack.c.l.b16 %v1080
    %v1715 = vunpack.c.h.b16 %v1080
    %v1716 = vunpack.c.l.b16 %v1081
    %v1717 = vunpack.c.h.b16 %v1081
    %v1718 = vunpack.c.l.b16 %v1082
    %v1719 = vunpack.c.h.b16 %v1082
    %v1720 = vunpack.c.l.b16 %v1083
    %v1721 = vunpack.c.h.b16 %v1083
    %v1722 = vunpack.c.l.b16 %v1084
    %v1723 = vunpack.c.h.b16 %v1084
    %v1724 = vunpack.c.l.b16 %v1085
    %v1725 = vunpack.c.h.b16 %v1085
    %v1726 = vunpack.c.l.b16 %v1086
    %v1727 = vunpack.c.h.b16 %v1086
    %v1728 = vunpack.c.l.b16 %v1087
    %v1729 = vunpack.c.h.b16 %v1087
    %v1730 = vunpack.c.l.b16 %v1088
    %v1731 = vunpack.c.h.b16 %v1088
    %v1732 = vunpack.c.l.b16 %v1089
    %v1733 = vunpack.c.h.b16 %v1089
    %v1734 = vunpack.c.l.b16 %v1090
    %v1735 = vunpack.c.h.b16 %v1090
    %v1736 = vunpack.c.l.b16 %v1091
    %v1737 = vunpack.c.h.b16 %v1091
    %v1738 = vunpack.c.l.b16 %v1092
    %v1739 = vunpack.c.h.b16 %v1092
    %v1740 = vunpack.c.l.b16 %v1093
    %v1741 = vunpack.c.h.b16 %v1093
    %v1742 = vunpack.c.l.b16 %v1094
    %v1743 = vunpack.c.h.b16 %v1094
    %v1744 = vunpack.c.l.b16 %v1095
    %v1745 = vunpack.c.h.b16 %v1095
    %v1746 = vunpack.c.l.b16 %v1096
    %v1747 = vunpack.c.h.b16 %v1096
    %v1748 = vunpack.c.l.b16 %v1097
    %v1749 = vunpack.c.h.b16 %v1097
    %v1750 = vunpack.c.l.b16 %v1098
    %v1751 = vunpack.c.h.b16 %v1098
    %v1752 = vunpack.c.l.b16 %v1099
    %v1753 = vunpack.c.h.b16 %v1099
    %v1754 = vunpack.c.l.b16 %v1100
    %v1755 = vunpack.c.h.b16 %v1100
    %v1756 = vunpack.c.l.b16 %v1101
    %v1757 = vunpack.c.h.b16 %v1101
    %v1758 = vunpack.c.l.b16 %v1102
    %v1759 = vunpack.c.h.b16 %v1102
    %v1760 = vunpack.c.l.b16 %v1103
    %v1761 = vunpack.c.h.b16 %v1103
    %v1762 = vunpack.c.l.b16 %v1104
    %v1763 = vunpack.c.h.b16 %v1104
    %v1764 = vunpack.c.l.b16 %v1105
    %v1765 = vunpack.c.h.b16 %v1105
    %v1766 = vunpack.c.l.b16 %v1106
    %v1767 = vunpack.c.h.b16 %v1106
    %v1768 = vunpack.c.l.b16 %v1107
    %v1769 = vunpack.c.h.b16 %v1107
    %v1770 = vunpack.c.l.b16 %v1108
    %v1771 = vunpack.c.h.b16 %v1108
    %v1772 = vunpack.c.l.b16 %v1109
    %v1773 = vunpack.c.h.b16 %v1109
    %v1774 = vunpack.c.l.b16 %v1110
    %v1775 = vunpack.c.h.b16 %v1110
    %v1776 = vunpack.c.l.b16 %v1111
    %v1777 = vunpack.c.h.b16 %v1111
    %v1778 = vunpack.c.l.b16 %v1112
    %v1779 = vunpack.c.h.b16 %v1112
    %v1780 = vunpack.c.l.b16 %v1113
    %v1781 = vunpack.c.h.b16 %v1113
    %v1782 = vunpack.c.l.b16 %v1114
    %v1783 = vunpack.c.h.b16 %v1114
    %v1784 = vunpack.c.l.b16 %v1115
    %v1785 = vunpack.c.h.b16 %v1115
    %v1786 = vunpack.c.l.b16 %v1116
    %v1787 = vunpack.c.h.b16 %v1116
    %v1788 = vunpack.c.l.b16 %v1117
    %v1789 = vunpack.c.h.b16 %v1117
    %v1790 = vunpack.c.l.b16 %v1118
    %v1791 = vunpack.c.h.b16 %v1118
    %v1792 = vunpack.c.l.b16 %v1119
    %v1793 = vunpack.c.h.b16 %v1119
    %v1794 = vunpack.c.l.b16 %v1120
    %v1795 = vunpack.c.h.b16 %v1120
    %v1796 = vunpack.c.l.b16 %v1121
    %v1797 = vunpack.c.h.b16 %v1121
    %v1798 = vunpack.c.l.b16 %v1122
    %v1799 = vunpack.c.h.b16 %v1122
    %v1800 = vunpack.c.l.b16 %v1123
    %v1801 = vunpack.c.h.b16 %v1123
    %v1802 = vunpack.c.l.b16 %v1124
    %v1803 = vunpack.c.h.b16 %v1124
    %v1804 = vunpack.c.l.b16 %v1125
    %v1805 = vunpack.c.h.b16 %v1125
    %v1806 = vunpack.c.l.b16 %v1126
    %v1807 = vunpack.c.h.b16 %v1126
    %v1808 = vunpack.c.l.b16 %v1127
    %v1809 = vunpack.c.h.b16 %v1127
    %v1810 = vunpack.c.l.b16 %v1128
    %v1811 = vunpack.c.h.b16 %v1128
    %v1812 = vunpack.c.l.b16 %v1129
    %v1813 = vunpack.c.h.b16 %v1129
    %v1814 = vunpack.c.l.b16 %v1130
    %v1815 = vunpack.c.h.b16 %v1130
    %v1816 = vunpack.c.l.b16 %v1131
    %v1817 = vunpack.c.h.b16 %v1131
    %v1818 = vunpack.c.l.b16 %v1132
    %v1819 = vunpack.c.h.b16 %v1132
    %v1820 = vunpack.c.l.b16 %v1133
    %v1821 = vunpack.c.h.b16 %v1133
    %v1822 = vunpack.c.l.b16 %v1134
    %v1823 = vunpack.c.h.b16 %v1134
    %v1824 = vunpack.c.l.b16 %v1135
    %v1825 = vunpack.c.h.b16 %v1135
    %v1826 = vunpack.c.l.b16 %v1136
    %v1827 = vunpack.c.h.b16 %v1136
    %v1828 = vunpack.c.l.b16 %v1137
    %v1829 = vunpack.c.h.b16 %v1137
    %v1830 = vunpack.c.l.b16 %v1138
    %v1831 = vunpack.c.h.b16 %v1138
    %v1832 = vunpack.c.l.b16 %v1139
    %v1833 = vunpack.c.h.b16 %v1139
    %v1834 = vunpack.c.l.b16 %v1140
    %v1835 = vunpack.c.h.b16 %v1140
    %v1836 = vunpack.c.l.b16 %v1141
    %v1837 = vunpack.c.h.b16 %v1141
    %v1838 = vunpack.c.l.b16 %v1142
    %v1839 = vunpack.c.h.b16 %v1142
    %v1840 = vunpack.c.l.b16 %v1143
    %v1841 = vunpack.c.h.b16 %v1143
    %v1842 = vunpack.c.l.b16 %v1144
    %v1843 = vunpack.c.h.b16 %v1144
    %v1844 = vunpack.c.l.b16 %v1145
    %v1845 = vunpack.c.h.b16 %v1145
    %v1846 = vunpack.c.l.b16 %v1146
    %v1847 = vunpack.c.h.b16 %v1146
    %v1848 = vunpack.c.l.b16 %v1147
    %v1849 = vunpack.c.h.b16 %v1147
    %v1850 = vunpack.c.l.b16 %v1148
    %v1851 = vunpack.c.h.b16 %v1148
    %v1852 = vunpack.c.l.b16 %v1149
    %v1853 = vunpack.c.h.b16 %v1149
    %v1854 = vunpack.c.l.b16 %v1150
    %v1855 = vunpack.c.h.b16 %v1150
    %v1856 = vunpack.c.l.b16 %v1151
    %v1857 = vunpack.c.h.b16 %v1151
    %v1858 = vunpack.c.l.b16 %v1152
    %v1859 = vunpack.c.h.b16 %v1152
    %v1860 = vunpack.c.l.b16 %v1153
    %v1861 = vunpack.c.h.b16 %v1153
    %v1862 = vunpack.c.l.b16 %v1154
    %v1863 = vunpack.c.h.b16 %v1154
    %v1864 = vunpack.c.l.b16 %v1155
    %v1865 = vunpack.c.h.b16 %v1155
    %v1866 = vunpack.c.l.b16 %v1156
    %v1867 = vunpack.c.h.b16 %v1156
    %v1868 = vunpack.c.l.b16 %v1157
    %v1869 = vunpack.c.h.b16 %v1157
    %v1870 = vunpack.c.l.b16 %v1158
    %v1871 = vunpack.c.h.b16 %v1158
    %v1872 = vunpack.c.l.b16 %v1159
    %v1873 = vunpack.c.h.b16 %v1159
    %v1874 = vunpack.c.l.b16 %v1160
    %v1875 = vunpack.c.h.b16 %v1160
    %v1876 = vunpack.c.l.b16 %v1161
    %v1877 = vunpack.c.h.b16 %v1161
    %v1878 = vunpack.c.l.b16 %v1162
    %v1879 = vunpack.c.h.b16 %v1162
    %v1880 = vunpack.c.l.b16 %v1163
    %v1881 = vunpack.c.h.b16 %v1163
    %v1882 = vunpack.c.l.b16 %v1164
    %v1883 = vunpack.c.h.b16 %v1164
    %v1884 = vunpack.c.l.b16 %v1165
    %v1885 = vunpack.c.h.b16 %v1165
    %v1886 = vunpack.c.l.b16 %v1166
    %v1887 = vunpack.c.h.b16 %v1166
    %v1888 = vunpack.c.l.b16 %v1167
    %v1889 = vunpack.c.h.b16 %v1167
    %v1890 = vunpack.c.l.b16 %v1168
    %v1891 = vunpack.c.h.b16 %v1168
    %v1892 = vunpack.c.l.b16 %v1169
    %v1893 = vunpack.c.h.b16 %v1169
    %v1894 = vunpack.c.l.b16 %v1170
    %v1895 = vunpack.c.h.b16 %v1170
    %v1896 = vunpack.c.l.b16 %v1171
    %v1897 = vunpack.c.h.b16 %v1171
    %v1898 = vunpack.c.l.b16 %v1172
    %v1899 = vunpack.c.h.b16 %v1172
    %v1900 = vunpack.c.l.b16 %v1173
    %v1901 = vunpack.c.h.b16 %v1173
    %v1902 = vunpack.c.l.b16 %v1174
    %v1903 = vunpack.c.h.b16 %v1174
    %v1904 = vunpack.c.l.b16 %v1175
    %v1905 = vunpack.c.h.b16 %v1175
    %v1906 = vunpack.c.l.b16 %v1176
    %v1907 = vunpack.c.h.b16 %v1176
    %v1908 = vunpack.c.l.b16 %v1177
    %v1909 = vunpack.c.h.b16 %v1177
    %v1910 = vunpack.c.l.b16 %v1178
    %v1911 = vunpack.c.h.b16 %v1178
    %v1912 = vunpack.c.l.b16 %v1179
    %v1913 = vunpack.c.h.b16 %v1179
    %v1914 = vunpack.c.l.b16 %v1180
    %v1915 = vunpack.c.h.b16 %v1180
    %v1916 = vunpack.c.l.b16 %v1181
    %v1917 = vunpack.c.h.b16 %v1181
    %v1918 = vunpack.c.l.b16 %v1182
    %v1919 = vunpack.c.h.b16 %v1182
    %v1920 = vunpack.c.l.b16 %v1183
    %v1921 = vunpack.c.h.b16 %v1183
    %v1922 = vunpack.c.l.b16 %v1184
    %v1923 = vunpack.c.h.b16 %v1184
    %v1924 = vunpack.c.l.b16 %v1185
    %v1925 = vunpack.c.h.b16 %v1185
    %v1926 = vunpack.c.l.b16 %v1186
    %v1927 = vunpack.c.h.b16 %v1186
    %v1928 = vunpack.c.l.b16 %v1187
    %v1929 = vunpack.c.h.b16 %v1187
    %v1930 = vunpack.c.l.b16 %v1188
    %v1931 = vunpack.c.h.b16 %v1188
    %v1932 = vunpack.c.l.b16 %v1189
    %v1933 = vunpack.c.h.b16 %v1189
    %v1934 = vunpack.c.l.b16 %v1190
    %v1935 = vunpack.c.h.b16 %v1190
    %v1936 = vunpack.c.l.b16 %v1191
    %v1937 = vunpack.c.h.b16 %v1191
    %v1938 = vunpack.c.l.b16 %v1192
    %v1939 = vunpack.c.h.b16 %v1192
    %v1940 = vunpack.c.l.b16 %v1193
    %v1941 = vunpack.c.h.b16 %v1193
    %v1942 = vunpack.c.l.b16 %v1194
    %v1943 = vunpack.c.h.b16 %v1194
    %v1944 = vunpack.c.l.b16 %v1195
    %v1945 = vunpack.c.h.b16 %v1195
    %v1946 = vunpack.c.l.b16 %v1196
    %v1947 = vunpack.c.h.b16 %v1196
    %v1948 = vunpack.c.l.b16 %v1197
    %v1949 = vunpack.c.h.b16 %v1197
    %v1950 = vunpack.c.l.b16 %v1198
    %v1951 = vunpack.c.h.b16 %v1198
    %v1952 = vunpack.c.l.b16 %v1199
    %v1953 = vunpack.c.h.b16 %v1199
    %v1954 = vunpack.c.l.b16 %v1200
    %v1955 = vunpack.c.h.b16 %v1200
    %v1956 = vunpack.c.l.b16 %v1201
    %v1957 = vunpack.c.h.b16 %v1201
    %v1958 = vunpack.c.l.b16 %v1202
    %v1959 = vunpack.c.h.b16 %v1202
    %v1960 = vunpack.c.l.b16 %v1203
    %v1961 = vunpack.c.h.b16 %v1203
    %v1962 = vunpack.c.l.b16 %v1204
    %v1963 = vunpack.c.h.b16 %v1204
    %v1964 = vunpack.c.l.b16 %v1205
    %v1965 = vunpack.c.h.b16 %v1205
    %v1966 = vunpack.c.l.b16 %v1206
    %v1967 = vunpack.c.h.b16 %v1206
    %v1968 = vunpack.c.l.b16 %v1207
    %v1969 = vunpack.c.h.b16 %v1207
    %v1970 = vunpack.c.l.b16 %v1208
    %v1971 = vunpack.c.h.b16 %v1208
    %v1972 = vunpack.c.l.b16 %v1209
    %v1973 = vunpack.c.h.b16 %v1209
    %v1974 = vunpack.c.l.b16 %v1210
    %v1975 = vunpack.c.h.b16 %v1210
    %v1976 = vunpack.c.l.b16 %v1211
    %v1977 = vunpack.c.h.b16 %v1211
    %v1978 = vunpack.c.l.b16 %v1212
    %v1979 = vunpack.c.h.b16 %v1212
    %v1980 = vunpack.c.l.b16 %v1213
    %v1981 = vunpack.c.h.b16 %v1213
    %v1982 = vunpack.c.l.b16 %v1214
    %v1983 = vunpack.c.h.b16 %v1214
    %v1984 = vunpack.c.l.b16 %v1215
    %v1985 = vunpack.c.h.b16 %v1215
    %v1986 = vunpack.c.l.b16 %v1216
    %v1987 = vunpack.c.h.b16 %v1216
    %v1988 = vunpack.c.l.b16 %v1217
    %v1989 = vunpack.c.h.b16 %v1217
    %v1990 = vunpack.c.l.b16 %v1218
    %v1991 = vunpack.c.h.b16 %v1218
    %v1992 = vunpack.c.l.b16 %v1219
    %v1993 = vunpack.c.h.b16 %v1219
    %v1994 = vunpack.c.l.b16 %v1220
    %v1995 = vunpack.c.h.b16 %v1220
    %v1996 = vunpack.c.l.b16 %v1221
    %v1997 = vunpack.c.h.b16 %v1221
    %v1998 = vunpack.c.l.b16 %v1222
    %v1999 = vunpack.c.h.b16 %v1222
    %v2000 = vunpack.c.l.b16 %v1223
    %v2001 = vunpack.c.h.b16 %v1223
    %v2002 = vunpack.c.l.b16 %v1224
    %v2003 = vunpack.c.h.b16 %v1224
    %v2004 = vunpack.c.l.b16 %v1225
    %v2005 = vunpack.c.h.b16 %v1225
    %v2006 = vunpack.c.l.b16 %v1226
    %v2007 = vunpack.c.h.b16 %v1226
    %v2008 = vunpack.c.l.b16 %v1227
    %v2009 = vunpack.c.h.b16 %v1227
    %v2010 = vunpack.c.l.b16 %v1228
    %v2011 = vunpack.c.h.b16 %v1228
    %v2012 = vunpack.c.l.b16 %v1229
    %v2013 = vunpack.c.h.b16 %v1229
    %v2014 = vunpack.c.l.b16 %v1230
    %v2015 = vunpack.c.h.b16 %v1230
    %v2016 = vunpack.c.l.b16 %v1231
    %v2017 = vunpack.c.h.b16 %v1231
    %v2018 = vunpack.c.l.b16 %v1232
    %v2019 = vunpack.c.h.b16 %v1232
    %v2020 = vunpack.c.l.b16 %v1233
    %v2021 = vunpack.c.h.b16 %v1233
    %v2022 = vunpack.c.l.b16 %v1234
    %v2023 = vunpack.c.h.b16 %v1234
    %v2024 = vunpack.c.l.b16 %v1235
    %v2025 = vunpack.c.h.b16 %v1235
    %v2026 = vunpack.c.l.b16 %v1236
    %v2027 = vunpack.c.h.b16 %v1236
    %v2028 = vunpack.c.l.b16 %v1237
    %v2029 = vunpack.c.h.b16 %v1237
    %v2030 = vunpack.c.l.b16 %v1238
    %v2031 = vunpack.c.h.b16 %v1238
    %v2032 = vunpack.c.l.b16 %v1239
    %v2033 = vunpack.c.h.b16 %v1239
    %v2034 = vunpack.c.l.b16 %v1240
    %v2035 = vunpack.c.h.b16 %v1240
    %v2036 = vunpack.c.l.b16 %v1241
    %v2037 = vunpack.c.h.b16 %v1241
    %v2038 = vunpack.c.l.b16 %v1242
    %v2039 = vunpack.c.h.b16 %v1242
    %v2040 = vunpack.c.l.b16 %v1243
    %v2041 = vunpack.c.h.b16 %v1243
    %v2042 = vunpack.c.l.b16 %v1244
    %v2043 = vunpack.c.h.b16 %v1244
    %v2044 = vunpack.c.l.b16 %v1245
    %v2045 = vunpack.c.h.b16 %v1245
    %v2046 = vunpack.c.l.b16 %v1246
    %v2047 = vunpack.c.h.b16 %v1246
    %v2048 = vunpack.c.l.b16 %v1247
    %v2049 = vunpack.c.h.b16 %v1247
    %v2050 = vunpack.c.l.b16 %v1248
    %v2051 = vunpack.c.h.b16 %v1248
    %v2052 = vunpack.c.l.b16 %v1249
    %v2053 = vunpack.c.h.b16 %v1249
    %v2054 = vunpack.c.l.b16 %v1250
    %v2055 = vunpack.c.h.b16 %v1250
    %v2056 = vunpack.c.l.b16 %v1251
    %v2057 = vunpack.c.h.b16 %v1251
    %v2058 = vunpack.c.l.b16 %v1252
    %v2059 = vunpack.c.h.b16 %v1252
    %v2060 = vunpack.c.l.b16 %v1253
    %v2061 = vunpack.c.h.b16 %v1253
    %v2062 = vunpack.c.l.b16 %v1254
    %v2063 = vunpack.c.h.b16 %v1254
    %v2064 = vunpack.c.l.b16 %v1255
    %v2065 = vunpack.c.h.b16 %v1255
    %v2066 = vunpack.c.l.b16 %v1256
    %v2067 = vunpack.c.h.b16 %v1256
    %v2068 = vunpack.c.l.b16 %v1257
    %v2069 = vunpack.c.h.b16 %v1257
    %v2070 = vunpack.c.l.b16 %v1258
    %v2071 = vunpack.c.h.b16 %v1258
    %v2072 = vunpack.c.l.b16 %v1259
    %v2073 = vunpack.c.h.b16 %v1259
    %v2074 = vunpack.c.l.b16 %v1260
    %v2075 = vunpack.c.h.b16 %v1260
    %v2076 = vunpack.c.l.b16 %v1261
    %v2077 = vunpack.c.h.b16 %v1261
    %v2078 = vunpack.c.l.b16 %v1262
    %v2079 = vunpack.c.h.b16 %v1262
    %v2080 = vunpack.c.l.b16 %v1263
    %v2081 = vunpack.c.h.b16 %v1263
    %v2082 = vunpack.c.l.b16 %v1264
    %v2083 = vunpack.c.h.b16 %v1264
    %v2084 = vunpack.c.l.b16 %v1265
    %v2085 = vunpack.c.h.b16 %v1265
    %v2086 = vunpack.c.l.b16 %v1266
    %v2087 = vunpack.c.h.b16 %v1266
    %v2088 = vunpack.c.l.b16 %v1267
    %v2089 = vunpack.c.h.b16 %v1267
    %v2090 = vunpack.c.l.b16 %v1268
    %v2091 = vunpack.c.h.b16 %v1268
    %v2092 = vunpack.c.l.b16 %v1269
    %v2093 = vunpack.c.h.b16 %v1269
    %v2094 = vunpack.c.l.b16 %v1270
    %v2095 = vunpack.c.h.b16 %v1270
    %v2096 = vunpack.c.l.b16 %v1271
    %v2097 = vunpack.c.h.b16 %v1271
    %v2098 = vunpack.c.l.b16 %v1272
    %v2099 = vunpack.c.h.b16 %v1272
    %v2100 = vunpack.c.l.b16 %v1273
    %v2101 = vunpack.c.h.b16 %v1273
    %v2102 = vunpack.c.l.b16 %v1274
    %v2103 = vunpack.c.h.b16 %v1274
    %v2104 = vunpack.c.l.b16 %v1275
    %v2105 = vunpack.c.h.b16 %v1275
    %v2106 = vunpack.c.l.b16 %v1276
    %v2107 = vunpack.c.h.b16 %v1276
    %v2108 = vunpack.c.l.b16 %v1277
    %v2109 = vunpack.c.h.b16 %v1277
    %v2110 = vunpack.c.l.b16 %v1278
    %v2111 = vunpack.c.h.b16 %v1278
    %v2112 = vunpack.c.l.b16 %v1279
    %v2113 = vunpack.c.h.b16 %v1279
    %v2114 = vunpack.c.l.b16 %v1280
    %v2115 = vunpack.c.h.b16 %v1280
    %v2116 = vunpack.c.l.b16 %v1281
    %v2117 = vunpack.c.h.b16 %v1281
    %v2118 = vunpack.c.l.b16 %v1282
    %v2119 = vunpack.c.h.b16 %v1282
    %v2120 = vunpack.c.l.b16 %v1283
    %v2121 = vunpack.c.h.b16 %v1283
    %v2122 = vunpack.c.l.b16 %v1284
    %v2123 = vunpack.c.h.b16 %v1284
    %v2124 = vunpack.c.l.b16 %v1285
    %v2125 = vunpack.c.h.b16 %v1285
    %v2126 = vunpack.c.l.b16 %v1286
    %v2127 = vunpack.c.h.b16 %v1286
    %v2128 = vunpack.c.l.b16 %v1287
    %v2129 = vunpack.c.h.b16 %v1287
    %v2130 = vunpack.c.l.b16 %v1288
    %v2131 = vunpack.c.h.b16 %v1288
    %v2132 = vunpack.c.l.b16 %v1289
    %v2133 = vunpack.c.h.b16 %v1289
    %v2134 = vunpack.c.l.b16 %v1290
    %v2135 = vunpack.c.h.b16 %v1290
    %v2136 = vunpack.c.l.b16 %v1291
    %v2137 = vunpack.c.h.b16 %v1291
    %v2138 = vunpack.c.l.b16 %v1292
    %v2139 = vunpack.c.h.b16 %v1292
    %v2140 = vunpack.c.l.b16 %v1293
    %v2141 = vunpack.c.h.b16 %v1293
    %v2142 = vunpack.c.l.b16 %v1294
    %v2143 = vunpack.c.h.b16 %v1294
    %v2144 = vunpack.c.l.b16 %v1295
    %v2145 = vunpack.c.h.b16 %v1295
    %v2146 = vunpack.c.l.b16 %v1296
    %v2147 = vunpack.c.h.b16 %v1296
    %v2148 = vunpack.c.l.b16 %v1297
    %v2149 = vunpack.c.h.b16 %v1297
    %v2150 = vunpack.c.l.b16 %v1298
    %v2151 = vunpack.c.h.b16 %v1298
    %v2152 = vunpack.c.l.b16 %v1299
    %v2153 = vunpack.c.h.b16 %v1299
    %v2154 = vunpack.c.l.b16 %v1300
    %v2155 = vunpack.c.h.b16 %v1300
    %v2156 = vunpack.c.l.b16 %v1301
    %v2157 = vunpack.c.h.b16 %v1301
    %v2158 = vunpack.c.l.b16 %v1302
    %v2159 = vunpack.c.h.b16 %v1302
    %v2160 = vunpack.c.l.b16 %v1303
    %v2161 = vunpack.c.h.b16 %v1303
    %v2162 = vunpack.c.l.b16 %v1304
    %v2163 = vunpack.c.h.b16 %v1304
    %v2164 = vunpack.c.l.b16 %v1305
    %v2165 = vunpack.c.h.b16 %v1305
    %v2166 = vunpack.c.l.b16 %v1306
    %v2167 = vunpack.c.h.b16 %v1306
    %v2168 = vunpack.c.l.b16 %v1307
    %v2169 = vunpack.c.h.b16 %v1307
    %v2170 = vunpack.c.l.b16 %v1308
    %v2171 = vunpack.c.h.b16 %v1308
    %v2172 = vunpack.c.l.b16 %v1309
    %v2173 = vunpack.c.h.b16 %v1309
    %v2174 = vunpack.c.l.b16 %v1310
    %v2175 = vunpack.c.h.b16 %v1310
    %v2176 = vunpack.c.l.b16 %v1311
    %v2177 = vunpack.c.h.b16 %v1311
    %v2178 = vunpack.c.l.b16 %v1312
    %v2179 = vunpack.c.h.b16 %v1312
    %v2180 = vunpack.c.l.b16 %v1313
    %v2181 = vunpack.c.h.b16 %v1313
    %v2182 = vunpack.c.l.b16 %v1314
    %v2183 = vunpack.c.h.b16 %v1314
    %v2184 = vunpack.c.l.b16 %v1315
    %v2185 = vunpack.c.h.b16 %v1315
    %v2186 = vunpack.c.l.b16 %v1316
    %v2187 = vunpack.c.h.b16 %v1316
    %v2188 = vunpack.c.l.b16 %v1317
    %v2189 = vunpack.c.h.b16 %v1317
    %v2190 = vunpack.c.l.b16 %v1318
    %v2191 = vunpack.c.h.b16 %v1318
    %v2192 = vunpack.c.l.b16 %v1319
    %v2193 = vunpack.c.h.b16 %v1319
    %v2194 = vunpack.c.l.b16 %v1320
    %v2195 = vunpack.c.h.b16 %v1320
    %v2196 = vunpack.c.l.b16 %v1321
    %v2197 = vunpack.c.h.b16 %v1321
    %v2198 = vunpack.c.l.b16 %v1322
    %v2199 = vunpack.c.h.b16 %v1322
    %v2200 = vunpack.c.l.b16 %v1323
    %v2201 = vunpack.c.h.b16 %v1323
    %v2202 = vunpack.c.l.b16 %v1324
    %v2203 = vunpack.c.h.b16 %v1324
    %v2204 = vunpack.c.l.b16 %v1325
    %v2205 = vunpack.c.h.b16 %v1325
    %v2206 = vunpack.c.l.b16 %v1326
    %v2207 = vunpack.c.h.b16 %v1326
    %v2208 = vunpack.c.l.b16 %v1327
    %v2209 = vunpack.c.h.b16 %v1327
    %v2210 = vunpack.c.l.b16 %v1328
    %v2211 = vunpack.c.h.b16 %v1328
    %v2212 = vunpack.c.l.b16 %v1329
    %v2213 = vunpack.c.h.b16 %v1329
    %v2214 = vunpack.c.l.b16 %v1330
    %v2215 = vunpack.c.h.b16 %v1330
    %v2216 = vunpack.c.l.b16 %v1331
    %v2217 = vunpack.c.h.b16 %v1331
    %v2218 = vunpack.c.l.b16 %v1332
    %v2219 = vunpack.c.h.b16 %v1332
    %v2220 = vunpack.c.l.b16 %v1333
    %v2221 = vunpack.c.h.b16 %v1333
    %v2222 = vunpack.c.l.b16 %v1334
    %v2223 = vunpack.c.h.b16 %v1334
    %v2224 = vunpack.c.l.b16 %v1335
    %v2225 = vunpack.c.h.b16 %v1335
    %v2226 = vpack.c.b16 %v1722, %v1714
    %v2227 = vpack.c.b16 %v1723, %v1715
    %v2228 = vpack.c.b16 %v1724, %v1716
    %v2229 = vpack.c.b16 %v1725, %v1717
    %v2230 = vpack.c.b16 %v1726, %v1718
    %v2231 = vpack.c.b16 %v1727, %v1719
    %v2232 = vpack.c.b16 %v1728, %v1720
    %v2233 = vpack.c.b16 %v1729, %v1721
    %v2234 = vpack.c.b16 %v1738, %v1730
    %v2235 = vpack.c.b16 %v1739, %v1731
    %v2236 = vpack.c.b16 %v1740, %v1732
    %v2237 = vpack.c.b16 %v1741, %v1733
    %v2238 = vpack.c.b16 %v1742, %v1734
    %v2239 = vpack.c.b16 %v1743, %v1735
    %v2240 = vpack.c.b16 %v1744, %v1736
    %v2241 = vpack.c.b16 %v1745, %v1737
    %v2242 = vpack.c.b16 %v1754, %v1746
    %v2243 = vpack.c.b16 %v1755, %v1747
    %v2244 = vpack.c.b16 %v1756, %v1748
    %v2245 = vpack.c.b16 %v1757, %v1749
    %v2246 = vpack.c.b16 %v1758, %v1750
    %v2247 = vpack.c.b16 %v1759, %v1751
    %v2248 = vpack.c.b16 %v1760, %v1752
    %v2249 = vpack.c.b16 %v1761, %v1753
    %v2250 = vpack.c.b16 %v1770, %v1762
    %v2251 = vpack.c.b16 %v1771, %v1763
    %v2252 = vpack.c.b16 %v1772, %v1764
    %v2253 = vpack.c.b16 %v1773, %v1765
    %v2254 = vpack.c.b16 %v1774, %v1766
    %v2255 = vpack.c.b16 %v1775, %v1767
    %v2256 = vpack.c.b16 %v1776, %v1768
    %v2257 = vpack.c.b16 %v1777, %v1769
    %v2258 = vpack.c.b16 %v1786, %v1778
    %v2259 = vpack.c.b16 %v1787, %v1779
    %v2260 = vpack.c.b16 %v1788, %v1780
    %v2261 = vpack.c.b16 %v1789, %v1781
    %v2262 = vpack.c.b16 %v1790, %v1782
    %v2263 = vpack.c.b16 %v1791, %v1783
    %v2264 = vpack.c.b16 %v1792, %v1784
    %v2265 = vpack.c.b16 %v1793, %v1785
    %v2266 = vpack.c.b16 %v1802, %v1794
    %v2267 = vpack.c.b16 %v1803, %v1795
    %v2268 = vpack.c.b16 %v1804, %v1796
    %v2269 = vpack.c.b16 %v1805, %v1797
    %v2270 = vpack.c.b16 %v1806, %v1798
    %v2271 = vpack.c.b16 %v1807, %v1799
    %v2272 = vpack.c.b16 %v1808, %v1800
    %v2273 = vpack.c.b16 %v1809, %v1801
    %v2274 = vpack.c.b16 %v1818, %v1810
    %v2275 = vpack.c.b16 %v1819, %v1811
    %v2276 = vpack.c.b16 %v1820, %v1812
    %v2277 = vpack.c.b16 %v1821, %v1813
    %v2278 = vpack.c.b16 %v1822, %v1814
    %v2279 = vpack.c.b16 %v1823, %v1815
    %v2280 = vpack.c.b16 %v1824, %v1816
    %v2281 = vpack.c.b16 %v1825, %v1817
    %v2282 = vpack.c.b16 %v1834, %v1826
    %v2283 = vpack.c.b16 %v1835, %v1827
    %v2284 = vpack.c.b16 %v1836, %v1828
    %v2285 = vpack.c.b16 %v1837, %v1829
    %v2286 = vpack.c.b16 %v1838, %v1830
    %v2287 = vpack.c.b16 %v1839, %v1831
    %v2288 = vpack.c.b16 %v1840, %v1832
    %v2289 = vpack.c.b16 %v1841, %v1833
    %v2290 = vpack.c.b16 %v1850, %v1842
    %v2291 = vpack.c.b16 %v1851, %v1843
    %v2292 = vpack.c.b16 %v1852, %v1844
    %v2293 = vpack.c.b16 %v1853, %v1845
    %v2294 = vpack.c.b16 %v1854, %v1846
    %v2295 = vpack.c.b16 %v1855, %v1847
    %v2296 = vpack.c.b16 %v1856, %v1848
    %v2297 = vpack.c.b16 %v1857, %v1849
    %v2298 = vpack.c.b16 %v1866, %v1858
    %v2299 = vpack.c.b16 %v1867, %v1859
    %v2300 = vpack.c.b16 %v1868, %v1860
    %v2301 = vpack.c.b16 %v1869, %v1861
    %v2302 = vpack.c.b16 %v1870, %v1862
    %v2303 = vpack.c.b16 %v1871, %v1863
    %v2304 = vpack.c.b16 %v1872, %v1864
    %v2305 = vpack.c.b16 %v1873, %v1865
    %v2306 = vpack.c.b16 %v1882, %v1874
    %v2307 = vpack.c.b16 %v1883, %v1875
    %v2308 = vpack.c.b16 %v1884, %v1876
    %v2309 = vpack.c.b16 %v1885, %v1877
    %v2310 = vpack.c.b16 %v1886, %v1878
    %v2311 = vpack.c.b16 %v1887, %v1879
    %v2312 = vpack.c.b16 %v1888, %v1880
    %v2313 = vpack.c.b16 %v1889, %v1881
    %v2314 = vpack.c.b16 %v1898, %v1890
    %v2315 = vpack.c.b16 %v1899, %v1891
    %v2316 = vpack.c.b16 %v1900, %v1892
    %v2317 = vpack.c.b16 %v1901, %v1893
    %v2318 = vpack.c.b16 %v1902, %v1894
    %v2319 = vpack.c.b16 %v1903, %v1895
    %v2320 = vpack.c.b16 %v1904, %v1896
    %v2321 = vpack.c.b16 %v1905, %v1897
    %v2322 = vpack.c.b16 %v1914, %v1906
    %v2323 = vpack.c.b16 %v1915, %v1907
    %v2324 = vpack.c.b16 %v1916, %v1908
    %v2325 = vpack.c.b16 %v1917, %v1909
    %v2326 = vpack.c.b16 %v1918, %v1910
    %v2327 = vpack.c.b16 %v1919, %v1911
    %v2328 = vpack.c.b16 %v1920, %v1912
    %v2329 = vpack.c.b16 %v1921, %v1913
    %v2330 = vpack.c.b16 %v1930, %v1922
    %v2331 = vpack.c.b16 %v1931, %v1923
    %v2332 = vpack.c.b16 %v1932, %v1924
    %v2333 = vpack.c.b16 %v1933, %v1925
    %v2334 = vpack.c.b16 %v1934, %v1926
    %v2335 = vpack.c.b16 %v1935, %v1927
    %v2336 = vpack.c.b16 %v1936, %v1928
    %v2337 = vpack.c.b16 %v1937, %v1929
    %v2338 = vpack.c.b16 %v1946, %v1938
    %v2339 = vpack.c.b16 %v1947, %v1939
    %v2340 = vpack.c.b16 %v1948, %v1940
    %v2341 = vpack.c.b16 %v1949, %v1941
    %v2342 = vpack.c.b16 %v1950, %v1942
    %v2343 = vpack.c.b16 %v1951, %v1943
    %v2344 = vpack.c.b16 %v1952, %v1944
    %v2345 = vpack.c.b16 %v1953, %v1945
    %v2346 = vpack.c.b16 %v1962, %v1954
    %v2347 = vpack.c.b16 %v1963, %v1955
    %v2348 = vpack.c.b16 %v1964, %v1956
    %v2349 = vpack.c.b16 %v1965, %v1957
    %v2350 = vpack.c.b16 %v1966, %v1958
    %v2351 = vpack.c.b16 %v1967, %v1959
    %v2352 = vpack.c.b16 %v1968, %v1960
    %v2353 = vpack.c.b16 %v1969, %v1961
    %v2354 = vpack.c.b16 %v1978, %v1970
    %v2355 = vpack.c.b16 %v1979, %v1971
    %v2356 = vpack.c.b16 %v1980, %v1972
    %v2357 = vpack.c.b16 %v1981, %v1973
    %v2358 = vpack.c.b16 %v1982, %v1974
    %v2359 = vpack.c.b16 %v1983, %v1975
    %v2360 = vpack.c.b16 %v1984, %v1976
    %v2361 = vpack.c.b16 %v1985, %v1977
    %v2362 = vpack.c.b16 %v1994, %v1986
    %v2363 = vpack.c.b16 %v1995, %v1987
    %v2364 = vpack.c.b16 %v1996, %v1988
    %v2365 = vpack.c.b16 %v1997, %v1989
    %v2366 = vpack.c.b16 %v1998, %v1990
    %v2367 = vpack.c.b16 %v1999, %v1991
    %v2368 = vpack.c.b16 %v2000, %v1992
    %v2369 = vpack.c.b16 %v2001, %v1993
    %v2370 = vpack.c.b16 %v2010, %v2002
    %v2371 = vpack.c.b16 %v2011, %v2003
    %v2372 = vpack.c.b16 %v2012, %v2004
    %v2373 = vpack.c.b16 %v2013, %v2005
    %v2374 = vpack.c.b16 %v2014, %v2006
    %v2375 = vpack.c.b16 %v2015, %v2007
    %v2376 = vpack.c.b16 %v2016, %v2008
    %v2377 = vpack.c.b16 %v2017, %v2009
    %v2378 = vpack.c.b16 %v2026, %v2018
    %v2379 = vpack.c.b16 %v2027, %v2019
    %v2380 = vpack.c.b16 %v2028, %v2020
    %v2381 = vpack.c.b16 %v2029, %v2021
    %v2382 = vpack.c.b16 %v2030, %v2022
    %v2383 = vpack.c.b16 %v2031, %v2023
    %v2384 = vpack.c.b16 %v2032, %v2024
    %v2385 = vpack.c.b16 %v2033, %v2025
    %v2386 = vpack.c.b16 %v2042, %v2034
    %v2387 = vpack.c.b16 %v2043, %v2035
    %v2388 = vpack.c.b16 %v2044, %v2036
    %v2389 = vpack.c.b16 %v2045, %v2037
    %v2390 = vpack.c.b16 %v2046, %v2038
    %v2391 = vpack.c.b16 %v2047, %v2039
    %v2392 = vpack.c.b16 %v2048, %v2040
    %v2393 = vpack.c.b16 %v2049, %v2041
    %v2394 = vpack.c.b16 %v2058, %v2050
    %v2395 = vpack.c.b16 %v2059, %v2051
    %v2396 = vpack.c.b16 %v2060, %v2052
    %v2397 = vpack.c.b16 %v2061, %v2053
    %v2398 = vpack.c.b16 %v2062, %v2054
    %v2399 = vpack.c.b16 %v2063, %v2055
    %v2400 = vpack.c.b16 %v2064, %v2056
    %v2401 = vpack.c.b16 %v2065, %v2057
    %v2402 = vpack.c.b16 %v2074, %v2066
    %v2403 = vpack.c.b16 %v2075, %v2067
    %v2404 = vpack.c.b16 %v2076, %v2068
    %v2405 = vpack.c.b16 %v2077, %v2069
    %v2406 = vpack.c.b16 %v2078, %v2070
    %v2407 = vpack.c.b16 %v2079, %v2071
    %v2408 = vpack.c.b16 %v2080, %v2072
    %v2409 = vpack.c.b16 %v2081, %v2073
    %v2410 = vpack.c.b16 %v2090, %v2082
    %v2411 = vpack.c.b16 %v2091, %v2083
    %v2412 = vpack.c.b16 %v2092, %v2084
    %v2413 = vpack.c.b16 %v2093, %v2085
    %v2414 = vpack.c.b16 %v2094, %v2086
    %v2415 = vpack.c.b16 %v2095, %v2087
    %v2416 = vpack.c.b16 %v2096, %v2088
    %v2417 = vpack.c.b16 %v2097, %v2089
    %v2418 = vpack.c.b16 %v2106, %v2098
    %v2419 = vpack.c.b16 %v2107, %v2099
    %v2420 = vpack.c.b16 %v2108, %v2100
    %v2421 = vpack.c.b16 %v2109, %v2101
    %v2422 = vpack.c.b16 %v2110, %v2102
    %v2423 = vpack.c.b16 %v2111, %v2103
    %v2424 = vpack.c.b16 %v2112, %v2104
    %v2425 = vpack.c.b16 %v2113, %v2105
    %v2426 = vpack.c.b16 %v2122, %v2114
    %v2427 = vpack.c.b16 %v2123, %v2115
    %v2428 = vpack.c.b16 %v2124, %v2116
    %v2429 = vpack.c.b16 %v2125, %v2117
    %v2430 = vpack.c.b16 %v2126, %v2118
    %v2431 = vpack.c.b16 %v2127, %v2119
    %v2432 = vpack.c.b16 %v2128, %v2120
    %v2433 = vpack.c.b16 %v2129, %v2121
    %v2434 = vpack.c.b16 %v2138, %v2130
    %v2435 = vpack.c.b16 %v2139, %v2131
    %v2436 = vpack.c.b16 %v2140, %v2132
    %v2437 = vpack.c.b16 %v2141, %v2133
    %v2438 = vpack.c.b16 %v2142, %v2134
    %v2439 = vpack.c.b16 %v2143, %v2135
    %v2440 = vpack.c.b16 %v2144, %v2136
    %v2441 = vpack.c.b16 %v2145, %v2137
    %v2442 = vpack.c.b16 %v2154, %v2146
    %v2443 = vpack.c.b16 %v2155, %v2147
    %v2444 = vpack.c.b16 %v2156, %v2148
    %v2445 = vpack.c.b16 %v2157, %v2149
    %v2446 = vpack.c.b16 %v2158, %v2150
    %v2447 = vpack.c.b16 %v2159, %v2151
    %v2448 = vpack.c.b16 %v2160, %v2152
    %v2449 = vpack.c.b16 %v2161, %v2153
    %v2450 = vpack.c.b16 %v2170, %v2162
    %v2451 = vpack.c.b16 %v2171, %v2163
    %v2452 = vpack.c.b16 %v2172, %v2164
    %v2453 = vpack.c.b16 %v2173, %v2165
    %v2454 = vpack.c.b16 %v2174, %v2166
    %v2455 = vpack.c.b16 %v2175, %v2167
    %v2456 = vpack.c.b16 %v2176, %v2168
    %v2457 = vpack.c.b16 %v2177, %v2169
    %v2458 = vpack.c.b16 %v2186, %v2178
    %v2459 = vpack.c.b16 %v2187, %v2179
    %v2460 = vpack.c.b16 %v2188, %v2180
    %v2461 = vpack.c.b16 %v2189, %v2181
    %v2462 = vpack.c.b16 %v2190, %v2182
    %v2463 = vpack.c.b16 %v2191, %v2183
    %v2464 = vpack.c.b16 %v2192, %v2184
    %v2465 = vpack.c.b16 %v2193, %v2185
    %v2466 = vpack.c.b16 %v2202, %v2194
    %v2467 = vpack.c.b16 %v2203, %v2195
    %v2468 = vpack.c.b16 %v2204, %v2196
    %v2469 = vpack.c.b16 %v2205, %v2197
    %v2470 = vpack.c.b16 %v2206, %v2198
    %v2471 = vpack.c.b16 %v2207, %v2199
    %v2472 = vpack.c.b16 %v2208, %v2200
    %v2473 = vpack.c.b16 %v2209, %v2201
    %v2474 = vpack.c.b16 %v2218, %v2210
    %v2475 = vpack.c.b16 %v2219, %v2211
    %v2476 = vpack.c.b16 %v2220, %v2212
    %v2477 = vpack.c.b16 %v2221, %v2213
    %v2478 = vpack.c.b16 %v2222, %v2214
    %v2479 = vpack.c.b16 %v2223, %v2215
    %v2480 = vpack.c.b16 %v2224, %v2216
    %v2481 = vpack.c.b16 %v2225, %v2217
    %2738 = vmatprep.subr.bf16.mxu0 %v2227
    %2739 = vmatpush1.bf16.msra.mxu0 %v2226
    %2740 = vmatprep.subr.bf16.mxu0 %v2235
    %2741 = vmatpush1.bf16.msra.mxu0 %v2234
    %2742 = vmatprep.subr.bf16.mxu0 %v2243
    %2743 = vmatpush1.bf16.msra.mxu0 %v2242
    %2744 = vmatprep.subr.bf16.mxu0 %v2251
    %2745 = vmatpush1.bf16.msra.mxu0 %v2250
    %2746 = vmatprep.subr.bf16.mxu0 %v2259
    %2747 = vmatpush1.bf16.msra.mxu0 %v2258
    %2748 = vmatprep.subr.bf16.mxu0 %v2267
    %2749 = vmatpush1.bf16.msra.mxu0 %v2266
    %2750 = vmatprep.subr.bf16.mxu0 %v2275
    %2751 = vmatpush1.bf16.msra.mxu0 %v2274
    %2752 = vmatprep.subr.bf16.mxu0 %v2283
    %2753 = vmatpush1.bf16.msra.mxu0 %v2282
    %2754 = vmatprep.subr.bf16.mxu0 %v2291
    %2755 = vmatpush1.bf16.msra.mxu0 %v2290
    %2756 = vmatprep.subr.bf16.mxu0 %v2299
    %2757 = vmatpush1.bf16.msra.mxu0 %v2298
    %2758 = vmatprep.subr.bf16.mxu0 %v2307
    %2759 = vmatpush1.bf16.msra.mxu0 %v2306
    %2760 = vmatprep.subr.bf16.mxu0 %v2315
    %2761 = vmatpush1.bf16.msra.mxu0 %v2314
    %2762 = vmatprep.subr.bf16.mxu0 %v2323
    %2763 = vmatpush1.bf16.msra.mxu0 %v2322
    %2764 = vmatprep.subr.bf16.mxu0 %v2331
    %2765 = vmatpush1.bf16.msra.mxu0 %v2330
    %2766 = vmatprep.subr.bf16.mxu0 %v2339
    %2767 = vmatpush1.bf16.msra.mxu0 %v2338
    %2768 = vmatprep.subr.bf16.mxu0 %v2347
    %2769 = vmatpush1.bf16.msra.mxu0 %v2346
    %2770 = vmatprep.mubr.bf16.mxu0 %v1427
    %2771 = vmatmul.mubr.bf16.gmra.mrb[0].mxu0 %v1426
    %v2772 = vpop.f32.mrb[0].mxu0
    %v2773 = vadd.f32 %v1341, %v2772
    %v2774 = vpop.f32.mrb[0].mxu0
    %v2775 = vadd.f32 %v1345, %v2774
    %v2776 = vpop.f32.mrb[0].mxu0
    %v2777 = vadd.f32 %v1341, %v2776
    %v2778 = vpop.f32.mrb[0].mxu0
    %v2779 = vadd.f32 %v1345, %v2778
    %2780 = vmatprep.mubr.bf16.mxu0 %v1431
    %2781 = vmatmul.mubr.bf16.gmra.mrb[0].mxu0 %v1430
    %v2782 = vpop.f32.mrb[0].mxu0
    %v2783 = vadd.f32 %v1341, %v2782
    %v2784 = vpop.f32.mrb[0].mxu0
    %v2785 = vadd.f32 %v1345, %v2784
    %v2786 = vpop.f32.mrb[0].mxu0
    %v2787 = vadd.f32 %v1341, %v2786
    %v2788 = vpop.f32.mrb[0].mxu0
    %v2789 = vadd.f32 %v1345, %v2788
    %2790 = vmatprep.mubr.bf16.mxu0 %v1435
    %2791 = vmatmul.mubr.bf16.gmra.mrb[0].mxu0 %v1434
    %v2792 = vpop.f32.mrb[0].mxu0
    %v2793 = vadd.f32 %v1341, %v2792
    %v2794 = vpop.f32.mrb[0].mxu0
    %v2795 = vadd.f32 %v1345, %v2794
    %v2796 = vpop.f32.mrb[0].mxu0
    %v2797 = vadd.f32 %v1341, %v2796
    %v2798 = vpop.f32.mrb[0].mxu0
    %v2799 = vadd.f32 %v1345, %v2798
    %2800 = vmatprep.mubr.bf16.mxu0 %v1439
    %2801 = vmatmul.mubr.bf16.gmra.mrb[0].mxu0 %v1438
    %v2802 = vpop.f32.mrb[0].mxu0
    %v2803 = vadd.f32 %v1341, %v2802
    %v2804 = vpop.f32.mrb[0].mxu0
    %v2805 = vadd.f32 %v1345, %v2804
    %v2806 = vpop.f32.mrb[0].mxu0
    %v2807 = vadd.f32 %v1341, %v2806
    %v2808 = vpop.f32.mrb[0].mxu0
    %v2809 = vadd.f32 %v1345, %v2808
    %2810 = vdwg.mxu0
    %2811 = vmatprep.subr.bf16.mxu0 %v2355
    %2812 = vmatpush1.bf16.msra.mxu0 %v2354
    %2813 = vmatprep.subr.bf16.mxu0 %v2363
    %2814 = vmatpush1.bf16.msra.mxu0 %v2362
    %2815 = vmatprep.subr.bf16.mxu0 %v2371
    %2816 = vmatpush1.bf16.msra.mxu0 %v2370
    %2817 = vmatprep.subr.bf16.mxu0 %v2379
    %2818 = vmatpush1.bf16.msra.mxu0 %v2378
    %2819 = vmatprep.subr.bf16.mxu0 %v2387
    %2820 = vmatpush1.bf16.msra.mxu0 %v2386
    %2821 = vmatprep.subr.bf16.mxu0 %v2395
    %2822 = vmatpush1.bf16.msra.mxu0 %v2394
    %2823 = vmatprep.subr.bf16.mxu0 %v2403
    %2824 = vmatpush1.bf16.msra.mxu0 %v2402
    %2825 = vmatprep.subr.bf16.mxu0 %v2411
    %2826 = vmatpush1.bf16.msra.mxu0 %v2410
    %2827 = vmatprep.subr.bf16.mxu0 %v2419
    %2828 = vmatpush1.bf16.msra.mxu0 %v2418
    %2829 = vmatprep.subr.bf16.mxu0 %v2427
    %2830 = vmatpush1.bf16.msra.mxu0 %v2426
    %2831 = vmatprep.subr.bf16.mxu0 %v2435
    %2832 = vmatpush1.bf16.msra.mxu0 %v2434
    %2833 = vmatprep.subr.bf16.mxu0 %v2443
    %2834 = vmatpush1.bf16.msra.mxu0 %v2442
    %2835 = vmatprep.subr.bf16.mxu0 %v2451
    %2836 = vmatpush1.bf16.msra.mxu0 %v2450
    %2837 = vmatprep.subr.bf16.mxu0 %v2459
    %2838 = vmatpush1.bf16.msra.mxu0 %v2458
    %2839 = vmatprep.subr.bf16.mxu0 %v2467
    %2840 = vmatpush1.bf16.msra.mxu0 %v2466
    %2841 = vmatprep.subr.bf16.mxu0 %v2475
    %2842 = vmatpush1.bf16.msra.mxu0 %v2474
    %2843 = vmatprep.mubr.bf16.mxu0 %v1429
    %2844 = vmatmul.mubr.bf16.gmra.mrb[0].mxu0 %v1428
    %v2845 = vpop.f32.mrb[0].mxu0
    %v2846 = vadd.f32 %v2773, %v2845
    %v2847 = vpop.f32.mrb[0].mxu0
    %v2848 = vadd.f32 %v2775, %v2847
    %v2849 = vpop.f32.mrb[0].mxu0
    %v2850 = vadd.f32 %v2777, %v2849
    %v2851 = vpop.f32.mrb[0].mxu0
    %v2852 = vadd.f32 %v2779, %v2851
    %2853 = vmatprep.mubr.bf16.mxu0 %v1433
    %2854 = vmatmul.mubr.bf16.gmra.mrb[0].mxu0 %v1432
    %v2855 = vpop.f32.mrb[0].mxu0
    %v2856 = vadd.f32 %v2783, %v2855
    %v2857 = vpop.f32.mrb[0].mxu0
    %v2858 = vadd.f32 %v2785, %v2857
    %v2859 = vpop.f32.mrb[0].mxu0
    %v2860 = vadd.f32 %v2787, %v2859
    %v2861 = vpop.f32.mrb[0].mxu0
    %v2862 = vadd.f32 %v2789, %v2861
    %2863 = vmatprep.mubr.bf16.mxu0 %v1437
    %2864 = vmatmul.mubr.bf16.gmra.mrb[0].mxu0 %v1436
    %v2865 = vpop.f32.mrb[0].mxu0
    %v2866 = vadd.f32 %v2793, %v2865
    %v2867 = vpop.f32.mrb[0].mxu0
    %v2868 = vadd.f32 %v2795, %v2867
    %v2869 = vpop.f32.mrb[0].mxu0
    %v2870 = vadd.f32 %v2797, %v2869
    %v2871 = vpop.f32.mrb[0].mxu0
    %v2872 = vadd.f32 %v2799, %v2871
    %2873 = vmatprep.mubr.bf16.mxu0 %v1441
    %2874 = vmatmul.mubr.bf16.gmra.mrb[0].mxu0 %v1440
    %v2875 = vpop.f32.mrb[0].mxu0
    %v2876 = vadd.f32 %v2803, %v2875
    %v2877 = vpop.f32.mrb[0].mxu0
    %v2878 = vadd.f32 %v2805, %v2877
    %v2879 = vpop.f32.mrb[0].mxu0
    %v2880 = vadd.f32 %v2807, %v2879
    %v2881 = vpop.f32.mrb[0].mxu0
    %v2882 = vadd.f32 %v2809, %v2881
    %2883 = vdwg.mxu0
    %2884 = vmatprep.subr.bf16.mxu0 %v2229
    %2885 = vmatpush1.bf16.msra.mxu0 %v2228
    %2886 = vmatprep.subr.bf16.mxu0 %v2237
    %2887 = vmatpush1.bf16.msra.mxu0 %v2236
    %2888 = vmatprep.subr.bf16.mxu0 %v2245
    %2889 = vmatpush1.bf16.msra.mxu0 %v2244
    %2890 = vmatprep.subr.bf16.mxu0 %v2253
    %2891 = vmatpush1.bf16.msra.mxu0 %v2252
    %2892 = vmatprep.subr.bf16.mxu0 %v2261
    %2893 = vmatpush1.bf16.msra.mxu0 %v2260
    %2894 = vmatprep.subr.bf16.mxu0 %v2269
    %2895 = vmatpush1.bf16.msra.mxu0 %v2268
    %2896 = vmatprep.subr.bf16.mxu0 %v2277
    %2897 = vmatpush1.bf16.msra.mxu0 %v2276
    %2898 = vmatprep.subr.bf16.mxu0 %v2285
    %2899 = vmatpush1.bf16.msra.mxu0 %v2284
    %2900 = vmatprep.subr.bf16.mxu0 %v2293
    %2901 = vmatpush1.bf16.msra.mxu0 %v2292
    %2902 = vmatprep.subr.bf16.mxu0 %v2301
    %2903 = vmatpush1.bf16.msra.mxu0 %v2300
    %2904 = vmatprep.subr.bf16.mxu0 %v2309
    %2905 = vmatpush1.bf16.msra.mxu0 %v2308
    %2906 = vmatprep.subr.bf16.mxu0 %v2317
    %2907 = vmatpush1.bf16.msra.mxu0 %v2316
    %2908 = vmatprep.subr.bf16.mxu0 %v2325
    %2909 = vmatpush1.bf16.msra.mxu0 %v2324
    %2910 = vmatprep.subr.bf16.mxu0 %v2333
    %2911 = vmatpush1.bf16.msra.mxu0 %v2332
    %2912 = vmatprep.subr.bf16.mxu0 %v2341
    %2913 = vmatpush1.bf16.msra.mxu0 %v2340
    %2914 = vmatprep.subr.bf16.mxu0 %v2349
    %2915 = vmatpush1.bf16.msra.mxu0 %v2348
    %2916 = vmatprep.mubr.bf16.mxu0 %v1427
    %2917 = vmatmul.mubr.bf16.gmra.mrb[0].mxu0 %v1426
    %v2918 = vpop.f32.mrb[0].mxu0
    %v2919 = vadd.f32 %v1349, %v2918
    %v2920 = vpop.f32.mrb[0].mxu0
    %v2921 = vadd.f32 %v1353, %v2920
    %v2922 = vpop.f32.mrb[0].mxu0
    %v2923 = vadd.f32 %v1349, %v2922
    %v2924 = vpop.f32.mrb[0].mxu0
    %v2925 = vadd.f32 %v1353, %v2924
    %2926 = vmatprep.mubr.bf16.mxu0 %v1431
    %2927 = vmatmul.mubr.bf16.gmra.mrb[0].mxu0 %v1430
    %v2928 = vpop.f32.mrb[0].mxu0
    %v2929 = vadd.f32 %v1349, %v2928
    %v2930 = vpop.f32.mrb[0].mxu0
    %v2931 = vadd.f32 %v1353, %v2930
    %v2932 = vpop.f32.mrb[0].mxu0
    %v2933 = vadd.f32 %v1349, %v2932
    %v2934 = vpop.f32.mrb[0].mxu0
    %v2935 = vadd.f32 %v1353, %v2934
    %2936 = vmatprep.mubr.bf16.mxu0 %v1435
    %2937 = vmatmul.mubr.bf16.gmra.mrb[0].mxu0 %v1434
    %v2938 = vpop.f32.mrb[0].mxu0
    %v2939 = vadd.f32 %v1349, %v2938
    %v2940 = vpop.f32.mrb[0].mxu0
    %v2941 = vadd.f32 %v1353, %v2940
    %v2942 = vpop.f32.mrb[0].mxu0
    %v2943 = vadd.f32 %v1349, %v2942
    %v2944 = vpop.f32.mrb[0].mxu0
    %v2945 = vadd.f32 %v1353, %v2944
    %2946 = vmatprep.mubr.bf16.mxu0 %v1439
    %2947 = vmatmul.mubr.bf16.gmra.mrb[0].mxu0 %v1438
    %v2948 = vpop.f32.mrb[0].mxu0
    %v2949 = vadd.f32 %v1349, %v2948
    %v2950 = vpop.f32.mrb[0].mxu0
    %v2951 = vadd.f32 %v1353, %v2950
    %v2952 = vpop.f32.mrb[0].mxu0
    %v2953 = vadd.f32 %v1349, %v2952
    %v2954 = vpop.f32.mrb[0].mxu0
    %v2955 = vadd.f32 %v1353, %v2954
    %2956 = vdwg.mxu0
    %2957 = vmatprep.subr.bf16.mxu0 %v2357
    %2958 = vmatpush1.bf16.msra.mxu0 %v2356
    %2959 = vmatprep.subr.bf16.mxu0 %v2365
    %2960 = vmatpush1.bf16.msra.mxu0 %v2364
    %2961 = vmatprep.subr.bf16.mxu0 %v2373
    %2962 = vmatpush1.bf16.msra.mxu0 %v2372
    %2963 = vmatprep.subr.bf16.mxu0 %v2381
    %2964 = vmatpush1.bf16.msra.mxu0 %v2380
    %2965 = vmatprep.subr.bf16.mxu0 %v2389
    %2966 = vmatpush1.bf16.msra.mxu0 %v2388
    %2967 = vmatprep.subr.bf16.mxu0 %v2397
    %2968 = vmatpush1.bf16.msra.mxu0 %v2396
    %2969 = vmatprep.subr.bf16.mxu0 %v2405
    %2970 = vmatpush1.bf16.msra.mxu0 %v2404
    %2971 = vmatprep.subr.bf16.mxu0 %v2413
    %2972 = vmatpush1.bf16.msra.mxu0 %v2412
    %2973 = vmatprep.subr.bf16.mxu0 %v2421
    %2974 = vmatpush1.bf16.msra.mxu0 %v2420
    %2975 = vmatprep.subr.bf16.mxu0 %v2429
    %2976 = vmatpush1.bf16.msra.mxu0 %v2428
    %2977 = vmatprep.subr.bf16.mxu0 %v2437
    %2978 = vmatpush1.bf16.msra.mxu0 %v2436
    %2979 = vmatprep.subr.bf16.mxu0 %v2445
    %2980 = vmatpush1.bf16.msra.mxu0 %v2444
    %2981 = vmatprep.subr.bf16.mxu0 %v2453
    %2982 = vmatpush1.bf16.msra.mxu0 %v2452
    %2983 = vmatprep.subr.bf16.mxu0 %v2461
    %2984 = vmatpush1.bf16.msra.mxu0 %v2460
    %2985 = vmatprep.subr.bf16.mxu0 %v2469
    %2986 = vmatpush1.bf16.msra.mxu0 %v2468
    %2987 = vmatprep.subr.bf16.mxu0 %v2477
    %2988 = vmatpush1.bf16.msra.mxu0 %v2476
    %2989 = vmatprep.mubr.bf16.mxu0 %v1429
    %2990 = vmatmul.mubr.bf16.gmra.mrb[0].mxu0 %v1428
    %v2991 = vpop.f32.mrb[0].mxu0
    %v2992 = vadd.f32 %v2919, %v2991
    %v2993 = vpop.f32.mrb[0].mxu0
    %v2994 = vadd.f32 %v2921, %v2993
    %v2995 = vpop.f32.mrb[0].mxu0
    %v2996 = vadd.f32 %v2923, %v2995
    %v2997 = vpop.f32.mrb[0].mxu0
    %v2998 = vadd.f32 %v2925, %v2997
    %2999 = vmatprep.mubr.bf16.mxu0 %v1433
    %3000 = vmatmul.mubr.bf16.gmra.mrb[0].mxu0 %v1432
    %v3001 = vpop.f32.mrb[0].mxu0
    %v3002 = vadd.f32 %v2929, %v3001
    %v3003 = vpop.f32.mrb[0].mxu0
    %v3004 = vadd.f32 %v2931, %v3003
    %v3005 = vpop.f32.mrb[0].mxu0
    %v3006 = vadd.f32 %v2933, %v3005
    %v3007 = vpop.f32.mrb[0].mxu0
    %v3008 = vadd.f32 %v2935, %v3007
    %3009 = vmatprep.mubr.bf16.mxu0 %v1437
    %3010 = vmatmul.mubr.bf16.gmra.mrb[0].mxu0 %v1436
    %v3011 = vpop.f32.mrb[0].mxu0
    %v3012 = vadd.f32 %v2939, %v3011
    %v3013 = vpop.f32.mrb[0].mxu0
    %v3014 = vadd.f32 %v2941, %v3013
    %v3015 = vpop.f32.mrb[0].mxu0
    %v3016 = vadd.f32 %v2943, %v3015
    %v3017 = vpop.f32.mrb[0].mxu0
    %v3018 = vadd.f32 %v2945, %v3017
    %3019 = vmatprep.mubr.bf16.mxu0 %v1441
    %3020 = vmatmul.mubr.bf16.gmra.mrb[0].mxu0 %v1440
    %v3021 = vpop.f32.mrb[0].mxu0
    %v3022 = vadd.f32 %v2949, %v3021
    %v3023 = vpop.f32.mrb[0].mxu0
    %v3024 = vadd.f32 %v2951, %v3023
    %v3025 = vpop.f32.mrb[0].mxu0
    %v3026 = vadd.f32 %v2953, %v3025
    %v3027 = vpop.f32.mrb[0].mxu0
    %v3028 = vadd.f32 %v2955, %v3027
    %3029 = vdwg.mxu0
    %3030 = vmatprep.subr.bf16.mxu0 %v2231
    %3031 = vmatpush1.bf16.msra.mxu0 %v2230
    %3032 = vmatprep.subr.bf16.mxu0 %v2239
    %3033 = vmatpush1.bf16.msra.mxu0 %v2238
    %3034 = vmatprep.subr.bf16.mxu0 %v2247
    %3035 = vmatpush1.bf16.msra.mxu0 %v2246
    %3036 = vmatprep.subr.bf16.mxu0 %v2255
    %3037 = vmatpush1.bf16.msra.mxu0 %v2254
    %3038 = vmatprep.subr.bf16.mxu0 %v2263
    %3039 = vmatpush1.bf16.msra.mxu0 %v2262
    %3040 = vmatprep.subr.bf16.mxu0 %v2271
    %3041 = vmatpush1.bf16.msra.mxu0 %v2270
    %3042 = vmatprep.subr.bf16.mxu0 %v2279
    %3043 = vmatpush1.bf16.msra.mxu0 %v2278
    %3044 = vmatprep.subr.bf16.mxu0 %v2287
    %3045 = vmatpush1.bf16.msra.mxu0 %v2286
    %3046 = vmatprep.subr.bf16.mxu0 %v2295
    %3047 = vmatpush1.bf16.msra.mxu0 %v2294
    %3048 = vmatprep.subr.bf16.mxu0 %v2303
    %3049 = vmatpush1.bf16.msra.mxu0 %v2302
    %3050 = vmatprep.subr.bf16.mxu0 %v2311
    %3051 = vmatpush1.bf16.msra.mxu0 %v2310
    %3052 = vmatprep.subr.bf16.mxu0 %v2319
    %3053 = vmatpush1.bf16.msra.mxu0 %v2318
    %3054 = vmatprep.subr.bf16.mxu0 %v2327
    %3055 = vmatpush1.bf16.msra.mxu0 %v2326
    %3056 = vmatprep.subr.bf16.mxu0 %v2335
    %3057 = vmatpush1.bf16.msra.mxu0 %v2334
    %3058 = vmatprep.subr.bf16.mxu0 %v2343
    %3059 = vmatpush1.bf16.msra.mxu0 %v2342
    %3060 = vmatprep.subr.bf16.mxu0 %v2351
    %3061 = vmatpush1.bf16.msra.mxu0 %v2350
    %3062 = vmatprep.mubr.bf16.mxu0 %v1427
    %3063 = vmatmul.mubr.bf16.gmra.mrb[0].mxu0 %v1426
    %v3064 = vpop.f32.mrb[0].mxu0
    %v3065 = vadd.f32 %v1357, %v3064
    %v3066 = vpop.f32.mrb[0].mxu0
    %v3067 = vadd.f32 %v1361, %v3066
    %v3068 = vpop.f32.mrb[0].mxu0
    %v3069 = vadd.f32 %v1357, %v3068
    %v3070 = vpop.f32.mrb[0].mxu0
    %v3071 = vadd.f32 %v1361, %v3070
    %3072 = vmatprep.mubr.bf16.mxu0 %v1431
    %3073 = vmatmul.mubr.bf16.gmra.mrb[0].mxu0 %v1430
    %v3074 = vpop.f32.mrb[0].mxu0
    %v3075 = vadd.f32 %v1357, %v3074
    %v3076 = vpop.f32.mrb[0].mxu0
    %v3077 = vadd.f32 %v1361, %v3076
    %v3078 = vpop.f32.mrb[0].mxu0
    %v3079 = vadd.f32 %v1357, %v3078
    %v3080 = vpop.f32.mrb[0].mxu0
    %v3081 = vadd.f32 %v1361, %v3080
    %3082 = vmatprep.mubr.bf16.mxu0 %v1435
    %3083 = vmatmul.mubr.bf16.gmra.mrb[0].mxu0 %v1434
    %v3084 = vpop.f32.mrb[0].mxu0
    %v3085 = vadd.f32 %v1357, %v3084
    %v3086 = vpop.f32.mrb[0].mxu0
    %v3087 = vadd.f32 %v1361, %v3086
    %v3088 = vpop.f32.mrb[0].mxu0
    %v3089 = vadd.f32 %v1357, %v3088
    %v3090 = vpop.f32.mrb[0].mxu0
    %v3091 = vadd.f32 %v1361, %v3090
    %3092 = vmatprep.mubr.bf16.mxu0 %v1439
    %3093 = vmatmul.mubr.bf16.gmra.mrb[0].mxu0 %v1438
    %v3094 = vpop.f32.mrb[0].mxu0
    %v3095 = vadd.f32 %v1357, %v3094
    %v3096 = vpop.f32.mrb[0].mxu0
    %v3097 = vadd.f32 %v1361, %v3096
    %v3098 = vpop.f32.mrb[0].mxu0
    %v3099 = vadd.f32 %v1357, %v3098
    %v3100 = vpop.f32.mrb[0].mxu0
    %v3101 = vadd.f32 %v1361, %v3100
    %3102 = vdwg.mxu0
    %3103 = vmatprep.subr.bf16.mxu0 %v2359
    %3104 = vmatpush1.bf16.msra.mxu0 %v2358
    %3105 = vmatprep.subr.bf16.mxu0 %v2367
    %3106 = vmatpush1.bf16.msra.mxu0 %v2366
    %3107 = vmatprep.subr.bf16.mxu0 %v2375
    %3108 = vmatpush1.bf16.msra.mxu0 %v2374
    %3109 = vmatprep.subr.bf16.mxu0 %v2383
    %3110 = vmatpush1.bf16.msra.mxu0 %v2382
    %3111 = vmatprep.subr.bf16.mxu0 %v2391
    %3112 = vmatpush1.bf16.msra.mxu0 %v2390
    %3113 = vmatprep.subr.bf16.mxu0 %v2399
    %3114 = vmatpush1.bf16.msra.mxu0 %v2398
    %3115 = vmatprep.subr.bf16.mxu0 %v2407
    %3116 = vmatpush1.bf16.msra.mxu0 %v2406
    %3117 = vmatprep.subr.bf16.mxu0 %v2415
    %3118 = vmatpush1.bf16.msra.mxu0 %v2414
    %3119 = vmatprep.subr.bf16.mxu0 %v2423
    %3120 = vmatpush1.bf16.msra.mxu0 %v2422
    %3121 = vmatprep.subr.bf16.mxu0 %v2431
    %3122 = vmatpush1.bf16.msra.mxu0 %v2430
    %3123 = vmatprep.subr.bf16.mxu0 %v2439
    %3124 = vmatpush1.bf16.msra.mxu0 %v2438
    %3125 = vmatprep.subr.bf16.mxu0 %v2447
    %3126 = vmatpush1.bf16.msra.mxu0 %v2446
    %3127 = vmatprep.subr.bf16.mxu0 %v2455
    %3128 = vmatpush1.bf16.msra.mxu0 %v2454
    %3129 = vmatprep.subr.bf16.mxu0 %v2463
    %3130 = vmatpush1.bf16.msra.mxu0 %v2462
    %3131 = vmatprep.subr.bf16.mxu0 %v2471
    %3132 = vmatpush1.bf16.msra.mxu0 %v2470
    %3133 = vmatprep.subr.bf16.mxu0 %v2479
    %3134 = vmatpush1.bf16.msra.mxu0 %v2478
    %3135 = vmatprep.mubr.bf16.mxu0 %v1429
    %3136 = vmatmul.mubr.bf16.gmra.mrb[0].mxu0 %v1428
    %v3137 = vpop.f32.mrb[0].mxu0
    %v3138 = vadd.f32 %v3065, %v3137
    %v3139 = vpop.f32.mrb[0].mxu0
    %v3140 = vadd.f32 %v3067, %v3139
    %v3141 = vpop.f32.mrb[0].mxu0
    %v3142 = vadd.f32 %v3069, %v3141
    %v3143 = vpop.f32.mrb[0].mxu0
    %v3144 = vadd.f32 %v3071, %v3143
    %3145 = vmatprep.mubr.bf16.mxu0 %v1433
    %3146 = vmatmul.mubr.bf16.gmra.mrb[0].mxu0 %v1432
    %v3147 = vpop.f32.mrb[0].mxu0
    %v3148 = vadd.f32 %v3075, %v3147
    %v3149 = vpop.f32.mrb[0].mxu0
    %v3150 = vadd.f32 %v3077, %v3149
    %v3151 = vpop.f32.mrb[0].mxu0
    %v3152 = vadd.f32 %v3079, %v3151
    %v3153 = vpop.f32.mrb[0].mxu0
    %v3154 = vadd.f32 %v3081, %v3153
    %3155 = vmatprep.mubr.bf16.mxu0 %v1437
    %3156 = vmatmul.mubr.bf16.gmra.mrb[0].mxu0 %v1436
    %v3157 = vpop.f32.mrb[0].mxu0
    %v3158 = vadd.f32 %v3085, %v3157
    %v3159 = vpop.f32.mrb[0].mxu0
    %v3160 = vadd.f32 %v3087, %v3159
    %v3161 = vpop.f32.mrb[0].mxu0
    %v3162 = vadd.f32 %v3089, %v3161
    %v3163 = vpop.f32.mrb[0].mxu0
    %v3164 = vadd.f32 %v3091, %v3163
    %3165 = vmatprep.mubr.bf16.mxu0 %v1441
    %3166 = vmatmul.mubr.bf16.gmra.mrb[0].mxu0 %v1440
    %v3167 = vpop.f32.mrb[0].mxu0
    %v3168 = vadd.f32 %v3095, %v3167
    %v3169 = vpop.f32.mrb[0].mxu0
    %v3170 = vadd.f32 %v3097, %v3169
    %v3171 = vpop.f32.mrb[0].mxu0
    %v3172 = vadd.f32 %v3099, %v3171
    %v3173 = vpop.f32.mrb[0].mxu0
    %v3174 = vadd.f32 %v3101, %v3173
    %3175 = vdwg.mxu0
    %3176 = vmatprep.subr.bf16.mxu0 %v2233
    %3177 = vmatpush1.bf16.msra.mxu0 %v2232
    %3178 = vmatprep.subr.bf16.mxu0 %v2241
    %3179 = vmatpush1.bf16.msra.mxu0 %v2240
    %3180 = vmatprep.subr.bf16.mxu0 %v2249
    %3181 = vmatpush1.bf16.msra.mxu0 %v2248
    %3182 = vmatprep.subr.bf16.mxu0 %v2257
    %3183 = vmatpush1.bf16.msra.mxu0 %v2256
    %3184 = vmatprep.subr.bf16.mxu0 %v2265
    %3185 = vmatpush1.bf16.msra.mxu0 %v2264
    %3186 = vmatprep.subr.bf16.mxu0 %v2273
    %3187 = vmatpush1.bf16.msra.mxu0 %v2272
    %3188 = vmatprep.subr.bf16.mxu0 %v2281
    %3189 = vmatpush1.bf16.msra.mxu0 %v2280
    %3190 = vmatprep.subr.bf16.mxu0 %v2289
    %3191 = vmatpush1.bf16.msra.mxu0 %v2288
    %3192 = vmatprep.subr.bf16.mxu0 %v2297
    %3193 = vmatpush1.bf16.msra.mxu0 %v2296
    %3194 = vmatprep.subr.bf16.mxu0 %v2305
    %3195 = vmatpush1.bf16.msra.mxu0 %v2304
    %3196 = vmatprep.subr.bf16.mxu0 %v2313
    %3197 = vmatpush1.bf16.msra.mxu0 %v2312
    %3198 = vmatprep.subr.bf16.mxu0 %v2321
    %3199 = vmatpush1.bf16.msra.mxu0 %v2320
    %3200 = vmatprep.subr.bf16.mxu0 %v2329
    %3201 = vmatpush1.bf16.msra.mxu0 %v2328
    %3202 = vmatprep.subr.bf16.mxu0 %v2337
    %3203 = vmatpush1.bf16.msra.mxu0 %v2336
    %3204 = vmatprep.subr.bf16.mxu0 %v2345
    %3205 = vmatpush1.bf16.msra.mxu0 %v2344
    %3206 = vmatprep.subr.bf16.mxu0 %v2353
    %3207 = vmatpush1.bf16.msra.mxu0 %v2352
    %3208 = vmatprep.mubr.bf16.mxu0 %v1427
    %3209 = vmatmul.mubr.bf16.gmra.mrb[0].mxu0 %v1426
    %v3210 = vpop.f32.mrb[0].mxu0
    %v3211 = vadd.f32 %v1365, %v3210
    %v3212 = vpop.f32.mrb[0].mxu0
    %v3213 = vadd.f32 %v1369, %v3212
    %v3214 = vpop.f32.mrb[0].mxu0
    %v3215 = vadd.f32 %v1365, %v3214
    %v3216 = vpop.f32.mrb[0].mxu0
    %v3217 = vadd.f32 %v1369, %v3216
    %3218 = vmatprep.mubr.bf16.mxu0 %v1431
    %3219 = vmatmul.mubr.bf16.gmra.mrb[0].mxu0 %v1430
    %v3220 = vpop.f32.mrb[0].mxu0
    %v3221 = vadd.f32 %v1365, %v3220
    %v3222 = vpop.f32.mrb[0].mxu0
    %v3223 = vadd.f32 %v1369, %v3222
    %v3224 = vpop.f32.mrb[0].mxu0
    %v3225 = vadd.f32 %v1365, %v3224
    %v3226 = vpop.f32.mrb[0].mxu0
    %v3227 = vadd.f32 %v1369, %v3226
    %3228 = vmatprep.mubr.bf16.mxu0 %v1435
    %3229 = vmatmul.mubr.bf16.gmra.mrb[0].mxu0 %v1434
    %v3230 = vpop.f32.mrb[0].mxu0
    %v3231 = vadd.f32 %v1365, %v3230
    %v3232 = vpop.f32.mrb[0].mxu0
    %v3233 = vadd.f32 %v1369, %v3232
    %v3234 = vpop.f32.mrb[0].mxu0
    %v3235 = vadd.f32 %v1365, %v3234
    %v3236 = vpop.f32.mrb[0].mxu0
    %v3237 = vadd.f32 %v1369, %v3236
    %3238 = vmatprep.mubr.bf16.mxu0 %v1439
    %3239 = vmatmul.mubr.bf16.gmra.mrb[0].mxu0 %v1438
    %v3240 = vpop.f32.mrb[0].mxu0
    %v3241 = vadd.f32 %v1365, %v3240
    %v3242 = vpop.f32.mrb[0].mxu0
    %v3243 = vadd.f32 %v1369, %v3242
    %v3244 = vpop.f32.mrb[0].mxu0
    %v3245 = vadd.f32 %v1365, %v3244
    %v3246 = vpop.f32.mrb[0].mxu0
    %v3247 = vadd.f32 %v1369, %v3246
    %3248 = vdwg.mxu0
    %3249 = vmatprep.subr.bf16.mxu0 %v2361
    %3250 = vmatpush1.bf16.msra.mxu0 %v2360
    %3251 = vmatprep.subr.bf16.mxu0 %v2369
    %3252 = vmatpush1.bf16.msra.mxu0 %v2368
    %3253 = vmatprep.subr.bf16.mxu0 %v2377
    %3254 = vmatpush1.bf16.msra.mxu0 %v2376
    %3255 = vmatprep.subr.bf16.mxu0 %v2385
    %3256 = vmatpush1.bf16.msra.mxu0 %v2384
    %3257 = vmatprep.subr.bf16.mxu0 %v2393
    %3258 = vmatpush1.bf16.msra.mxu0 %v2392
    %3259 = vmatprep.subr.bf16.mxu0 %v2401
    %3260 = vmatpush1.bf16.msra.mxu0 %v2400
    %3261 = vmatprep.subr.bf16.mxu0 %v2409
    %3262 = vmatpush1.bf16.msra.mxu0 %v2408
    %3263 = vmatprep.subr.bf16.mxu0 %v2417
    %3264 = vmatpush1.bf16.msra.mxu0 %v2416
    %3265 = vmatprep.subr.bf16.mxu0 %v2425
    %3266 = vmatpush1.bf16.msra.mxu0 %v2424
    %3267 = vmatprep.subr.bf16.mxu0 %v2433
    %3268 = vmatpush1.bf16.msra.mxu0 %v2432
    %3269 = vmatprep.subr.bf16.mxu0 %v2441
    %3270 = vmatpush1.bf16.msra.mxu0 %v2440
    %3271 = vmatprep.subr.bf16.mxu0 %v2449
    %3272 = vmatpush1.bf16.msra.mxu0 %v2448
    %3273 = vmatprep.subr.bf16.mxu0 %v2457
    %3274 = vmatpush1.bf16.msra.mxu0 %v2456
    %3275 = vmatprep.subr.bf16.mxu0 %v2465
    %3276 = vmatpush1.bf16.msra.mxu0 %v2464
    %3277 = vmatprep.subr.bf16.mxu0 %v2473
    %3278 = vmatpush1.bf16.msra.mxu0 %v2472
    %3279 = vmatprep.subr.bf16.mxu0 %v2481
    %3280 = vmatpush1.bf16.msra.mxu0 %v2480
    %3281 = vmatprep.mubr.bf16.mxu0 %v1429
    %3282 = vmatmul.mubr.bf16.gmra.mrb[0].mxu0 %v1428
    %v3283 = vpop.f32.mrb[0].mxu0
    %v3284 = vadd.f32 %v3211, %v3283
    %v3285 = vpop.f32.mrb[0].mxu0
    %v3286 = vadd.f32 %v3213, %v3285
    %v3287 = vpop.f32.mrb[0].mxu0
    %v3288 = vadd.f32 %v3215, %v3287
    %v3289 = vpop.f32.mrb[0].mxu0
    %v3290 = vadd.f32 %v3217, %v3289
    %3291 = vmatprep.mubr.bf16.mxu0 %v1433
    %3292 = vmatmul.mubr.bf16.gmra.mrb[0].mxu0 %v1432
    %v3293 = vpop.f32.mrb[0].mxu0
    %v3294 = vadd.f32 %v3221, %v3293
    %v3295 = vpop.f32.mrb[0].mxu0
    %v3296 = vadd.f32 %v3223, %v3295
    %v3297 = vpop.f32.mrb[0].mxu0
    %v3298 = vadd.f32 %v3225, %v3297
    %v3299 = vpop.f32.mrb[0].mxu0
    %v3300 = vadd.f32 %v3227, %v3299
    %3301 = vmatprep.mubr.bf16.mxu0 %v1437
    %3302 = vmatmul.mubr.bf16.gmra.mrb[0].mxu0 %v1436
    %v3303 = vpop.f32.mrb[0].mxu0
    %v3304 = vadd.f32 %v3231, %v3303
    %v3305 = vpop.f32.mrb[0].mxu0
    %v3306 = vadd.f32 %v3233, %v3305
    %v3307 = vpop.f32.mrb[0].mxu0
    %v3308 = vadd.f32 %v3235, %v3307
    %v3309 = vpop.f32.mrb[0].mxu0
    %v3310 = vadd.f32 %v3237, %v3309
    %3311 = vmatprep.mubr.bf16.mxu0 %v1441
    %3312 = vmatmul.mubr.bf16.gmra.mrb[0].mxu0 %v1440
    %v3313 = vpop.f32.mrb[0].mxu0
    %v3314 = vadd.f32 %v3241, %v3313
    %v3315 = vpop.f32.mrb[0].mxu0
    %v3316 = vadd.f32 %v3243, %v3315
    %v3317 = vpop.f32.mrb[0].mxu0
    %v3318 = vadd.f32 %v3245, %v3317
    %v3319 = vpop.f32.mrb[0].mxu0
    %v3320 = vadd.f32 %v3247, %v3319
    %3321 = vdwg.mxu0
    %v3326 = vcombine.low %v992, %v994
    %v3327 = vcombine.high %v992, %v994
    %v3328 = vcombine.low %v1074, %v1076
    %v3329 = vcombine.high %v1074, %v1076
    %v3331 = vunpack.c.l.s4 1966171168
    %v3332 = vunpack.c.0.s8 %v3331
    %v3333 = vlaneseq
    %v3334 = vshrl.u32 %v3333, 7
    %v3335 = vsub.s32 %v3332, %v3334
    %v3336 = vrot.slane %v3326, %v3335
    %v3338 = vunpack.c.l.s4 1966171168
    %v3339 = vunpack.c.0.s8 %v3338
    %v3340 = vlaneseq
    %v3341 = vshrl.u32 %v3340, 7
    %v3342 = vsub.s32 %v3339, %v3341
    %v3343 = vrot.slane %v3327, %v3342
    %v3345 = vunpack.c.l.s4 1966171168
    %v3346 = vunpack.c.0.s8 %v3345
    %v3347 = vlaneseq
    %v3348 = vshrl.u32 %v3347, 7
    %v3349 = vsub.s32 %v3346, %v3348
    %v3350 = vrot.slane %v3328, %v3349
    %v3352 = vunpack.c.l.s4 1966171168
    %v3353 = vunpack.c.0.s8 %v3352
    %v3354 = vlaneseq
    %v3355 = vshrl.u32 %v3354, 7
    %v3356 = vsub.s32 %v3353, %v3355
    %v3357 = vrot.slane %v3329, %v3356
    %v3358 = vcombine.low %v3336, %v3350
    %v3359 = vcombine.high %v3336, %v3350
    %v3360 = vcombine.low %v3343, %v3357
    %v3361 = vcombine.high %v3343, %v3357
    %v3363 = vunpack.c.l.s4 1966171168
    %v3364 = vunpack.c.0.s8 %v3363
    %v3365 = vlaneseq
    %v3366 = vshrl.u32 %v3365, 7
    %v3367 = vsub.s32 %v3364, %v3366
    %v3368 = vrot.slane %v3358, %v3367
    %v3370 = vunpack.c.l.s4 1966171168
    %v3371 = vunpack.c.0.s8 %v3370
    %v3372 = vlaneseq
    %v3373 = vshrl.u32 %v3372, 7
    %v3374 = vsub.s32 %v3371, %v3373
    %v3375 = vrot.slane %v3360, %v3374
    %v3377 = vunpack.c.l.s4 1966171168
    %v3378 = vunpack.c.0.s8 %v3377
    %v3379 = vlaneseq
    %v3380 = vshrl.u32 %v3379, 7
    %v3381 = vsub.s32 %v3378, %v3380
    %v3382 = vrot.slane %v3359, %v3381
    %v3384 = vunpack.c.l.s4 1966171168
    %v3385 = vunpack.c.0.s8 %v3384
    %v3386 = vlaneseq
    %v3387 = vshrl.u32 %v3386, 7
    %v3388 = vsub.s32 %v3385, %v3387
    %v3389 = vrot.slane %v3361, %v3388
    %v3390 = vcombine.high %v3368, %v3368
    %v3391 = vcombine.high %v3375, %v3375
    %v3392 = vcombine.high %v3382, %v3382
    %v3393 = vcombine.high %v3389, %v3389
    %v3394 = vlaneseq
    %v3395 = vshrl.u32 %v3394, 7
    %v3396 = vsub.s32 0, %v3395
    %v3397 = vrot.slane %v3368, %v3396
    %v3398 = vlaneseq
    %v3399 = vshrl.u32 %v3398, 7
    %v3400 = vsub.s32 1, %v3399
    %v3401 = vrot.slane %v3368, %v3400
    %v3402 = vlaneseq
    %v3403 = vshrl.u32 %v3402, 7
    %v3404 = vsub.s32 2, %v3403
    %v3405 = vrot.slane %v3368, %v3404
    %v3406 = vlaneseq
    %v3407 = vshrl.u32 %v3406, 7
    %v3408 = vsub.s32 3, %v3407
    %v3409 = vrot.slane %v3368, %v3408
    %v3410 = vlaneseq
    %v3411 = vshrl.u32 %v3410, 7
    %v3412 = vsub.s32 0, %v3411
    %v3413 = vrot.slane %v3382, %v3412
    %v3414 = vlaneseq
    %v3415 = vshrl.u32 %v3414, 7
    %v3416 = vsub.s32 1, %v3415
    %v3417 = vrot.slane %v3382, %v3416
    %v3418 = vlaneseq
    %v3419 = vshrl.u32 %v3418, 7
    %v3420 = vsub.s32 2, %v3419
    %v3421 = vrot.slane %v3382, %v3420
    %v3422 = vlaneseq
    %v3423 = vshrl.u32 %v3422, 7
    %v3424 = vsub.s32 3, %v3423
    %v3425 = vrot.slane %v3382, %v3424
    %v3426 = vlaneseq
    %v3427 = vshrl.u32 %v3426, 7
    %v3428 = vsub.s32 0, %v3427
    %v3429 = vrot.slane %v3390, %v3428
    %v3430 = vlaneseq
    %v3431 = vshrl.u32 %v3430, 7
    %v3432 = vsub.s32 1, %v3431
    %v3433 = vrot.slane %v3390, %v3432
    %v3434 = vlaneseq
    %v3435 = vshrl.u32 %v3434, 7
    %v3436 = vsub.s32 2, %v3435
    %v3437 = vrot.slane %v3390, %v3436
    %v3438 = vlaneseq
    %v3439 = vshrl.u32 %v3438, 7
    %v3440 = vsub.s32 3, %v3439
    %v3441 = vrot.slane %v3390, %v3440
    %v3442 = vlaneseq
    %v3443 = vshrl.u32 %v3442, 7
    %v3444 = vsub.s32 0, %v3443
    %v3445 = vrot.slane %v3392, %v3444
    %v3446 = vlaneseq
    %v3447 = vshrl.u32 %v3446, 7
    %v3448 = vsub.s32 1, %v3447
    %v3449 = vrot.slane %v3392, %v3448
    %v3450 = vlaneseq
    %v3451 = vshrl.u32 %v3450, 7
    %v3452 = vsub.s32 2, %v3451
    %v3453 = vrot.slane %v3392, %v3452
    %v3454 = vlaneseq
    %v3455 = vshrl.u32 %v3454, 7
    %v3456 = vsub.s32 3, %v3455
    %v3457 = vrot.slane %v3392, %v3456
    %v3458 = vlaneseq
    %v3459 = vshrl.u32 %v3458, 7
    %v3460 = vsub.s32 0, %v3459
    %v3461 = vrot.slane %v3375, %v3460
    %v3462 = vlaneseq
    %v3463 = vshrl.u32 %v3462, 7
    %v3464 = vsub.s32 1, %v3463
    %v3465 = vrot.slane %v3375, %v3464
    %v3466 = vlaneseq
    %v3467 = vshrl.u32 %v3466, 7
    %v3468 = vsub.s32 2, %v3467
    %v3469 = vrot.slane %v3375, %v3468
    %v3470 = vlaneseq
    %v3471 = vshrl.u32 %v3470, 7
    %v3472 = vsub.s32 3, %v3471
    %v3473 = vrot.slane %v3375, %v3472
    %v3474 = vlaneseq
    %v3475 = vshrl.u32 %v3474, 7
    %v3476 = vsub.s32 0, %v3475
    %v3477 = vrot.slane %v3389, %v3476
    %v3478 = vlaneseq
    %v3479 = vshrl.u32 %v3478, 7
    %v3480 = vsub.s32 1, %v3479
    %v3481 = vrot.slane %v3389, %v3480
    %v3482 = vlaneseq
    %v3483 = vshrl.u32 %v3482, 7
    %v3484 = vsub.s32 2, %v3483
    %v3485 = vrot.slane %v3389, %v3484
    %v3486 = vlaneseq
    %v3487 = vshrl.u32 %v3486, 7
    %v3488 = vsub.s32 3, %v3487
    %v3489 = vrot.slane %v3389, %v3488
    %v3490 = vlaneseq
    %v3491 = vshrl.u32 %v3490, 7
    %v3492 = vsub.s32 0, %v3491
    %v3493 = vrot.slane %v3391, %v3492
    %v3494 = vlaneseq
    %v3495 = vshrl.u32 %v3494, 7
    %v3496 = vsub.s32 1, %v3495
    %v3497 = vrot.slane %v3391, %v3496
    %v3498 = vlaneseq
    %v3499 = vshrl.u32 %v3498, 7
    %v3500 = vsub.s32 2, %v3499
    %v3501 = vrot.slane %v3391, %v3500
    %v3502 = vlaneseq
    %v3503 = vshrl.u32 %v3502, 7
    %v3504 = vsub.s32 3, %v3503
    %v3505 = vrot.slane %v3391, %v3504
    %v3506 = vlaneseq
    %v3507 = vshrl.u32 %v3506, 7
    %v3508 = vsub.s32 0, %v3507
    %v3509 = vrot.slane %v3393, %v3508
    %v3510 = vlaneseq
    %v3511 = vshrl.u32 %v3510, 7
    %v3512 = vsub.s32 1, %v3511
    %v3513 = vrot.slane %v3393, %v3512
    %v3514 = vlaneseq
    %v3515 = vshrl.u32 %v3514, 7
    %v3516 = vsub.s32 2, %v3515
    %v3517 = vrot.slane %v3393, %v3516
    %v3518 = vlaneseq
    %v3519 = vshrl.u32 %v3518, 7
    %v3520 = vsub.s32 3, %v3519
    %v3521 = vrot.slane %v3393, %v3520
    %v3554 = vmul.f32 %v3397, %v2846
    %v3555 = vmul.f32 %v3401, %v2848
    %v3556 = vmul.f32 %v3405, %v2992
    %v3557 = vmul.f32 %v3409, %v2994
    %v3558 = vmul.f32 %v3413, %v2850
    %v3559 = vmul.f32 %v3417, %v2852
    %v3560 = vmul.f32 %v3421, %v2996
    %v3561 = vmul.f32 %v3425, %v2998
    %v3562 = vmul.f32 %v3429, %v2856
    %v3563 = vmul.f32 %v3433, %v2858
    %v3564 = vmul.f32 %v3437, %v3002
    %v3565 = vmul.f32 %v3441, %v3004
    %v3566 = vmul.f32 %v3445, %v2860
    %v3567 = vmul.f32 %v3449, %v2862
    %v3568 = vmul.f32 %v3453, %v3006
    %v3569 = vmul.f32 %v3457, %v3008
    %v3570 = vmul.f32 %v3461, %v2866
    %v3571 = vmul.f32 %v3465, %v2868
    %v3572 = vmul.f32 %v3469, %v3012
    %v3573 = vmul.f32 %v3473, %v3014
    %v3574 = vmul.f32 %v3477, %v2870
    %v3575 = vmul.f32 %v3481, %v2872
    %v3576 = vmul.f32 %v3485, %v3016
    %v3577 = vmul.f32 %v3489, %v3018
    %v3578 = vmul.f32 %v3493, %v2876
    %v3579 = vmul.f32 %v3497, %v2878
    %v3580 = vmul.f32 %v3501, %v3022
    %v3581 = vmul.f32 %v3505, %v3024
    %v3582 = vmul.f32 %v3509, %v2880
    %v3583 = vmul.f32 %v3513, %v2882
    %v3584 = vmul.f32 %v3517, %v3026
    %v3585 = vmul.f32 %v3521, %v3028
    %v3586 = vadd.f32 %v3554, %v3555
    %v3587 = vadd.f32 %v3586, %v3556
    %v3588 = vadd.f32 %v3587, %v3557
    %3589 = vadd.xlane.f32.xlu0 %v3588
    %v3590 = vpop.xlane.xlu0 %3589
    %v3591 = vadd.f32 %v3558, %v3559
    %v3592 = vadd.f32 %v3591, %v3560
    %v3593 = vadd.f32 %v3592, %v3561
    %3594 = vadd.xlane.f32.xlu0 %v3593
    %v3595 = vpop.xlane.xlu0 %3594
    %v3596 = vadd.f32 %v3562, %v3563
    %v3597 = vadd.f32 %v3596, %v3564
    %v3598 = vadd.f32 %v3597, %v3565
    %3599 = vadd.xlane.f32.xlu0 %v3598
    %v3600 = vpop.xlane.xlu0 %3599
    %v3601 = vadd.f32 %v3566, %v3567
    %v3602 = vadd.f32 %v3601, %v3568
    %v3603 = vadd.f32 %v3602, %v3569
    %3604 = vadd.xlane.f32.xlu0 %v3603
    %v3605 = vpop.xlane.xlu0 %3604
    %v3606 = vadd.f32 %v3570, %v3571
    %v3607 = vadd.f32 %v3606, %v3572
    %v3608 = vadd.f32 %v3607, %v3573
    %3609 = vadd.xlane.f32.xlu0 %v3608
    %v3610 = vpop.xlane.xlu0 %3609
    %v3611 = vadd.f32 %v3574, %v3575
    %v3612 = vadd.f32 %v3611, %v3576
    %v3613 = vadd.f32 %v3612, %v3577
    %3614 = vadd.xlane.f32.xlu0 %v3613
    %v3615 = vpop.xlane.xlu0 %3614
    %v3616 = vadd.f32 %v3578, %v3579
    %v3617 = vadd.f32 %v3616, %v3580
    %v3618 = vadd.f32 %v3617, %v3581
    %3619 = vadd.xlane.f32.xlu0 %v3618
    %v3620 = vpop.xlane.xlu0 %3619
    %v3621 = vadd.f32 %v3582, %v3583
    %v3622 = vadd.f32 %v3621, %v3584
    %v3623 = vadd.f32 %v3622, %v3585
    %3624 = vadd.xlane.f32.xlu0 %v3623
    %v3625 = vpop.xlane.xlu0 %3624
    %v3634 = vlaneseq
    %v3635 = vand.u32 %v3634, 127
    %v3636 = vlaneseq
    %v3637 = vshrl.u32 %v3636, 7
    %v3638 = vsub.s32 %v3635, %v3637
    %v3639 = vrot.slane %v3590, %v3638
    %v3640 = vlaneseq
    %v3641 = vshrl.u32 %v3640, 7
    %v3642 = vsub.s32 %v3635, %v3641
    %v3643 = vrot.slane %v3595, %v3642
    %v3644 = vlaneseq
    %v3645 = vshrl.u32 %v3644, 7
    %v3646 = vsub.s32 %v3635, %v3645
    %v3647 = vrot.slane %v3600, %v3646
    %v3648 = vlaneseq
    %v3649 = vshrl.u32 %v3648, 7
    %v3650 = vsub.s32 %v3635, %v3649
    %v3651 = vrot.slane %v3605, %v3650
    %v3652 = vlaneseq
    %v3653 = vshrl.u32 %v3652, 7
    %v3654 = vsub.s32 %v3635, %v3653
    %v3655 = vrot.slane %v3610, %v3654
    %v3656 = vlaneseq
    %v3657 = vshrl.u32 %v3656, 7
    %v3658 = vsub.s32 %v3635, %v3657
    %v3659 = vrot.slane %v3615, %v3658
    %v3660 = vlaneseq
    %v3661 = vshrl.u32 %v3660, 7
    %v3662 = vsub.s32 %v3635, %v3661
    %v3663 = vrot.slane %v3620, %v3662
    %v3664 = vlaneseq
    %v3665 = vshrl.u32 %v3664, 7
    %v3666 = vsub.s32 %v3635, %v3665
    %v3667 = vrot.slane %v3625, %v3666
    %vm3668 = vcmask 1041409
    %v3669 = vsel %vm3668, %v3643, %v3639
    %vm3670 = vcmask 1042434
    %v3671 = vsel %vm3670, %v3647, %v3669
    %vm3672 = vcmask 1043459
    %v3673 = vsel %vm3672, %v3651, %v3671
    %vm3674 = vcmask 1044484
    %v3675 = vsel %vm3674, %v3655, %v3673
    %vm3676 = vcmask 1045509
    %v3677 = vsel %vm3676, %v3659, %v3675
    %vm3678 = vcmask 1046534
    %v3679 = vsel %vm3678, %v3663, %v3677
    %vm3680 = vcmask 1047559
    %v3681 = vsel %vm3680, %v3667, %v3679
    %vm3683 = vcmask 64512
    %v3684 = vsel %vm3683, %v3681, -inf
    %3685 = vmax.xlane.f32.xlu0 %v3684
    %v3686 = vpop.xlane.xlu0 %3685
    %v3688 = vlaneseq
    %v3689 = vshrl.u32 %v3688, 7
    %v3690 = vsub.s32 0, %v3689
    %v3691 = vrot.slane %v3686, %v3690
    %v3692 = vlaneseq
    %v3693 = vshrl.u32 %v3692, 7
    %v3694 = vsub.s32 1, %v3693
    %v3695 = vrot.slane %v3686, %v3694
    %v3696 = vlaneseq
    %v3697 = vshrl.u32 %v3696, 7
    %v3698 = vsub.s32 2, %v3697
    %v3699 = vrot.slane %v3686, %v3698
    %v3700 = vlaneseq
    %v3701 = vshrl.u32 %v3700, 7
    %v3702 = vsub.s32 3, %v3701
    %v3703 = vrot.slane %v3686, %v3702
    %v3704 = vlaneseq
    %v3705 = vshrl.u32 %v3704, 7
    %v3706 = vsub.s32 4, %v3705
    %v3707 = vrot.slane %v3686, %v3706
    %v3708 = vlaneseq
    %v3709 = vshrl.u32 %v3708, 7
    %v3710 = vsub.s32 5, %v3709
    %v3711 = vrot.slane %v3686, %v3710
    %v3712 = vlaneseq
    %v3713 = vshrl.u32 %v3712, 7
    %v3714 = vsub.s32 6, %v3713
    %v3715 = vrot.slane %v3686, %v3714
    %v3716 = vlaneseq
    %v3717 = vshrl.u32 %v3716, 7
    %v3718 = vsub.s32 7, %v3717
    %v3719 = vrot.slane %v3686, %v3718
    %v3728 = vsub.f32 %v3590, %v3691
    %v3729 = vsub.f32 %v3595, %v3695
    %v3730 = vsub.f32 %v3600, %v3699
    %v3731 = vsub.f32 %v3605, %v3703
    %v3732 = vsub.f32 %v3610, %v3707
    %v3733 = vsub.f32 %v3615, %v3711
    %v3734 = vsub.f32 %v3620, %v3715
    %v3735 = vsub.f32 %v3625, %v3719
    %v3736 = vmul.f32 %v3728, 1.442695
    %v3737 = vpow.pop %v3736
    %v3738 = vmul.f32 %v3729, 1.442695
    %v3739 = vpow.pop %v3738
    %v3740 = vmul.f32 %v3730, 1.442695
    %v3741 = vpow.pop %v3740
    %v3742 = vmul.f32 %v3731, 1.442695
    %v3743 = vpow.pop %v3742
    %v3744 = vmul.f32 %v3732, 1.442695
    %v3745 = vpow.pop %v3744
    %v3746 = vmul.f32 %v3733, 1.442695
    %v3747 = vpow.pop %v3746
    %v3748 = vmul.f32 %v3734, 1.442695
    %v3749 = vpow.pop %v3748
    %v3750 = vmul.f32 %v3735, 1.442695
    %v3751 = vpow.pop %v3750
    %3760 = vset.pattern.permute.xlu0 0
    %3761 = vperm.xlu0 %3760, %v3737
    %v3762 = vpop.permute.xlu0 %3761
    %3763 = vset.pattern.permute.xlu0 0
    %3764 = vperm.xlu0 %3763, %v3739
    %v3765 = vpop.permute.xlu0 %3764
    %3766 = vset.pattern.permute.xlu0 0
    %3767 = vperm.xlu0 %3766, %v3741
    %v3768 = vpop.permute.xlu0 %3767
    %3769 = vset.pattern.permute.xlu0 0
    %3770 = vperm.xlu0 %3769, %v3743
    %v3771 = vpop.permute.xlu0 %3770
    %3772 = vset.pattern.permute.xlu0 0
    %3773 = vperm.xlu0 %3772, %v3745
    %v3774 = vpop.permute.xlu0 %3773
    %3775 = vset.pattern.permute.xlu0 0
    %3776 = vperm.xlu0 %3775, %v3747
    %v3777 = vpop.permute.xlu0 %3776
    %3778 = vset.pattern.permute.xlu0 0
    %3779 = vperm.xlu0 %3778, %v3749
    %v3780 = vpop.permute.xlu0 %3779
    %3781 = vset.pattern.permute.xlu0 0
    %3782 = vperm.xlu0 %3781, %v3751
    %v3783 = vpop.permute.xlu0 %3782
    %v3784 = vlaneseq
    %v3785 = vshrl.u32 %v3784, 7
    %v3786 = vsub.s32 %v3635, %v3785
    %v3787 = vrot.slane %v3762, %v3786
    %v3788 = vlaneseq
    %v3789 = vshrl.u32 %v3788, 7
    %v3790 = vsub.s32 %v3635, %v3789
    %v3791 = vrot.slane %v3765, %v3790
    %v3792 = vlaneseq
    %v3793 = vshrl.u32 %v3792, 7
    %v3794 = vsub.s32 %v3635, %v3793
    %v3795 = vrot.slane %v3768, %v3794
    %v3796 = vlaneseq
    %v3797 = vshrl.u32 %v3796, 7
    %v3798 = vsub.s32 %v3635, %v3797
    %v3799 = vrot.slane %v3771, %v3798
    %v3800 = vlaneseq
    %v3801 = vshrl.u32 %v3800, 7
    %v3802 = vsub.s32 %v3635, %v3801
    %v3803 = vrot.slane %v3774, %v3802
    %v3804 = vlaneseq
    %v3805 = vshrl.u32 %v3804, 7
    %v3806 = vsub.s32 %v3635, %v3805
    %v3807 = vrot.slane %v3777, %v3806
    %v3808 = vlaneseq
    %v3809 = vshrl.u32 %v3808, 7
    %v3810 = vsub.s32 %v3635, %v3809
    %v3811 = vrot.slane %v3780, %v3810
    %v3812 = vlaneseq
    %v3813 = vshrl.u32 %v3812, 7
    %v3814 = vsub.s32 %v3635, %v3813
    %v3815 = vrot.slane %v3783, %v3814
    %v3816 = vsel %vm3668, %v3791, %v3787
    %v3817 = vsel %vm3670, %v3795, %v3816
    %v3818 = vsel %vm3672, %v3799, %v3817
    %v3819 = vsel %vm3674, %v3803, %v3818
    %v3820 = vsel %vm3676, %v3807, %v3819
    %v3821 = vsel %vm3678, %v3811, %v3820
    %v3822 = vsel %vm3680, %v3815, %v3821
    %v3824 = vsel %vm3683, %v3822, 0.0
    %3825 = vadd.xlane.f32.xlu0 %v3824
    %v3826 = vpop.xlane.xlu0 %3825
    %v3827 = vrcp.pop %v3826
    %v3829 = vlaneseq
    %v3830 = vshrl.u32 %v3829, 7
    %v3831 = vsub.s32 0, %v3830
    %v3832 = vrot.slane %v3827, %v3831
    %v3833 = vlaneseq
    %v3834 = vshrl.u32 %v3833, 7
    %v3835 = vsub.s32 1, %v3834
    %v3836 = vrot.slane %v3827, %v3835
    %v3837 = vlaneseq
    %v3838 = vshrl.u32 %v3837, 7
    %v3839 = vsub.s32 2, %v3838
    %v3840 = vrot.slane %v3827, %v3839
    %v3841 = vlaneseq
    %v3842 = vshrl.u32 %v3841, 7
    %v3843 = vsub.s32 3, %v3842
    %v3844 = vrot.slane %v3827, %v3843
    %v3845 = vlaneseq
    %v3846 = vshrl.u32 %v3845, 7
    %v3847 = vsub.s32 4, %v3846
    %v3848 = vrot.slane %v3827, %v3847
    %v3849 = vlaneseq
    %v3850 = vshrl.u32 %v3849, 7
    %v3851 = vsub.s32 5, %v3850
    %v3852 = vrot.slane %v3827, %v3851
    %v3853 = vlaneseq
    %v3854 = vshrl.u32 %v3853, 7
    %v3855 = vsub.s32 6, %v3854
    %v3856 = vrot.slane %v3827, %v3855
    %v3857 = vlaneseq
    %v3858 = vshrl.u32 %v3857, 7
    %v3859 = vsub.s32 7, %v3858
    %v3860 = vrot.slane %v3827, %v3859
    %v3869 = vmul.f32 %v3737, %v3832
    %v3870 = vmul.f32 %v3739, %v3836
    %v3871 = vmul.f32 %v3741, %v3840
    %v3872 = vmul.f32 %v3743, %v3844
    %v3873 = vmul.f32 %v3745, %v3848
    %v3874 = vmul.f32 %v3747, %v3852
    %v3875 = vmul.f32 %v3749, %v3856
    %v3876 = vmul.f32 %v3751, %v3860
    %3878 = vset.pattern.permute.xlu0 0
    %3879 = vperm.xlu0 %3878, %v3869
    %v3880 = vpop.permute.xlu0 %3879
    %3883 = vset.pattern.permute.xlu0 0
    %3884 = vperm.xlu0 %3883, %v3870
    %v3885 = vpop.permute.xlu0 %3884
    %3888 = vset.pattern.permute.xlu0 0
    %3889 = vperm.xlu0 %3888, %v3871
    %v3890 = vpop.permute.xlu0 %3889
    %3893 = vset.pattern.permute.xlu0 0
    %3894 = vperm.xlu0 %3893, %v3872
    %v3895 = vpop.permute.xlu0 %3894
    %3898 = vset.pattern.permute.xlu0 0
    %3899 = vperm.xlu0 %3898, %v3873
    %v3900 = vpop.permute.xlu0 %3899
    %3903 = vset.pattern.permute.xlu0 0
    %3904 = vperm.xlu0 %3903, %v3874
    %v3905 = vpop.permute.xlu0 %3904
    %3908 = vset.pattern.permute.xlu0 0
    %3909 = vperm.xlu0 %3908, %v3875
    %v3910 = vpop.permute.xlu0 %3909
    %3913 = vset.pattern.permute.xlu0 0
    %3914 = vperm.xlu0 %3913, %v3876
    %v3915 = vpop.permute.xlu0 %3914
    %v3917 = vmul.f32 %v3880, %v3138
    %v3918 = vmul.f32 %v3880, %v3140
    %v3919 = vmul.f32 %v3880, %v3284
    %v3920 = vmul.f32 %v3880, %v3286
    %v3921 = vmul.f32 %v3885, %v3142
    %v3922 = vmul.f32 %v3885, %v3144
    %v3923 = vmul.f32 %v3885, %v3288
    %v3924 = vmul.f32 %v3885, %v3290
    %v3925 = vmul.f32 %v3890, %v3148
    %v3926 = vmul.f32 %v3890, %v3150
    %v3927 = vmul.f32 %v3890, %v3294
    %v3928 = vmul.f32 %v3890, %v3296
    %v3929 = vmul.f32 %v3895, %v3152
    %v3930 = vmul.f32 %v3895, %v3154
    %v3931 = vmul.f32 %v3895, %v3298
    %v3932 = vmul.f32 %v3895, %v3300
    %v3933 = vmul.f32 %v3900, %v3158
    %v3934 = vmul.f32 %v3900, %v3160
    %v3935 = vmul.f32 %v3900, %v3304
    %v3936 = vmul.f32 %v3900, %v3306
    %v3937 = vmul.f32 %v3905, %v3162
    %v3938 = vmul.f32 %v3905, %v3164
    %v3939 = vmul.f32 %v3905, %v3308
    %v3940 = vmul.f32 %v3905, %v3310
    %v3941 = vmul.f32 %v3910, %v3168
    %v3942 = vmul.f32 %v3910, %v3170
    %v3943 = vmul.f32 %v3910, %v3314
    %v3944 = vmul.f32 %v3910, %v3316
    %v3945 = vmul.f32 %v3915, %v3172
    %v3946 = vmul.f32 %v3915, %v3174
    %v3947 = vmul.f32 %v3915, %v3318
    %v3948 = vmul.f32 %v3915, %v3320
    %v3949 = vrot.slane %v3917, 4
    %v3950 = vadd.f32 %v3917, %v3949
    %v3951 = vrot.slane %v3950, 2
    %v3952 = vadd.f32 %v3950, %v3951
    %v3953 = vrot.slane %v3952, 1
    %v3954 = vadd.f32 %v3952, %v3953
    %v3955 = vrot.slane %v3918, 4
    %v3956 = vadd.f32 %v3918, %v3955
    %v3957 = vrot.slane %v3956, 2
    %v3958 = vadd.f32 %v3956, %v3957
    %v3959 = vrot.slane %v3958, 1
    %v3960 = vadd.f32 %v3958, %v3959
    %v3961 = vrot.slane %v3919, 4
    %v3962 = vadd.f32 %v3919, %v3961
    %v3963 = vrot.slane %v3962, 2
    %v3964 = vadd.f32 %v3962, %v3963
    %v3965 = vrot.slane %v3964, 1
    %v3966 = vadd.f32 %v3964, %v3965
    %v3967 = vrot.slane %v3920, 4
    %v3968 = vadd.f32 %v3920, %v3967
    %v3969 = vrot.slane %v3968, 2
    %v3970 = vadd.f32 %v3968, %v3969
    %v3971 = vrot.slane %v3970, 1
    %v3972 = vadd.f32 %v3970, %v3971
    %v3973 = vrot.slane %v3921, 4
    %v3974 = vadd.f32 %v3921, %v3973
    %v3975 = vrot.slane %v3974, 2
    %v3976 = vadd.f32 %v3974, %v3975
    %v3977 = vrot.slane %v3976, 1
    %v3978 = vadd.f32 %v3976, %v3977
    %v3979 = vrot.slane %v3922, 4
    %v3980 = vadd.f32 %v3922, %v3979
    %v3981 = vrot.slane %v3980, 2
    %v3982 = vadd.f32 %v3980, %v3981
    %v3983 = vrot.slane %v3982, 1
    %v3984 = vadd.f32 %v3982, %v3983
    %v3985 = vrot.slane %v3923, 4
    %v3986 = vadd.f32 %v3923, %v3985
    %v3987 = vrot.slane %v3986, 2
    %v3988 = vadd.f32 %v3986, %v3987
    %v3989 = vrot.slane %v3988, 1
    %v3990 = vadd.f32 %v3988, %v3989
    %v3991 = vrot.slane %v3924, 4
    %v3992 = vadd.f32 %v3924, %v3991
    %v3993 = vrot.slane %v3992, 2
    %v3994 = vadd.f32 %v3992, %v3993
    %v3995 = vrot.slane %v3994, 1
    %v3996 = vadd.f32 %v3994, %v3995
    %v3997 = vrot.slane %v3925, 4
    %v3998 = vadd.f32 %v3925, %v3997
    %v3999 = vrot.slane %v3998, 2
    %v4000 = vadd.f32 %v3998, %v3999
    %v4001 = vrot.slane %v4000, 1
    %v4002 = vadd.f32 %v4000, %v4001
    %v4003 = vrot.slane %v3926, 4
    %v4004 = vadd.f32 %v3926, %v4003
    %v4005 = vrot.slane %v4004, 2
    %v4006 = vadd.f32 %v4004, %v4005
    %v4007 = vrot.slane %v4006, 1
    %v4008 = vadd.f32 %v4006, %v4007
    %v4009 = vrot.slane %v3927, 4
    %v4010 = vadd.f32 %v3927, %v4009
    %v4011 = vrot.slane %v4010, 2
    %v4012 = vadd.f32 %v4010, %v4011
    %v4013 = vrot.slane %v4012, 1
    %v4014 = vadd.f32 %v4012, %v4013
    %v4015 = vrot.slane %v3928, 4
    %v4016 = vadd.f32 %v3928, %v4015
    %v4017 = vrot.slane %v4016, 2
    %v4018 = vadd.f32 %v4016, %v4017
    %v4019 = vrot.slane %v4018, 1
    %v4020 = vadd.f32 %v4018, %v4019
    %v4021 = vrot.slane %v3929, 4
    %v4022 = vadd.f32 %v3929, %v4021
    %v4023 = vrot.slane %v4022, 2
    %v4024 = vadd.f32 %v4022, %v4023
    %v4025 = vrot.slane %v4024, 1
    %v4026 = vadd.f32 %v4024, %v4025
    %v4027 = vrot.slane %v3930, 4
    %v4028 = vadd.f32 %v3930, %v4027
    %v4029 = vrot.slane %v4028, 2
    %v4030 = vadd.f32 %v4028, %v4029
    %v4031 = vrot.slane %v4030, 1
    %v4032 = vadd.f32 %v4030, %v4031
    %v4033 = vrot.slane %v3931, 4
    %v4034 = vadd.f32 %v3931, %v4033
    %v4035 = vrot.slane %v4034, 2
    %v4036 = vadd.f32 %v4034, %v4035
    %v4037 = vrot.slane %v4036, 1
    %v4038 = vadd.f32 %v4036, %v4037
    %v4039 = vrot.slane %v3932, 4
    %v4040 = vadd.f32 %v3932, %v4039
    %v4041 = vrot.slane %v4040, 2
    %v4042 = vadd.f32 %v4040, %v4041
    %v4043 = vrot.slane %v4042, 1
    %v4044 = vadd.f32 %v4042, %v4043
    %v4045 = vrot.slane %v3933, 4
    %v4046 = vadd.f32 %v3933, %v4045
    %v4047 = vrot.slane %v4046, 2
    %v4048 = vadd.f32 %v4046, %v4047
    %v4049 = vrot.slane %v4048, 1
    %v4050 = vadd.f32 %v4048, %v4049
    %v4051 = vrot.slane %v3934, 4
    %v4052 = vadd.f32 %v3934, %v4051
    %v4053 = vrot.slane %v4052, 2
    %v4054 = vadd.f32 %v4052, %v4053
    %v4055 = vrot.slane %v4054, 1
    %v4056 = vadd.f32 %v4054, %v4055
    %v4057 = vrot.slane %v3935, 4
    %v4058 = vadd.f32 %v3935, %v4057
    %v4059 = vrot.slane %v4058, 2
    %v4060 = vadd.f32 %v4058, %v4059
    %v4061 = vrot.slane %v4060, 1
    %v4062 = vadd.f32 %v4060, %v4061
    %v4063 = vrot.slane %v3936, 4
    %v4064 = vadd.f32 %v3936, %v4063
    %v4065 = vrot.slane %v4064, 2
    %v4066 = vadd.f32 %v4064, %v4065
    %v4067 = vrot.slane %v4066, 1
    %v4068 = vadd.f32 %v4066, %v4067
    %v4069 = vrot.slane %v3937, 4
    %v4070 = vadd.f32 %v3937, %v4069
    %v4071 = vrot.slane %v4070, 2
    %v4072 = vadd.f32 %v4070, %v4071
    %v4073 = vrot.slane %v4072, 1
    %v4074 = vadd.f32 %v4072, %v4073
    %v4075 = vrot.slane %v3938, 4
    %v4076 = vadd.f32 %v3938, %v4075
    %v4077 = vrot.slane %v4076, 2
    %v4078 = vadd.f32 %v4076, %v4077
    %v4079 = vrot.slane %v4078, 1
    %v4080 = vadd.f32 %v4078, %v4079
    %v4081 = vrot.slane %v3939, 4
    %v4082 = vadd.f32 %v3939, %v4081
    %v4083 = vrot.slane %v4082, 2
    %v4084 = vadd.f32 %v4082, %v4083
    %v4085 = vrot.slane %v4084, 1
    %v4086 = vadd.f32 %v4084, %v4085
    %v4087 = vrot.slane %v3940, 4
    %v4088 = vadd.f32 %v3940, %v4087
    %v4089 = vrot.slane %v4088, 2
    %v4090 = vadd.f32 %v4088, %v4089
    %v4091 = vrot.slane %v4090, 1
    %v4092 = vadd.f32 %v4090, %v4091
    %v4093 = vrot.slane %v3941, 4
    %v4094 = vadd.f32 %v3941, %v4093
    %v4095 = vrot.slane %v4094, 2
    %v4096 = vadd.f32 %v4094, %v4095
    %v4097 = vrot.slane %v4096, 1
    %v4098 = vadd.f32 %v4096, %v4097
    %v4099 = vrot.slane %v3942, 4
    %v4100 = vadd.f32 %v3942, %v4099
    %v4101 = vrot.slane %v4100, 2
    %v4102 = vadd.f32 %v4100, %v4101
    %v4103 = vrot.slane %v4102, 1
    %v4104 = vadd.f32 %v4102, %v4103
    %v4105 = vrot.slane %v3943, 4
    %v4106 = vadd.f32 %v3943, %v4105
    %v4107 = vrot.slane %v4106, 2
    %v4108 = vadd.f32 %v4106, %v4107
    %v4109 = vrot.slane %v4108, 1
    %v4110 = vadd.f32 %v4108, %v4109
    %v4111 = vrot.slane %v3944, 4
    %v4112 = vadd.f32 %v3944, %v4111
    %v4113 = vrot.slane %v4112, 2
    %v4114 = vadd.f32 %v4112, %v4113
    %v4115 = vrot.slane %v4114, 1
    %v4116 = vadd.f32 %v4114, %v4115
    %v4117 = vrot.slane %v3945, 4
    %v4118 = vadd.f32 %v3945, %v4117
    %v4119 = vrot.slane %v4118, 2
    %v4120 = vadd.f32 %v4118, %v4119
    %v4121 = vrot.slane %v4120, 1
    %v4122 = vadd.f32 %v4120, %v4121
    %v4123 = vrot.slane %v3946, 4
    %v4124 = vadd.f32 %v3946, %v4123
    %v4125 = vrot.slane %v4124, 2
    %v4126 = vadd.f32 %v4124, %v4125
    %v4127 = vrot.slane %v4126, 1
    %v4128 = vadd.f32 %v4126, %v4127
    %v4129 = vrot.slane %v3947, 4
    %v4130 = vadd.f32 %v3947, %v4129
    %v4131 = vrot.slane %v4130, 2
    %v4132 = vadd.f32 %v4130, %v4131
    %v4133 = vrot.slane %v4132, 1
    %v4134 = vadd.f32 %v4132, %v4133
    %v4135 = vrot.slane %v3948, 4
    %v4136 = vadd.f32 %v3948, %v4135
    %v4137 = vrot.slane %v4136, 2
    %v4138 = vadd.f32 %v4136, %v4137
    %v4139 = vrot.slane %v4138, 1
    %v4140 = vadd.f32 %v4138, %v4139
    %v4173 = vsel %vm3668, %v3978, %v3954
    %v4174 = vsel %vm3670, %v4002, %v4173
    %v4175 = vsel %vm3672, %v4026, %v4174
    %v4176 = vsel %vm3674, %v4050, %v4175
    %v4177 = vsel %vm3676, %v4074, %v4176
    %v4178 = vsel %vm3678, %v4098, %v4177
    %v4179 = vsel %vm3680, %v4122, %v4178
    %v4180 = vsel %vm3668, %v3984, %v3960
    %v4181 = vsel %vm3670, %v4008, %v4180
    %v4182 = vsel %vm3672, %v4032, %v4181
    %v4183 = vsel %vm3674, %v4056, %v4182
    %v4184 = vsel %vm3676, %v4080, %v4183
    %v4185 = vsel %vm3678, %v4104, %v4184
    %v4186 = vsel %vm3680, %v4128, %v4185
    %v4187 = vsel %vm3668, %v3990, %v3966
    %v4188 = vsel %vm3670, %v4014, %v4187
    %v4189 = vsel %vm3672, %v4038, %v4188
    %v4190 = vsel %vm3674, %v4062, %v4189
    %v4191 = vsel %vm3676, %v4086, %v4190
    %v4192 = vsel %vm3678, %v4110, %v4191
    %v4193 = vsel %vm3680, %v4134, %v4192
    %v4194 = vsel %vm3668, %v3996, %v3972
    %v4195 = vsel %vm3670, %v4020, %v4194
    %v4196 = vsel %vm3672, %v4044, %v4195
    %v4197 = vsel %vm3674, %v4068, %v4196
    %v4198 = vsel %vm3676, %v4092, %v4197
    %v4199 = vsel %vm3678, %v4116, %v4198
    %v4200 = vsel %vm3680, %v4140, %v4199
    %v4205 = vadd.f32 %v4179, %v4186
    %v4206 = vadd.f32 %v4205, %v4193
    %v4207 = vadd.f32 %v4206, %v4200
    %4208 = vadd.xlane.f32.xlu0 %v4207
    %v4209 = vpop.xlane.xlu0 %4208
    %v4210 = vrcp.pop 512.0
    %v4211 = vmul.f32 %v4209, %v4210
    %v4213 = vrot.slane %v4211, 1
    %v4214 = vrot.slane %v4211, 2
    %v4215 = vrot.slane %v4211, 3
    %v4216 = vrot.slane %v4211, 4
    %v4217 = vrot.slane %v4211, 5
    %v4218 = vrot.slane %v4211, 6
    %v4219 = vrot.slane %v4211, 7
    %v4228 = vsub.f32 %v3954, %v4211
    %v4229 = vsub.f32 %v3960, %v4211
    %v4230 = vsub.f32 %v3966, %v4211
    %v4231 = vsub.f32 %v3972, %v4211
    %v4232 = vsub.f32 %v3978, %v4213
    %v4233 = vsub.f32 %v3984, %v4213
    %v4234 = vsub.f32 %v3990, %v4213
    %v4235 = vsub.f32 %v3996, %v4213
    %v4236 = vsub.f32 %v4002, %v4214
    %v4237 = vsub.f32 %v4008, %v4214
    %v4238 = vsub.f32 %v4014, %v4214
    %v4239 = vsub.f32 %v4020, %v4214
    %v4240 = vsub.f32 %v4026, %v4215
    %v4241 = vsub.f32 %v4032, %v4215
    %v4242 = vsub.f32 %v4038, %v4215
    %v4243 = vsub.f32 %v4044, %v4215
    %v4244 = vsub.f32 %v4050, %v4216
    %v4245 = vsub.f32 %v4056, %v4216
    %v4246 = vsub.f32 %v4062, %v4216
    %v4247 = vsub.f32 %v4068, %v4216
    %v4248 = vsub.f32 %v4074, %v4217
    %v4249 = vsub.f32 %v4080, %v4217
    %v4250 = vsub.f32 %v4086, %v4217
    %v4251 = vsub.f32 %v4092, %v4217
    %v4252 = vsub.f32 %v4098, %v4218
    %v4253 = vsub.f32 %v4104, %v4218
    %v4254 = vsub.f32 %v4110, %v4218
    %v4255 = vsub.f32 %v4116, %v4218
    %v4256 = vsub.f32 %v4122, %v4219
    %v4257 = vsub.f32 %v4128, %v4219
    %v4258 = vsub.f32 %v4134, %v4219
    %v4259 = vsub.f32 %v4140, %v4219
    %v4260 = vmul.f32 %v4228, %v4228
    %v4261 = vmul.f32 %v4229, %v4229
    %v4262 = vmul.f32 %v4230, %v4230
    %v4263 = vmul.f32 %v4231, %v4231
    %v4264 = vmul.f32 %v4232, %v4232
    %v4265 = vmul.f32 %v4233, %v4233
    %v4266 = vmul.f32 %v4234, %v4234
    %v4267 = vmul.f32 %v4235, %v4235
    %v4268 = vmul.f32 %v4236, %v4236
    %v4269 = vmul.f32 %v4237, %v4237
    %v4270 = vmul.f32 %v4238, %v4238
    %v4271 = vmul.f32 %v4239, %v4239
    %v4272 = vmul.f32 %v4240, %v4240
    %v4273 = vmul.f32 %v4241, %v4241
    %v4274 = vmul.f32 %v4242, %v4242
    %v4275 = vmul.f32 %v4243, %v4243
    %v4276 = vmul.f32 %v4244, %v4244
    %v4277 = vmul.f32 %v4245, %v4245
    %v4278 = vmul.f32 %v4246, %v4246
    %v4279 = vmul.f32 %v4247, %v4247
    %v4280 = vmul.f32 %v4248, %v4248
    %v4281 = vmul.f32 %v4249, %v4249
    %v4282 = vmul.f32 %v4250, %v4250
    %v4283 = vmul.f32 %v4251, %v4251
    %v4284 = vmul.f32 %v4252, %v4252
    %v4285 = vmul.f32 %v4253, %v4253
    %v4286 = vmul.f32 %v4254, %v4254
    %v4287 = vmul.f32 %v4255, %v4255
    %v4288 = vmul.f32 %v4256, %v4256
    %v4289 = vmul.f32 %v4257, %v4257
    %v4290 = vmul.f32 %v4258, %v4258
    %v4291 = vmul.f32 %v4259, %v4259
    %v4324 = vrot.slane %v4264, 7
    %v4325 = vsel %vm3668, %v4324, %v4260
    %v4326 = vrot.slane %v4268, 6
    %v4327 = vsel %vm3670, %v4326, %v4325
    %v4328 = vrot.slane %v4272, 5
    %v4329 = vsel %vm3672, %v4328, %v4327
    %v4330 = vrot.slane %v4276, 4
    %v4331 = vsel %vm3674, %v4330, %v4329
    %v4332 = vrot.slane %v4280, 3
    %v4333 = vsel %vm3676, %v4332, %v4331
    %v4334 = vrot.slane %v4284, 2
    %v4335 = vsel %vm3678, %v4334, %v4333
    %v4336 = vrot.slane %v4288, 1
    %v4337 = vsel %vm3680, %v4336, %v4335
    %v4338 = vrot.slane %v4265, 7
    %v4339 = vsel %vm3668, %v4338, %v4261
    %v4340 = vrot.slane %v4269, 6
    %v4341 = vsel %vm3670, %v4340, %v4339
    %v4342 = vrot.slane %v4273, 5
    %v4343 = vsel %vm3672, %v4342, %v4341
    %v4344 = vrot.slane %v4277, 4
    %v4345 = vsel %vm3674, %v4344, %v4343
    %v4346 = vrot.slane %v4281, 3
    %v4347 = vsel %vm3676, %v4346, %v4345
    %v4348 = vrot.slane %v4285, 2
    %v4349 = vsel %vm3678, %v4348, %v4347
    %v4350 = vrot.slane %v4289, 1
    %v4351 = vsel %vm3680, %v4350, %v4349
    %v4352 = vrot.slane %v4266, 7
    %v4353 = vsel %vm3668, %v4352, %v4262
    %v4354 = vrot.slane %v4270, 6
    %v4355 = vsel %vm3670, %v4354, %v4353
    %v4356 = vrot.slane %v4274, 5
    %v4357 = vsel %vm3672, %v4356, %v4355
    %v4358 = vrot.slane %v4278, 4
    %v4359 = vsel %vm3674, %v4358, %v4357
    %v4360 = vrot.slane %v4282, 3
    %v4361 = vsel %vm3676, %v4360, %v4359
    %v4362 = vrot.slane %v4286, 2
    %v4363 = vsel %vm3678, %v4362, %v4361
    %v4364 = vrot.slane %v4290, 1
    %v4365 = vsel %vm3680, %v4364, %v4363
    %v4366 = vrot.slane %v4267, 7
    %v4367 = vsel %vm3668, %v4366, %v4263
    %v4368 = vrot.slane %v4271, 6
    %v4369 = vsel %vm3670, %v4368, %v4367
    %v4370 = vrot.slane %v4275, 5
    %v4371 = vsel %vm3672, %v4370, %v4369
    %v4372 = vrot.slane %v4279, 4
    %v4373 = vsel %vm3674, %v4372, %v4371
    %v4374 = vrot.slane %v4283, 3
    %v4375 = vsel %vm3676, %v4374, %v4373
    %v4376 = vrot.slane %v4287, 2
    %v4377 = vsel %vm3678, %v4376, %v4375
    %v4378 = vrot.slane %v4291, 1
    %v4379 = vsel %vm3680, %v4378, %v4377
    %v4384 = vadd.f32 %v4337, %v4351
    %v4385 = vadd.f32 %v4384, %v4365
    %v4386 = vadd.f32 %v4385, %v4379
    %4387 = vadd.xlane.f32.xlu0 %v4386
    %v4388 = vpop.xlane.xlu0 %4387
    %v4389 = vmul.f32 %v4388, %v4210
    %v4390 = vadd.f32 %v4389, 1e-05
    %v4391 = vrsqrt.pop %v4390
    %v4393 = vrot.slane %v4391, 1
    %v4394 = vrot.slane %v4391, 2
    %v4395 = vrot.slane %v4391, 3
    %v4396 = vrot.slane %v4391, 4
    %v4397 = vrot.slane %v4391, 5
    %v4398 = vrot.slane %v4391, 6
    %v4399 = vrot.slane %v4391, 7
    %v4408 = vmul.f32 %v4228, %v4391
    %v4409 = vmul.f32 %v4229, %v4391
    %v4410 = vmul.f32 %v4230, %v4391
    %v4411 = vmul.f32 %v4231, %v4391
    %v4412 = vmul.f32 %v4232, %v4393
    %v4413 = vmul.f32 %v4233, %v4393
    %v4414 = vmul.f32 %v4234, %v4393
    %v4415 = vmul.f32 %v4235, %v4393
    %v4416 = vmul.f32 %v4236, %v4394
    %v4417 = vmul.f32 %v4237, %v4394
    %v4418 = vmul.f32 %v4238, %v4394
    %v4419 = vmul.f32 %v4239, %v4394
    %v4420 = vmul.f32 %v4240, %v4395
    %v4421 = vmul.f32 %v4241, %v4395
    %v4422 = vmul.f32 %v4242, %v4395
    %v4423 = vmul.f32 %v4243, %v4395
    %v4424 = vmul.f32 %v4244, %v4396
    %v4425 = vmul.f32 %v4245, %v4396
    %v4426 = vmul.f32 %v4246, %v4396
    %v4427 = vmul.f32 %v4247, %v4396
    %v4428 = vmul.f32 %v4248, %v4397
    %v4429 = vmul.f32 %v4249, %v4397
    %v4430 = vmul.f32 %v4250, %v4397
    %v4431 = vmul.f32 %v4251, %v4397
    %v4432 = vmul.f32 %v4252, %v4398
    %v4433 = vmul.f32 %v4253, %v4398
    %v4434 = vmul.f32 %v4254, %v4398
    %v4435 = vmul.f32 %v4255, %v4398
    %v4436 = vmul.f32 %v4256, %v4399
    %v4437 = vmul.f32 %v4257, %v4399
    %v4438 = vmul.f32 %v4258, %v4399
    %v4439 = vmul.f32 %v4259, %v4399
    %v4440 = vld [vmem:[%s8] sm:$0xf]
    %v4442 = vlaneseq
    %v4443 = vshrl.u32 %v4442, 7
    %v4444 = vsub.s32 0, %v4443
    %v4445 = vrot.slane %v4440, %v4444
    %v4446 = vlaneseq
    %v4447 = vshrl.u32 %v4446, 7
    %v4448 = vsub.s32 1, %v4447
    %v4449 = vrot.slane %v4440, %v4448
    %v4450 = vlaneseq
    %v4451 = vshrl.u32 %v4450, 7
    %v4452 = vsub.s32 2, %v4451
    %v4453 = vrot.slane %v4440, %v4452
    %v4454 = vlaneseq
    %v4455 = vshrl.u32 %v4454, 7
    %v4456 = vsub.s32 3, %v4455
    %v4457 = vrot.slane %v4440, %v4456
    %v4462 = vmul.f32 %v4408, %v4445
    %v4463 = vmul.f32 %v4409, %v4449
    %v4464 = vmul.f32 %v4410, %v4453
    %v4465 = vmul.f32 %v4411, %v4457
    %v4466 = vmul.f32 %v4412, %v4445
    %v4467 = vmul.f32 %v4413, %v4449
    %v4468 = vmul.f32 %v4414, %v4453
    %v4469 = vmul.f32 %v4415, %v4457
    %v4470 = vmul.f32 %v4416, %v4445
    %v4471 = vmul.f32 %v4417, %v4449
    %v4472 = vmul.f32 %v4418, %v4453
    %v4473 = vmul.f32 %v4419, %v4457
    %v4474 = vmul.f32 %v4420, %v4445
    %v4475 = vmul.f32 %v4421, %v4449
    %v4476 = vmul.f32 %v4422, %v4453
    %v4477 = vmul.f32 %v4423, %v4457
    %v4478 = vmul.f32 %v4424, %v4445
    %v4479 = vmul.f32 %v4425, %v4449
    %v4480 = vmul.f32 %v4426, %v4453
    %v4481 = vmul.f32 %v4427, %v4457
    %v4482 = vmul.f32 %v4428, %v4445
    %v4483 = vmul.f32 %v4429, %v4449
    %v4484 = vmul.f32 %v4430, %v4453
    %v4485 = vmul.f32 %v4431, %v4457
    %v4486 = vmul.f32 %v4432, %v4445
    %v4487 = vmul.f32 %v4433, %v4449
    %v4488 = vmul.f32 %v4434, %v4453
    %v4489 = vmul.f32 %v4435, %v4457
    %v4490 = vmul.f32 %v4436, %v4445
    %v4491 = vmul.f32 %v4437, %v4449
    %v4492 = vmul.f32 %v4438, %v4453
    %v4493 = vmul.f32 %v4439, %v4457
    %v4494 = vld [vmem:[%s9] sm:$0xf]
    %v4496 = vlaneseq
    %v4497 = vshrl.u32 %v4496, 7
    %v4498 = vsub.s32 0, %v4497
    %v4499 = vrot.slane %v4494, %v4498
    %v4500 = vlaneseq
    %v4501 = vshrl.u32 %v4500, 7
    %v4502 = vsub.s32 1, %v4501
    %v4503 = vrot.slane %v4494, %v4502
    %v4504 = vlaneseq
    %v4505 = vshrl.u32 %v4504, 7
    %v4506 = vsub.s32 2, %v4505
    %v4507 = vrot.slane %v4494, %v4506
    %v4508 = vlaneseq
    %v4509 = vshrl.u32 %v4508, 7
    %v4510 = vsub.s32 3, %v4509
    %v4511 = vrot.slane %v4494, %v4510
    %v4516 = vadd.f32 %v4462, %v4499
    %v4517 = vadd.f32 %v4463, %v4503
    %v4518 = vadd.f32 %v4464, %v4507
    %v4519 = vadd.f32 %v4465, %v4511
    %v4520 = vadd.f32 %v4466, %v4499
    %v4521 = vadd.f32 %v4467, %v4503
    %v4522 = vadd.f32 %v4468, %v4507
    %v4523 = vadd.f32 %v4469, %v4511
    %v4524 = vadd.f32 %v4470, %v4499
    %v4525 = vadd.f32 %v4471, %v4503
    %v4526 = vadd.f32 %v4472, %v4507
    %v4527 = vadd.f32 %v4473, %v4511
    %v4528 = vadd.f32 %v4474, %v4499
    %v4529 = vadd.f32 %v4475, %v4503
    %v4530 = vadd.f32 %v4476, %v4507
    %v4531 = vadd.f32 %v4477, %v4511
    %v4532 = vadd.f32 %v4478, %v4499
    %v4533 = vadd.f32 %v4479, %v4503
    %v4534 = vadd.f32 %v4480, %v4507
    %v4535 = vadd.f32 %v4481, %v4511
    %v4536 = vadd.f32 %v4482, %v4499
    %v4537 = vadd.f32 %v4483, %v4503
    %v4538 = vadd.f32 %v4484, %v4507
    %v4539 = vadd.f32 %v4485, %v4511
    %v4540 = vadd.f32 %v4486, %v4499
    %v4541 = vadd.f32 %v4487, %v4503
    %v4542 = vadd.f32 %v4488, %v4507
    %v4543 = vadd.f32 %v4489, %v4511
    %v4544 = vadd.f32 %v4490, %v4499
    %v4545 = vadd.f32 %v4491, %v4503
    %v4546 = vadd.f32 %v4492, %v4507
    %v4547 = vadd.f32 %v4493, %v4511
    %v4548 = vmax.f32 %v4516, 0.0
    %v4549 = vmax.f32 %v4517, 0.0
    %v4550 = vmax.f32 %v4518, 0.0
    %v4551 = vmax.f32 %v4519, 0.0
    %v4552 = vmax.f32 %v4520, 0.0
    %v4553 = vmax.f32 %v4521, 0.0
    %v4554 = vmax.f32 %v4522, 0.0
    %v4555 = vmax.f32 %v4523, 0.0
    %v4556 = vmax.f32 %v4524, 0.0
    %v4557 = vmax.f32 %v4525, 0.0
    %v4558 = vmax.f32 %v4526, 0.0
    %v4559 = vmax.f32 %v4527, 0.0
    %v4560 = vmax.f32 %v4528, 0.0
    %v4561 = vmax.f32 %v4529, 0.0
    %v4562 = vmax.f32 %v4530, 0.0
    %v4563 = vmax.f32 %v4531, 0.0
    %v4564 = vmax.f32 %v4532, 0.0
    %v4565 = vmax.f32 %v4533, 0.0
    %v4566 = vmax.f32 %v4534, 0.0
    %v4567 = vmax.f32 %v4535, 0.0
    %v4568 = vmax.f32 %v4536, 0.0
    %v4569 = vmax.f32 %v4537, 0.0
    %v4570 = vmax.f32 %v4538, 0.0
    %v4571 = vmax.f32 %v4539, 0.0
    %v4572 = vmax.f32 %v4540, 0.0
    %v4573 = vmax.f32 %v4541, 0.0
    %v4574 = vmax.f32 %v4542, 0.0
    %v4575 = vmax.f32 %v4543, 0.0
    %v4576 = vmax.f32 %v4544, 0.0
    %v4577 = vmax.f32 %v4545, 0.0
    %v4578 = vmax.f32 %v4546, 0.0
    %v4579 = vmax.f32 %v4547, 0.0
    %v4580 = vpack.c.bf16 %v4548, %v4548
    %v4581 = vpack.c.bf16 %v4549, %v4549
    %v4582 = vpack.c.bf16 %v4550, %v4550
    %v4583 = vpack.c.bf16 %v4551, %v4551
    %v4584 = vpack.c.bf16 %v4552, %v4552
    %v4585 = vpack.c.bf16 %v4553, %v4553
    %v4586 = vpack.c.bf16 %v4554, %v4554
    %v4587 = vpack.c.bf16 %v4555, %v4555
    %v4588 = vpack.c.bf16 %v4556, %v4556
    %v4589 = vpack.c.bf16 %v4557, %v4557
    %v4590 = vpack.c.bf16 %v4558, %v4558
    %v4591 = vpack.c.bf16 %v4559, %v4559
    %v4592 = vpack.c.bf16 %v4560, %v4560
    %v4593 = vpack.c.bf16 %v4561, %v4561
    %v4594 = vpack.c.bf16 %v4562, %v4562
    %v4595 = vpack.c.bf16 %v4563, %v4563
    %v4596 = vpack.c.bf16 %v4564, %v4564
    %v4597 = vpack.c.bf16 %v4565, %v4565
    %v4598 = vpack.c.bf16 %v4566, %v4566
    %v4599 = vpack.c.bf16 %v4567, %v4567
    %v4600 = vpack.c.bf16 %v4568, %v4568
    %v4601 = vpack.c.bf16 %v4569, %v4569
    %v4602 = vpack.c.bf16 %v4570, %v4570
    %v4603 = vpack.c.bf16 %v4571, %v4571
    %v4604 = vpack.c.bf16 %v4572, %v4572
    %v4605 = vpack.c.bf16 %v4573, %v4573
    %v4606 = vpack.c.bf16 %v4574, %v4574
    %v4607 = vpack.c.bf16 %v4575, %v4575
    %v4608 = vpack.c.bf16 %v4576, %v4576
    %v4609 = vpack.c.bf16 %v4577, %v4577
    %v4610 = vpack.c.bf16 %v4578, %v4578
    %v4611 = vpack.c.bf16 %v4579, %v4579
    %v4612 = vld [vmem:[#allocation10] sm:$0xff]
    %v4613 = vld [vmem:[#allocation10 + $0x8] sm:$0xff]
    %v4614 = vld [vmem:[#allocation10 + $0x10] sm:$0xff]
    %v4615 = vld [vmem:[#allocation10 + $0x18] sm:$0xff]
    %v4616 = vld [vmem:[#allocation10 + $0x20] sm:$0xff]
    %v4617 = vld [vmem:[#allocation10 + $0x28] sm:$0xff]
    %v4618 = vld [vmem:[#allocation10 + $0x30] sm:$0xff]
    %v4619 = vld [vmem:[#allocation10 + $0x38] sm:$0xff]
    %v4620 = vld [vmem:[#allocation10 + $0x40] sm:$0xff]
    %v4621 = vld [vmem:[#allocation10 + $0x48] sm:$0xff]
    %v4622 = vld [vmem:[#allocation10 + $0x50] sm:$0xff]
    %v4623 = vld [vmem:[#allocation10 + $0x58] sm:$0xff]
    %v4624 = vld [vmem:[#allocation10 + $0x60] sm:$0xff]
    %v4625 = vld [vmem:[#allocation10 + $0x68] sm:$0xff]
    %v4626 = vld [vmem:[#allocation10 + $0x70] sm:$0xff]
    %v4627 = vld [vmem:[#allocation10 + $0x78] sm:$0xff]
    %v4628 = vld [vmem:[#allocation10 + $0x80] sm:$0xff]
    %v4629 = vld [vmem:[#allocation10 + $0x88] sm:$0xff]
    %v4630 = vld [vmem:[#allocation10 + $0x90] sm:$0xff]
    %v4631 = vld [vmem:[#allocation10 + $0x98] sm:$0xff]
    %v4632 = vld [vmem:[#allocation10 + $0xa0] sm:$0xff]
    %v4633 = vld [vmem:[#allocation10 + $0xa8] sm:$0xff]
    %v4634 = vld [vmem:[#allocation10 + $0xb0] sm:$0xff]
    %v4635 = vld [vmem:[#allocation10 + $0xb8] sm:$0xff]
    %v4636 = vld [vmem:[#allocation10 + $0xc0] sm:$0xff]
    %v4637 = vld [vmem:[#allocation10 + $0xc8] sm:$0xff]
    %v4638 = vld [vmem:[#allocation10 + $0xd0] sm:$0xff]
    %v4639 = vld [vmem:[#allocation10 + $0xd8] sm:$0xff]
    %v4640 = vld [vmem:[#allocation10 + $0xe0] sm:$0xff]
    %v4641 = vld [vmem:[#allocation10 + $0xe8] sm:$0xff]
    %v4642 = vld [vmem:[#allocation10 + $0xf0] sm:$0xff]
    %v4643 = vld [vmem:[#allocation10 + $0xf8] sm:$0xff]
    %v4644 = vld [vmem:[#allocation10 + $0x100] sm:$0xff]
    %v4645 = vld [vmem:[#allocation10 + $0x108] sm:$0xff]
    %v4646 = vld [vmem:[#allocation10 + $0x110] sm:$0xff]
    %v4647 = vld [vmem:[#allocation10 + $0x118] sm:$0xff]
    %v4648 = vld [vmem:[#allocation10 + $0x120] sm:$0xff]
    %v4649 = vld [vmem:[#allocation10 + $0x128] sm:$0xff]
    %v4650 = vld [vmem:[#allocation10 + $0x130] sm:$0xff]
    %v4651 = vld [vmem:[#allocation10 + $0x138] sm:$0xff]
    %v4652 = vld [vmem:[#allocation10 + $0x140] sm:$0xff]
    %v4653 = vld [vmem:[#allocation10 + $0x148] sm:$0xff]
    %v4654 = vld [vmem:[#allocation10 + $0x150] sm:$0xff]
    %v4655 = vld [vmem:[#allocation10 + $0x158] sm:$0xff]
    %v4656 = vld [vmem:[#allocation10 + $0x160] sm:$0xff]
    %v4657 = vld [vmem:[#allocation10 + $0x168] sm:$0xff]
    %v4658 = vld [vmem:[#allocation10 + $0x170] sm:$0xff]
    %v4659 = vld [vmem:[#allocation10 + $0x178] sm:$0xff]
    %v4660 = vld [vmem:[#allocation10 + $0x180] sm:$0xff]
    %v4661 = vld [vmem:[#allocation10 + $0x188] sm:$0xff]
    %v4662 = vld [vmem:[#allocation10 + $0x190] sm:$0xff]
    %v4663 = vld [vmem:[#allocation10 + $0x198] sm:$0xff]
    %v4664 = vld [vmem:[#allocation10 + $0x1a0] sm:$0xff]
    %v4665 = vld [vmem:[#allocation10 + $0x1a8] sm:$0xff]
    %v4666 = vld [vmem:[#allocation10 + $0x1b0] sm:$0xff]
    %v4667 = vld [vmem:[#allocation10 + $0x1b8] sm:$0xff]
    %v4668 = vld [vmem:[#allocation10 + $0x1c0] sm:$0xff]
    %v4669 = vld [vmem:[#allocation10 + $0x1c8] sm:$0xff]
    %v4670 = vld [vmem:[#allocation10 + $0x1d0] sm:$0xff]
    %v4671 = vld [vmem:[#allocation10 + $0x1d8] sm:$0xff]
    %v4672 = vld [vmem:[#allocation10 + $0x1e0] sm:$0xff]
    %v4673 = vld [vmem:[#allocation10 + $0x1e8] sm:$0xff]
    %v4674 = vld [vmem:[#allocation10 + $0x1f0] sm:$0xff]
    %v4675 = vld [vmem:[#allocation10 + $0x1f8] sm:$0xff]
    %v4676 = vld [vmem:[#allocation10 + $0x200] sm:$0xff]
    %v4677 = vld [vmem:[#allocation10 + $0x208] sm:$0xff]
    %v4678 = vld [vmem:[#allocation10 + $0x210] sm:$0xff]
    %v4679 = vld [vmem:[#allocation10 + $0x218] sm:$0xff]
    %v4680 = vld [vmem:[#allocation10 + $0x220] sm:$0xff]
    %v4681 = vld [vmem:[#allocation10 + $0x228] sm:$0xff]
    %v4682 = vld [vmem:[#allocation10 + $0x230] sm:$0xff]
    %v4683 = vld [vmem:[#allocation10 + $0x238] sm:$0xff]
    %v4684 = vld [vmem:[#allocation10 + $0x240] sm:$0xff]
    %v4685 = vld [vmem:[#allocation10 + $0x248] sm:$0xff]
    %v4686 = vld [vmem:[#allocation10 + $0x250] sm:$0xff]
    %v4687 = vld [vmem:[#allocation10 + $0x258] sm:$0xff]
    %v4688 = vld [vmem:[#allocation10 + $0x260] sm:$0xff]
    %v4689 = vld [vmem:[#allocation10 + $0x268] sm:$0xff]
    %v4690 = vld [vmem:[#allocation10 + $0x270] sm:$0xff]
    %v4691 = vld [vmem:[#allocation10 + $0x278] sm:$0xff]
    %v4692 = vld [vmem:[#allocation10 + $0x280] sm:$0xff]
    %v4693 = vld [vmem:[#allocation10 + $0x288] sm:$0xff]
    %v4694 = vld [vmem:[#allocation10 + $0x290] sm:$0xff]
    %v4695 = vld [vmem:[#allocation10 + $0x298] sm:$0xff]
    %v4696 = vld [vmem:[#allocation10 + $0x2a0] sm:$0xff]
    %v4697 = vld [vmem:[#allocation10 + $0x2a8] sm:$0xff]
    %v4698 = vld [vmem:[#allocation10 + $0x2b0] sm:$0xff]
    %v4699 = vld [vmem:[#allocation10 + $0x2b8] sm:$0xff]
    %v4700 = vld [vmem:[#allocation10 + $0x2c0] sm:$0xff]
    %v4701 = vld [vmem:[#allocation10 + $0x2c8] sm:$0xff]
    %v4702 = vld [vmem:[#allocation10 + $0x2d0] sm:$0xff]
    %v4703 = vld [vmem:[#allocation10 + $0x2d8] sm:$0xff]
    %v4704 = vld [vmem:[#allocation10 + $0x2e0] sm:$0xff]
    %v4705 = vld [vmem:[#allocation10 + $0x2e8] sm:$0xff]
    %v4706 = vld [vmem:[#allocation10 + $0x2f0] sm:$0xff]
    %v4707 = vld [vmem:[#allocation10 + $0x2f8] sm:$0xff]
    %v4708 = vld [vmem:[#allocation10 + $0x300] sm:$0xff]
    %v4709 = vld [vmem:[#allocation10 + $0x308] sm:$0xff]
    %v4710 = vld [vmem:[#allocation10 + $0x310] sm:$0xff]
    %v4711 = vld [vmem:[#allocation10 + $0x318] sm:$0xff]
    %v4712 = vld [vmem:[#allocation10 + $0x320] sm:$0xff]
    %v4713 = vld [vmem:[#allocation10 + $0x328] sm:$0xff]
    %v4714 = vld [vmem:[#allocation10 + $0x330] sm:$0xff]
    %v4715 = vld [vmem:[#allocation10 + $0x338] sm:$0xff]
    %v4716 = vld [vmem:[#allocation10 + $0x340] sm:$0xff]
    %v4717 = vld [vmem:[#allocation10 + $0x348] sm:$0xff]
    %v4718 = vld [vmem:[#allocation10 + $0x350] sm:$0xff]
    %v4719 = vld [vmem:[#allocation10 + $0x358] sm:$0xff]
    %v4720 = vld [vmem:[#allocation10 + $0x360] sm:$0xff]
    %v4721 = vld [vmem:[#allocation10 + $0x368] sm:$0xff]
    %v4722 = vld [vmem:[#allocation10 + $0x370] sm:$0xff]
    %v4723 = vld [vmem:[#allocation10 + $0x378] sm:$0xff]
    %v4724 = vld [vmem:[#allocation10 + $0x380] sm:$0xff]
    %v4725 = vld [vmem:[#allocation10 + $0x388] sm:$0xff]
    %v4726 = vld [vmem:[#allocation10 + $0x390] sm:$0xff]
    %v4727 = vld [vmem:[#allocation10 + $0x398] sm:$0xff]
    %v4728 = vld [vmem:[#allocation10 + $0x3a0] sm:$0xff]
    %v4729 = vld [vmem:[#allocation10 + $0x3a8] sm:$0xff]
    %v4730 = vld [vmem:[#allocation10 + $0x3b0] sm:$0xff]
    %v4731 = vld [vmem:[#allocation10 + $0x3b8] sm:$0xff]
    %v4732 = vld [vmem:[#allocation10 + $0x3c0] sm:$0xff]
    %v4733 = vld [vmem:[#allocation10 + $0x3c8] sm:$0xff]
    %v4734 = vld [vmem:[#allocation10 + $0x3d0] sm:$0xff]
    %v4735 = vld [vmem:[#allocation10 + $0x3d8] sm:$0xff]
    %v4736 = vld [vmem:[#allocation10 + $0x3e0] sm:$0xff]
    %v4737 = vld [vmem:[#allocation10 + $0x3e8] sm:$0xff]
    %v4738 = vld [vmem:[#allocation10 + $0x3f0] sm:$0xff]
    %v4739 = vld [vmem:[#allocation10 + $0x3f8] sm:$0xff]
    %v4740 = vld [vmem:[%s7] sm:$0xf]
    %v4742 = vlaneseq
    %v4743 = vshrl.u32 %v4742, 7
    %v4744 = vsub.s32 0, %v4743
    %v4745 = vrot.slane %v4740, %v4744
    %v4746 = vlaneseq
    %v4747 = vshrl.u32 %v4746, 7
    %v4748 = vsub.s32 1, %v4747
    %v4749 = vrot.slane %v4740, %v4748
    %v4750 = vlaneseq
    %v4751 = vshrl.u32 %v4750, 7
    %v4752 = vsub.s32 2, %v4751
    %v4753 = vrot.slane %v4740, %v4752
    %v4754 = vlaneseq
    %v4755 = vshrl.u32 %v4754, 7
    %v4756 = vsub.s32 3, %v4755
    %v4757 = vrot.slane %v4740, %v4756
    %v4794 = vunpack.c.l.b16 %v4580
    %v4795 = vunpack.c.l.b16 %v4581
    %v4796 = vunpack.c.l.b16 %v4582
    %v4797 = vunpack.c.l.b16 %v4583
    %v4798 = vunpack.c.l.b16 %v4584
    %v4799 = vunpack.c.l.b16 %v4585
    %v4800 = vunpack.c.l.b16 %v4586
    %v4801 = vunpack.c.l.b16 %v4587
    %v4802 = vunpack.c.l.b16 %v4588
    %v4803 = vunpack.c.l.b16 %v4589
    %v4804 = vunpack.c.l.b16 %v4590
    %v4805 = vunpack.c.l.b16 %v4591
    %v4806 = vunpack.c.l.b16 %v4592
    %v4807 = vunpack.c.l.b16 %v4593
    %v4808 = vunpack.c.l.b16 %v4594
    %v4809 = vunpack.c.l.b16 %v4595
    %v4810 = vunpack.c.l.b16 %v4596
    %v4811 = vunpack.c.l.b16 %v4597
    %v4812 = vunpack.c.l.b16 %v4598
    %v4813 = vunpack.c.l.b16 %v4599
    %v4814 = vunpack.c.l.b16 %v4600
    %v4815 = vunpack.c.l.b16 %v4601
    %v4816 = vunpack.c.l.b16 %v4602
    %v4817 = vunpack.c.l.b16 %v4603
    %v4818 = vunpack.c.l.b16 %v4604
    %v4819 = vunpack.c.l.b16 %v4605
    %v4820 = vunpack.c.l.b16 %v4606
    %v4821 = vunpack.c.l.b16 %v4607
    %v4822 = vunpack.c.l.b16 %v4608
    %v4823 = vunpack.c.l.b16 %v4609
    %v4824 = vunpack.c.l.b16 %v4610
    %v4825 = vunpack.c.l.b16 %v4611
    %v4826 = vrot.slane %v4798, 7
    %v4827 = vsel %vm3668, %v4826, %v4794
    %v4828 = vrot.slane %v4802, 6
    %v4829 = vsel %vm3670, %v4828, %v4827
    %v4830 = vrot.slane %v4806, 5
    %v4831 = vsel %vm3672, %v4830, %v4829
    %v4832 = vrot.slane %v4810, 4
    %v4833 = vsel %vm3674, %v4832, %v4831
    %v4834 = vrot.slane %v4814, 3
    %v4835 = vsel %vm3676, %v4834, %v4833
    %v4836 = vrot.slane %v4818, 2
    %v4837 = vsel %vm3678, %v4836, %v4835
    %v4838 = vrot.slane %v4822, 1
    %v4839 = vsel %vm3680, %v4838, %v4837
    %v4840 = vrot.slane %v4799, 7
    %v4841 = vsel %vm3668, %v4840, %v4795
    %v4842 = vrot.slane %v4803, 6
    %v4843 = vsel %vm3670, %v4842, %v4841
    %v4844 = vrot.slane %v4807, 5
    %v4845 = vsel %vm3672, %v4844, %v4843
    %v4846 = vrot.slane %v4811, 4
    %v4847 = vsel %vm3674, %v4846, %v4845
    %v4848 = vrot.slane %v4815, 3
    %v4849 = vsel %vm3676, %v4848, %v4847
    %v4850 = vrot.slane %v4819, 2
    %v4851 = vsel %vm3678, %v4850, %v4849
    %v4852 = vrot.slane %v4823, 1
    %v4853 = vsel %vm3680, %v4852, %v4851
    %v4854 = vrot.slane %v4800, 7
    %v4855 = vsel %vm3668, %v4854, %v4796
    %v4856 = vrot.slane %v4804, 6
    %v4857 = vsel %vm3670, %v4856, %v4855
    %v4858 = vrot.slane %v4808, 5
    %v4859 = vsel %vm3672, %v4858, %v4857
    %v4860 = vrot.slane %v4812, 4
    %v4861 = vsel %vm3674, %v4860, %v4859
    %v4862 = vrot.slane %v4816, 3
    %v4863 = vsel %vm3676, %v4862, %v4861
    %v4864 = vrot.slane %v4820, 2
    %v4865 = vsel %vm3678, %v4864, %v4863
    %v4866 = vrot.slane %v4824, 1
    %v4867 = vsel %vm3680, %v4866, %v4865
    %v4868 = vrot.slane %v4801, 7
    %v4869 = vsel %vm3668, %v4868, %v4797
    %v4870 = vrot.slane %v4805, 6
    %v4871 = vsel %vm3670, %v4870, %v4869
    %v4872 = vrot.slane %v4809, 5
    %v4873 = vsel %vm3672, %v4872, %v4871
    %v4874 = vrot.slane %v4813, 4
    %v4875 = vsel %vm3674, %v4874, %v4873
    %v4876 = vrot.slane %v4817, 3
    %v4877 = vsel %vm3676, %v4876, %v4875
    %v4878 = vrot.slane %v4821, 2
    %v4879 = vsel %vm3678, %v4878, %v4877
    %v4880 = vrot.slane %v4825, 1
    %v4881 = vsel %vm3680, %v4880, %v4879
    %v4882 = vpack.c.b16 %v4839, %v4839
    %v4883 = vpack.c.b16 %v4853, %v4853
    %v4884 = vpack.c.b16 %v4867, %v4867
    %v4885 = vpack.c.b16 %v4881, %v4881
    %v5018 = vunpack.c.l.b16 %v4612
    %v5019 = vunpack.c.h.b16 %v4612
    %v5020 = vunpack.c.l.b16 %v4613
    %v5021 = vunpack.c.h.b16 %v4613
    %v5022 = vunpack.c.l.b16 %v4614
    %v5023 = vunpack.c.h.b16 %v4614
    %v5024 = vunpack.c.l.b16 %v4615
    %v5025 = vunpack.c.h.b16 %v4615
    %v5026 = vunpack.c.l.b16 %v4616
    %v5027 = vunpack.c.h.b16 %v4616
    %v5028 = vunpack.c.l.b16 %v4617
    %v5029 = vunpack.c.h.b16 %v4617
    %v5030 = vunpack.c.l.b16 %v4618
    %v5031 = vunpack.c.h.b16 %v4618
    %v5032 = vunpack.c.l.b16 %v4619
    %v5033 = vunpack.c.h.b16 %v4619
    %v5034 = vunpack.c.l.b16 %v4620
    %v5035 = vunpack.c.h.b16 %v4620
    %v5036 = vunpack.c.l.b16 %v4621
    %v5037 = vunpack.c.h.b16 %v4621
    %v5038 = vunpack.c.l.b16 %v4622
    %v5039 = vunpack.c.h.b16 %v4622
    %v5040 = vunpack.c.l.b16 %v4623
    %v5041 = vunpack.c.h.b16 %v4623
    %v5042 = vunpack.c.l.b16 %v4624
    %v5043 = vunpack.c.h.b16 %v4624
    %v5044 = vunpack.c.l.b16 %v4625
    %v5045 = vunpack.c.h.b16 %v4625
    %v5046 = vunpack.c.l.b16 %v4626
    %v5047 = vunpack.c.h.b16 %v4626
    %v5048 = vunpack.c.l.b16 %v4627
    %v5049 = vunpack.c.h.b16 %v4627
    %v5050 = vunpack.c.l.b16 %v4628
    %v5051 = vunpack.c.h.b16 %v4628
    %v5052 = vunpack.c.l.b16 %v4629
    %v5053 = vunpack.c.h.b16 %v4629
    %v5054 = vunpack.c.l.b16 %v4630
    %v5055 = vunpack.c.h.b16 %v4630
    %v5056 = vunpack.c.l.b16 %v4631
    %v5057 = vunpack.c.h.b16 %v4631
    %v5058 = vunpack.c.l.b16 %v4632
    %v5059 = vunpack.c.h.b16 %v4632
    %v5060 = vunpack.c.l.b16 %v4633
    %v5061 = vunpack.c.h.b16 %v4633
    %v5062 = vunpack.c.l.b16 %v4634
    %v5063 = vunpack.c.h.b16 %v4634
    %v5064 = vunpack.c.l.b16 %v4635
    %v5065 = vunpack.c.h.b16 %v4635
    %v5066 = vunpack.c.l.b16 %v4636
    %v5067 = vunpack.c.h.b16 %v4636
    %v5068 = vunpack.c.l.b16 %v4637
    %v5069 = vunpack.c.h.b16 %v4637
    %v5070 = vunpack.c.l.b16 %v4638
    %v5071 = vunpack.c.h.b16 %v4638
    %v5072 = vunpack.c.l.b16 %v4639
    %v5073 = vunpack.c.h.b16 %v4639
    %v5074 = vunpack.c.l.b16 %v4640
    %v5075 = vunpack.c.h.b16 %v4640
    %v5076 = vunpack.c.l.b16 %v4641
    %v5077 = vunpack.c.h.b16 %v4641
    %v5078 = vunpack.c.l.b16 %v4642
    %v5079 = vunpack.c.h.b16 %v4642
    %v5080 = vunpack.c.l.b16 %v4643
    %v5081 = vunpack.c.h.b16 %v4643
    %v5082 = vunpack.c.l.b16 %v4644
    %v5083 = vunpack.c.h.b16 %v4644
    %v5084 = vunpack.c.l.b16 %v4645
    %v5085 = vunpack.c.h.b16 %v4645
    %v5086 = vunpack.c.l.b16 %v4646
    %v5087 = vunpack.c.h.b16 %v4646
    %v5088 = vunpack.c.l.b16 %v4647
    %v5089 = vunpack.c.h.b16 %v4647
    %v5090 = vunpack.c.l.b16 %v4648
    %v5091 = vunpack.c.h.b16 %v4648
    %v5092 = vunpack.c.l.b16 %v4649
    %v5093 = vunpack.c.h.b16 %v4649
    %v5094 = vunpack.c.l.b16 %v4650
    %v5095 = vunpack.c.h.b16 %v4650
    %v5096 = vunpack.c.l.b16 %v4651
    %v5097 = vunpack.c.h.b16 %v4651
    %v5098 = vunpack.c.l.b16 %v4652
    %v5099 = vunpack.c.h.b16 %v4652
    %v5100 = vunpack.c.l.b16 %v4653
    %v5101 = vunpack.c.h.b16 %v4653
    %v5102 = vunpack.c.l.b16 %v4654
    %v5103 = vunpack.c.h.b16 %v4654
    %v5104 = vunpack.c.l.b16 %v4655
    %v5105 = vunpack.c.h.b16 %v4655
    %v5106 = vunpack.c.l.b16 %v4656
    %v5107 = vunpack.c.h.b16 %v4656
    %v5108 = vunpack.c.l.b16 %v4657
    %v5109 = vunpack.c.h.b16 %v4657
    %v5110 = vunpack.c.l.b16 %v4658
    %v5111 = vunpack.c.h.b16 %v4658
    %v5112 = vunpack.c.l.b16 %v4659
    %v5113 = vunpack.c.h.b16 %v4659
    %v5114 = vunpack.c.l.b16 %v4660
    %v5115 = vunpack.c.h.b16 %v4660
    %v5116 = vunpack.c.l.b16 %v4661
    %v5117 = vunpack.c.h.b16 %v4661
    %v5118 = vunpack.c.l.b16 %v4662
    %v5119 = vunpack.c.h.b16 %v4662
    %v5120 = vunpack.c.l.b16 %v4663
    %v5121 = vunpack.c.h.b16 %v4663
    %v5122 = vunpack.c.l.b16 %v4664
    %v5123 = vunpack.c.h.b16 %v4664
    %v5124 = vunpack.c.l.b16 %v4665
    %v5125 = vunpack.c.h.b16 %v4665
    %v5126 = vunpack.c.l.b16 %v4666
    %v5127 = vunpack.c.h.b16 %v4666
    %v5128 = vunpack.c.l.b16 %v4667
    %v5129 = vunpack.c.h.b16 %v4667
    %v5130 = vunpack.c.l.b16 %v4668
    %v5131 = vunpack.c.h.b16 %v4668
    %v5132 = vunpack.c.l.b16 %v4669
    %v5133 = vunpack.c.h.b16 %v4669
    %v5134 = vunpack.c.l.b16 %v4670
    %v5135 = vunpack.c.h.b16 %v4670
    %v5136 = vunpack.c.l.b16 %v4671
    %v5137 = vunpack.c.h.b16 %v4671
    %v5138 = vunpack.c.l.b16 %v4672
    %v5139 = vunpack.c.h.b16 %v4672
    %v5140 = vunpack.c.l.b16 %v4673
    %v5141 = vunpack.c.h.b16 %v4673
    %v5142 = vunpack.c.l.b16 %v4674
    %v5143 = vunpack.c.h.b16 %v4674
    %v5144 = vunpack.c.l.b16 %v4675
    %v5145 = vunpack.c.h.b16 %v4675
    %v5146 = vunpack.c.l.b16 %v4676
    %v5147 = vunpack.c.h.b16 %v4676
    %v5148 = vunpack.c.l.b16 %v4677
    %v5149 = vunpack.c.h.b16 %v4677
    %v5150 = vunpack.c.l.b16 %v4678
    %v5151 = vunpack.c.h.b16 %v4678
    %v5152 = vunpack.c.l.b16 %v4679
    %v5153 = vunpack.c.h.b16 %v4679
    %v5154 = vunpack.c.l.b16 %v4680
    %v5155 = vunpack.c.h.b16 %v4680
    %v5156 = vunpack.c.l.b16 %v4681
    %v5157 = vunpack.c.h.b16 %v4681
    %v5158 = vunpack.c.l.b16 %v4682
    %v5159 = vunpack.c.h.b16 %v4682
    %v5160 = vunpack.c.l.b16 %v4683
    %v5161 = vunpack.c.h.b16 %v4683
    %v5162 = vunpack.c.l.b16 %v4684
    %v5163 = vunpack.c.h.b16 %v4684
    %v5164 = vunpack.c.l.b16 %v4685
    %v5165 = vunpack.c.h.b16 %v4685
    %v5166 = vunpack.c.l.b16 %v4686
    %v5167 = vunpack.c.h.b16 %v4686
    %v5168 = vunpack.c.l.b16 %v4687
    %v5169 = vunpack.c.h.b16 %v4687
    %v5170 = vunpack.c.l.b16 %v4688
    %v5171 = vunpack.c.h.b16 %v4688
    %v5172 = vunpack.c.l.b16 %v4689
    %v5173 = vunpack.c.h.b16 %v4689
    %v5174 = vunpack.c.l.b16 %v4690
    %v5175 = vunpack.c.h.b16 %v4690
    %v5176 = vunpack.c.l.b16 %v4691
    %v5177 = vunpack.c.h.b16 %v4691
    %v5178 = vunpack.c.l.b16 %v4692
    %v5179 = vunpack.c.h.b16 %v4692
    %v5180 = vunpack.c.l.b16 %v4693
    %v5181 = vunpack.c.h.b16 %v4693
    %v5182 = vunpack.c.l.b16 %v4694
    %v5183 = vunpack.c.h.b16 %v4694
    %v5184 = vunpack.c.l.b16 %v4695
    %v5185 = vunpack.c.h.b16 %v4695
    %v5186 = vunpack.c.l.b16 %v4696
    %v5187 = vunpack.c.h.b16 %v4696
    %v5188 = vunpack.c.l.b16 %v4697
    %v5189 = vunpack.c.h.b16 %v4697
    %v5190 = vunpack.c.l.b16 %v4698
    %v5191 = vunpack.c.h.b16 %v4698
    %v5192 = vunpack.c.l.b16 %v4699
    %v5193 = vunpack.c.h.b16 %v4699
    %v5194 = vunpack.c.l.b16 %v4700
    %v5195 = vunpack.c.h.b16 %v4700
    %v5196 = vunpack.c.l.b16 %v4701
    %v5197 = vunpack.c.h.b16 %v4701
    %v5198 = vunpack.c.l.b16 %v4702
    %v5199 = vunpack.c.h.b16 %v4702
    %v5200 = vunpack.c.l.b16 %v4703
    %v5201 = vunpack.c.h.b16 %v4703
    %v5202 = vunpack.c.l.b16 %v4704
    %v5203 = vunpack.c.h.b16 %v4704
    %v5204 = vunpack.c.l.b16 %v4705
    %v5205 = vunpack.c.h.b16 %v4705
    %v5206 = vunpack.c.l.b16 %v4706
    %v5207 = vunpack.c.h.b16 %v4706
    %v5208 = vunpack.c.l.b16 %v4707
    %v5209 = vunpack.c.h.b16 %v4707
    %v5210 = vunpack.c.l.b16 %v4708
    %v5211 = vunpack.c.h.b16 %v4708
    %v5212 = vunpack.c.l.b16 %v4709
    %v5213 = vunpack.c.h.b16 %v4709
    %v5214 = vunpack.c.l.b16 %v4710
    %v5215 = vunpack.c.h.b16 %v4710
    %v5216 = vunpack.c.l.b16 %v4711
    %v5217 = vunpack.c.h.b16 %v4711
    %v5218 = vunpack.c.l.b16 %v4712
    %v5219 = vunpack.c.h.b16 %v4712
    %v5220 = vunpack.c.l.b16 %v4713
    %v5221 = vunpack.c.h.b16 %v4713
    %v5222 = vunpack.c.l.b16 %v4714
    %v5223 = vunpack.c.h.b16 %v4714
    %v5224 = vunpack.c.l.b16 %v4715
    %v5225 = vunpack.c.h.b16 %v4715
    %v5226 = vunpack.c.l.b16 %v4716
    %v5227 = vunpack.c.h.b16 %v4716
    %v5228 = vunpack.c.l.b16 %v4717
    %v5229 = vunpack.c.h.b16 %v4717
    %v5230 = vunpack.c.l.b16 %v4718
    %v5231 = vunpack.c.h.b16 %v4718
    %v5232 = vunpack.c.l.b16 %v4719
    %v5233 = vunpack.c.h.b16 %v4719
    %v5234 = vunpack.c.l.b16 %v4720
    %v5235 = vunpack.c.h.b16 %v4720
    %v5236 = vunpack.c.l.b16 %v4721
    %v5237 = vunpack.c.h.b16 %v4721
    %v5238 = vunpack.c.l.b16 %v4722
    %v5239 = vunpack.c.h.b16 %v4722
    %v5240 = vunpack.c.l.b16 %v4723
    %v5241 = vunpack.c.h.b16 %v4723
    %v5242 = vunpack.c.l.b16 %v4724
    %v5243 = vunpack.c.h.b16 %v4724
    %v5244 = vunpack.c.l.b16 %v4725
    %v5245 = vunpack.c.h.b16 %v4725
    %v5246 = vunpack.c.l.b16 %v4726
    %v5247 = vunpack.c.h.b16 %v4726
    %v5248 = vunpack.c.l.b16 %v4727
    %v5249 = vunpack.c.h.b16 %v4727
    %v5250 = vunpack.c.l.b16 %v4728
    %v5251 = vunpack.c.h.b16 %v4728
    %v5252 = vunpack.c.l.b16 %v4729
    %v5253 = vunpack.c.h.b16 %v4729
    %v5254 = vunpack.c.l.b16 %v4730
    %v5255 = vunpack.c.h.b16 %v4730
    %v5256 = vunpack.c.l.b16 %v4731
    %v5257 = vunpack.c.h.b16 %v4731
    %v5258 = vunpack.c.l.b16 %v4732
    %v5259 = vunpack.c.h.b16 %v4732
    %v5260 = vunpack.c.l.b16 %v4733
    %v5261 = vunpack.c.h.b16 %v4733
    %v5262 = vunpack.c.l.b16 %v4734
    %v5263 = vunpack.c.h.b16 %v4734
    %v5264 = vunpack.c.l.b16 %v4735
    %v5265 = vunpack.c.h.b16 %v4735
    %v5266 = vunpack.c.l.b16 %v4736
    %v5267 = vunpack.c.h.b16 %v4736
    %v5268 = vunpack.c.l.b16 %v4737
    %v5269 = vunpack.c.h.b16 %v4737
    %v5270 = vunpack.c.l.b16 %v4738
    %v5271 = vunpack.c.h.b16 %v4738
    %v5272 = vunpack.c.l.b16 %v4739
    %v5273 = vunpack.c.h.b16 %v4739
    %v5274 = vpack.c.b16 %v5022, %v5018
    %v5275 = vpack.c.b16 %v5023, %v5019
    %v5276 = vpack.c.b16 %v5024, %v5020
    %v5277 = vpack.c.b16 %v5025, %v5021
    %v5278 = vpack.c.b16 %v5030, %v5026
    %v5279 = vpack.c.b16 %v5031, %v5027
    %v5280 = vpack.c.b16 %v5032, %v5028
    %v5281 = vpack.c.b16 %v5033, %v5029
    %v5282 = vpack.c.b16 %v5038, %v5034
    %v5283 = vpack.c.b16 %v5039, %v5035
    %v5284 = vpack.c.b16 %v5040, %v5036
    %v5285 = vpack.c.b16 %v5041, %v5037
    %v5286 = vpack.c.b16 %v5046, %v5042
    %v5287 = vpack.c.b16 %v5047, %v5043
    %v5288 = vpack.c.b16 %v5048, %v5044
    %v5289 = vpack.c.b16 %v5049, %v5045
    %v5290 = vpack.c.b16 %v5054, %v5050
    %v5291 = vpack.c.b16 %v5055, %v5051
    %v5292 = vpack.c.b16 %v5056, %v5052
    %v5293 = vpack.c.b16 %v5057, %v5053
    %v5294 = vpack.c.b16 %v5062, %v5058
    %v5295 = vpack.c.b16 %v5063, %v5059
    %v5296 = vpack.c.b16 %v5064, %v5060
    %v5297 = vpack.c.b16 %v5065, %v5061
    %v5298 = vpack.c.b16 %v5070, %v5066
    %v5299 = vpack.c.b16 %v5071, %v5067
    %v5300 = vpack.c.b16 %v5072, %v5068
    %v5301 = vpack.c.b16 %v5073, %v5069
    %v5302 = vpack.c.b16 %v5078, %v5074
    %v5303 = vpack.c.b16 %v5079, %v5075
    %v5304 = vpack.c.b16 %v5080, %v5076
    %v5305 = vpack.c.b16 %v5081, %v5077
    %v5306 = vpack.c.b16 %v5086, %v5082
    %v5307 = vpack.c.b16 %v5087, %v5083
    %v5308 = vpack.c.b16 %v5088, %v5084
    %v5309 = vpack.c.b16 %v5089, %v5085
    %v5310 = vpack.c.b16 %v5094, %v5090
    %v5311 = vpack.c.b16 %v5095, %v5091
    %v5312 = vpack.c.b16 %v5096, %v5092
    %v5313 = vpack.c.b16 %v5097, %v5093
    %v5314 = vpack.c.b16 %v5102, %v5098
    %v5315 = vpack.c.b16 %v5103, %v5099
    %v5316 = vpack.c.b16 %v5104, %v5100
    %v5317 = vpack.c.b16 %v5105, %v5101
    %v5318 = vpack.c.b16 %v5110, %v5106
    %v5319 = vpack.c.b16 %v5111, %v5107
    %v5320 = vpack.c.b16 %v5112, %v5108
    %v5321 = vpack.c.b16 %v5113, %v5109
    %v5322 = vpack.c.b16 %v5118, %v5114
    %v5323 = vpack.c.b16 %v5119, %v5115
    %v5324 = vpack.c.b16 %v5120, %v5116
    %v5325 = vpack.c.b16 %v5121, %v5117
    %v5326 = vpack.c.b16 %v5126, %v5122
    %v5327 = vpack.c.b16 %v5127, %v5123
    %v5328 = vpack.c.b16 %v5128, %v5124
    %v5329 = vpack.c.b16 %v5129, %v5125
    %v5330 = vpack.c.b16 %v5134, %v5130
    %v5331 = vpack.c.b16 %v5135, %v5131
    %v5332 = vpack.c.b16 %v5136, %v5132
    %v5333 = vpack.c.b16 %v5137, %v5133
    %v5334 = vpack.c.b16 %v5142, %v5138
    %v5335 = vpack.c.b16 %v5143, %v5139
    %v5336 = vpack.c.b16 %v5144, %v5140
    %v5337 = vpack.c.b16 %v5145, %v5141
    %v5338 = vpack.c.b16 %v5150, %v5146
    %v5339 = vpack.c.b16 %v5151, %v5147
    %v5340 = vpack.c.b16 %v5152, %v5148
    %v5341 = vpack.c.b16 %v5153, %v5149
    %v5342 = vpack.c.b16 %v5158, %v5154
    %v5343 = vpack.c.b16 %v5159, %v5155
    %v5344 = vpack.c.b16 %v5160, %v5156
    %v5345 = vpack.c.b16 %v5161, %v5157
    %v5346 = vpack.c.b16 %v5166, %v5162
    %v5347 = vpack.c.b16 %v5167, %v5163
    %v5348 = vpack.c.b16 %v5168, %v5164
    %v5349 = vpack.c.b16 %v5169, %v5165
    %v5350 = vpack.c.b16 %v5174, %v5170
    %v5351 = vpack.c.b16 %v5175, %v5171
    %v5352 = vpack.c.b16 %v5176, %v5172
    %v5353 = vpack.c.b16 %v5177, %v5173
    %v5354 = vpack.c.b16 %v5182, %v5178
    %v5355 = vpack.c.b16 %v5183, %v5179
    %v5356 = vpack.c.b16 %v5184, %v5180
    %v5357 = vpack.c.b16 %v5185, %v5181
    %v5358 = vpack.c.b16 %v5190, %v5186
    %v5359 = vpack.c.b16 %v5191, %v5187
    %v5360 = vpack.c.b16 %v5192, %v5188
    %v5361 = vpack.c.b16 %v5193, %v5189
    %v5362 = vpack.c.b16 %v5198, %v5194
    %v5363 = vpack.c.b16 %v5199, %v5195
    %v5364 = vpack.c.b16 %v5200, %v5196
    %v5365 = vpack.c.b16 %v5201, %v5197
    %v5366 = vpack.c.b16 %v5206, %v5202
    %v5367 = vpack.c.b16 %v5207, %v5203
    %v5368 = vpack.c.b16 %v5208, %v5204
    %v5369 = vpack.c.b16 %v5209, %v5205
    %v5370 = vpack.c.b16 %v5214, %v5210
    %v5371 = vpack.c.b16 %v5215, %v5211
    %v5372 = vpack.c.b16 %v5216, %v5212
    %v5373 = vpack.c.b16 %v5217, %v5213
    %v5374 = vpack.c.b16 %v5222, %v5218
    %v5375 = vpack.c.b16 %v5223, %v5219
    %v5376 = vpack.c.b16 %v5224, %v5220
    %v5377 = vpack.c.b16 %v5225, %v5221
    %v5378 = vpack.c.b16 %v5230, %v5226
    %v5379 = vpack.c.b16 %v5231, %v5227
    %v5380 = vpack.c.b16 %v5232, %v5228
    %v5381 = vpack.c.b16 %v5233, %v5229
    %v5382 = vpack.c.b16 %v5238, %v5234
    %v5383 = vpack.c.b16 %v5239, %v5235
    %v5384 = vpack.c.b16 %v5240, %v5236
    %v5385 = vpack.c.b16 %v5241, %v5237
    %v5386 = vpack.c.b16 %v5246, %v5242
    %v5387 = vpack.c.b16 %v5247, %v5243
    %v5388 = vpack.c.b16 %v5248, %v5244
    %v5389 = vpack.c.b16 %v5249, %v5245
    %v5390 = vpack.c.b16 %v5254, %v5250
    %v5391 = vpack.c.b16 %v5255, %v5251
    %v5392 = vpack.c.b16 %v5256, %v5252
    %v5393 = vpack.c.b16 %v5257, %v5253
    %v5394 = vpack.c.b16 %v5262, %v5258
    %v5395 = vpack.c.b16 %v5263, %v5259
    %v5396 = vpack.c.b16 %v5264, %v5260
    %v5397 = vpack.c.b16 %v5265, %v5261
    %v5398 = vpack.c.b16 %v5270, %v5266
    %v5399 = vpack.c.b16 %v5271, %v5267
    %v5400 = vpack.c.b16 %v5272, %v5268
    %v5401 = vpack.c.b16 %v5273, %v5269
    %5530 = vmatprep.subr.bf16.mxu0 %v5275
    %5531 = vmatpush1.bf16.msra.mxu0 %v5274
    %5532 = vmatprep.subr.bf16.mxu0 %v5279
    %5533 = vmatpush1.bf16.msra.mxu0 %v5278
    %5534 = vmatprep.subr.bf16.mxu0 %v5283
    %5535 = vmatpush1.bf16.msra.mxu0 %v5282
    %5536 = vmatprep.subr.bf16.mxu0 %v5287
    %5537 = vmatpush1.bf16.msra.mxu0 %v5286
    %5538 = vmatprep.subr.bf16.mxu0 %v5291
    %5539 = vmatpush1.bf16.msra.mxu0 %v5290
    %5540 = vmatprep.subr.bf16.mxu0 %v5295
    %5541 = vmatpush1.bf16.msra.mxu0 %v5294
    %5542 = vmatprep.subr.bf16.mxu0 %v5299
    %5543 = vmatpush1.bf16.msra.mxu0 %v5298
    %5544 = vmatprep.subr.bf16.mxu0 %v5303
    %5545 = vmatpush1.bf16.msra.mxu0 %v5302
    %5546 = vmatprep.subr.bf16.mxu0 %v5307
    %5547 = vmatpush1.bf16.msra.mxu0 %v5306
    %5548 = vmatprep.subr.bf16.mxu0 %v5311
    %5549 = vmatpush1.bf16.msra.mxu0 %v5310
    %5550 = vmatprep.subr.bf16.mxu0 %v5315
    %5551 = vmatpush1.bf16.msra.mxu0 %v5314
    %5552 = vmatprep.subr.bf16.mxu0 %v5319
    %5553 = vmatpush1.bf16.msra.mxu0 %v5318
    %5554 = vmatprep.subr.bf16.mxu0 %v5323
    %5555 = vmatpush1.bf16.msra.mxu0 %v5322
    %5556 = vmatprep.subr.bf16.mxu0 %v5327
    %5557 = vmatpush1.bf16.msra.mxu0 %v5326
    %5558 = vmatprep.subr.bf16.mxu0 %v5331
    %5559 = vmatpush1.bf16.msra.mxu0 %v5330
    %5560 = vmatprep.subr.bf16.mxu0 %v5335
    %5561 = vmatpush1.bf16.msra.mxu0 %v5334
    %5562 = vmatprep.mubr.bf16.mxu0 %v4883
    %5563 = vmatmul.mubr.bf16.gmra.mrb[0].mxu0 %v4882
    %v5564 = vpop.f32.mrb[0].mxu0
    %v5565 = vadd.f32 %v4745, %v5564
    %v5566 = vpop.f32.mrb[0].mxu0
    %v5567 = vadd.f32 %v4749, %v5566
    %v5568 = vpop.f32.mrb[0].mxu0
    %v5569 = vpop.f32.mrb[0].mxu0
    %5570 = vdwg.mxu0
    %5571 = vmatprep.subr.bf16.mxu0 %v5339
    %5572 = vmatpush1.bf16.msra.mxu0 %v5338
    %5573 = vmatprep.subr.bf16.mxu0 %v5343
    %5574 = vmatpush1.bf16.msra.mxu0 %v5342
    %5575 = vmatprep.subr.bf16.mxu0 %v5347
    %5576 = vmatpush1.bf16.msra.mxu0 %v5346
    %5577 = vmatprep.subr.bf16.mxu0 %v5351
    %5578 = vmatpush1.bf16.msra.mxu0 %v5350
    %5579 = vmatprep.subr.bf16.mxu0 %v5355
    %5580 = vmatpush1.bf16.msra.mxu0 %v5354
    %5581 = vmatprep.subr.bf16.mxu0 %v5359
    %5582 = vmatpush1.bf16.msra.mxu0 %v5358
    %5583 = vmatprep.subr.bf16.mxu0 %v5363
    %5584 = vmatpush1.bf16.msra.mxu0 %v5362
    %5585 = vmatprep.subr.bf16.mxu0 %v5367
    %5586 = vmatpush1.bf16.msra.mxu0 %v5366
    %5587 = vmatprep.subr.bf16.mxu0 %v5371
    %5588 = vmatpush1.bf16.msra.mxu0 %v5370
    %5589 = vmatprep.subr.bf16.mxu0 %v5375
    %5590 = vmatpush1.bf16.msra.mxu0 %v5374
    %5591 = vmatprep.subr.bf16.mxu0 %v5379
    %5592 = vmatpush1.bf16.msra.mxu0 %v5378
    %5593 = vmatprep.subr.bf16.mxu0 %v5383
    %5594 = vmatpush1.bf16.msra.mxu0 %v5382
    %5595 = vmatprep.subr.bf16.mxu0 %v5387
    %5596 = vmatpush1.bf16.msra.mxu0 %v5386
    %5597 = vmatprep.subr.bf16.mxu0 %v5391
    %5598 = vmatpush1.bf16.msra.mxu0 %v5390
    %5599 = vmatprep.subr.bf16.mxu0 %v5395
    %5600 = vmatpush1.bf16.msra.mxu0 %v5394
    %5601 = vmatprep.subr.bf16.mxu0 %v5399
    %5602 = vmatpush1.bf16.msra.mxu0 %v5398
    %5603 = vmatprep.mubr.bf16.mxu0 %v4885
    %5604 = vmatmul.mubr.bf16.gmra.mrb[0].mxu0 %v4884
    %v5605 = vpop.f32.mrb[0].mxu0
    %v5606 = vadd.f32 %v5565, %v5605
    %v5607 = vpop.f32.mrb[0].mxu0
    %v5608 = vadd.f32 %v5567, %v5607
    %v5609 = vpop.f32.mrb[0].mxu0
    %v5610 = vpop.f32.mrb[0].mxu0
    %5611 = vdwg.mxu0
    %5612 = vmatprep.subr.bf16.mxu0 %v5277
    %5613 = vmatpush1.bf16.msra.mxu0 %v5276
    %5614 = vmatprep.subr.bf16.mxu0 %v5281
    %5615 = vmatpush1.bf16.msra.mxu0 %v5280
    %5616 = vmatprep.subr.bf16.mxu0 %v5285
    %5617 = vmatpush1.bf16.msra.mxu0 %v5284
    %5618 = vmatprep.subr.bf16.mxu0 %v5289
    %5619 = vmatpush1.bf16.msra.mxu0 %v5288
    %5620 = vmatprep.subr.bf16.mxu0 %v5293
    %5621 = vmatpush1.bf16.msra.mxu0 %v5292
    %5622 = vmatprep.subr.bf16.mxu0 %v5297
    %5623 = vmatpush1.bf16.msra.mxu0 %v5296
    %5624 = vmatprep.subr.bf16.mxu0 %v5301
    %5625 = vmatpush1.bf16.msra.mxu0 %v5300
    %5626 = vmatprep.subr.bf16.mxu0 %v5305
    %5627 = vmatpush1.bf16.msra.mxu0 %v5304
    %5628 = vmatprep.subr.bf16.mxu0 %v5309
    %5629 = vmatpush1.bf16.msra.mxu0 %v5308
    %5630 = vmatprep.subr.bf16.mxu0 %v5313
    %5631 = vmatpush1.bf16.msra.mxu0 %v5312
    %5632 = vmatprep.subr.bf16.mxu0 %v5317
    %5633 = vmatpush1.bf16.msra.mxu0 %v5316
    %5634 = vmatprep.subr.bf16.mxu0 %v5321
    %5635 = vmatpush1.bf16.msra.mxu0 %v5320
    %5636 = vmatprep.subr.bf16.mxu0 %v5325
    %5637 = vmatpush1.bf16.msra.mxu0 %v5324
    %5638 = vmatprep.subr.bf16.mxu0 %v5329
    %5639 = vmatpush1.bf16.msra.mxu0 %v5328
    %5640 = vmatprep.subr.bf16.mxu0 %v5333
    %5641 = vmatpush1.bf16.msra.mxu0 %v5332
    %5642 = vmatprep.subr.bf16.mxu0 %v5337
    %5643 = vmatpush1.bf16.msra.mxu0 %v5336
    %5644 = vmatprep.mubr.bf16.mxu0 %v4883
    %5645 = vmatmul.mubr.bf16.gmra.mrb[0].mxu0 %v4882
    %v5646 = vpop.f32.mrb[0].mxu0
    %v5647 = vadd.f32 %v4753, %v5646
    %v5648 = vpop.f32.mrb[0].mxu0
    %v5649 = vadd.f32 %v4757, %v5648
    %v5650 = vpop.f32.mrb[0].mxu0
    %v5651 = vpop.f32.mrb[0].mxu0
    %5652 = vdwg.mxu0
    %5653 = vmatprep.subr.bf16.mxu0 %v5341
    %5654 = vmatpush1.bf16.msra.mxu0 %v5340
    %5655 = vmatprep.subr.bf16.mxu0 %v5345
    %5656 = vmatpush1.bf16.msra.mxu0 %v5344
    %5657 = vmatprep.subr.bf16.mxu0 %v5349
    %5658 = vmatpush1.bf16.msra.mxu0 %v5348
    %5659 = vmatprep.subr.bf16.mxu0 %v5353
    %5660 = vmatpush1.bf16.msra.mxu0 %v5352
    %5661 = vmatprep.subr.bf16.mxu0 %v5357
    %5662 = vmatpush1.bf16.msra.mxu0 %v5356
    %5663 = vmatprep.subr.bf16.mxu0 %v5361
    %5664 = vmatpush1.bf16.msra.mxu0 %v5360
    %5665 = vmatprep.subr.bf16.mxu0 %v5365
    %5666 = vmatpush1.bf16.msra.mxu0 %v5364
    %5667 = vmatprep.subr.bf16.mxu0 %v5369
    %5668 = vmatpush1.bf16.msra.mxu0 %v5368
    %5669 = vmatprep.subr.bf16.mxu0 %v5373
    %5670 = vmatpush1.bf16.msra.mxu0 %v5372
    %5671 = vmatprep.subr.bf16.mxu0 %v5377
    %5672 = vmatpush1.bf16.msra.mxu0 %v5376
    %5673 = vmatprep.subr.bf16.mxu0 %v5381
    %5674 = vmatpush1.bf16.msra.mxu0 %v5380
    %5675 = vmatprep.subr.bf16.mxu0 %v5385
    %5676 = vmatpush1.bf16.msra.mxu0 %v5384
    %5677 = vmatprep.subr.bf16.mxu0 %v5389
    %5678 = vmatpush1.bf16.msra.mxu0 %v5388
    %5679 = vmatprep.subr.bf16.mxu0 %v5393
    %5680 = vmatpush1.bf16.msra.mxu0 %v5392
    %5681 = vmatprep.subr.bf16.mxu0 %v5397
    %5682 = vmatpush1.bf16.msra.mxu0 %v5396
    %5683 = vmatprep.subr.bf16.mxu0 %v5401
    %5684 = vmatpush1.bf16.msra.mxu0 %v5400
    %5685 = vmatprep.mubr.bf16.mxu0 %v4885
    %5686 = vmatmul.mubr.bf16.gmra.mrb[0].mxu0 %v4884
    %v5687 = vpop.f32.mrb[0].mxu0
    %v5688 = vadd.f32 %v5647, %v5687
    %v5689 = vpop.f32.mrb[0].mxu0
    %v5690 = vadd.f32 %v5649, %v5689
    %v5691 = vpop.f32.mrb[0].mxu0
    %v5692 = vpop.f32.mrb[0].mxu0
    %5693 = vdwg.mxu0
    %v5694 = vadd.f32 %v102, %v5606
    %v5695 = vadd.f32 %v103, %v5608
    %v5696 = vadd.f32 %v104, %v5688
    %v5697 = vadd.f32 %v105, %v5690
    %5698 = vst [vmem:[#allocation11] sm:$0xff] %v5694
    %5699 = vst [vmem:[#allocation11 + $0x8] sm:$0xff] %v5695
    %5700 = vst [vmem:[#allocation11 + $0x10] sm:$0xff] %v5696
    %5701 = vst [vmem:[#allocation11 + $0x18] sm:$0xff] %v5697
    // Predicated region
    $region62: #{tpu_custom_call.1} parent=1 // pred_check
      _
    $region63: #{tpu_custom_call.1} parent=1 // pred_check_branch
      %5703 = sbr.rel (0) target = $region65
    $region64: #{tpu_custom_call.1} parent=1 // pred_region
      %s5705 = ssub.s32 512, 512
      %5706 = vsyncadd [#allocation4], %s5705
      %s5708 = sshll.u32 [#allocation11], 4
      %s5709 = int_to_ptr.vmem [resolvable:$true] %s5708
      %5711 = dma.vmem_to_hbm [thread:$0]  %s5709, 512, %s10, [#allocation4]
    $region65: #{tpu_custom_call.1} parent=1 // pred_fallthru
      _
    // Predicated region
    $region66: #{tpu_custom_call.1} parent=1 // pred_check
      _
    $region67: #{tpu_custom_call.1} parent=1 // pred_check_branch
      %5713 = sbr.rel (0) target = $region69
    $region68: #{tpu_custom_call.1} parent=1 // pred_region
      %5714 = dma.done [#allocation4], 512
    $region69: #{tpu_custom_call.1} parent=1 // pred_fallthru
      _
    %5715 = vsyncpa [#allocation3], 1
    %5716 = vsyncpa [#allocation6], 1
    %5717 = vsyncpa [#allocation9], 1
    %5718 = vsyncpa [#allocation4], 1

</llo_original>
